<compile_context>
chip_gen: v6e
topology: v6e:2x2x1
jax: 0.10.0
libtpu: 0.0.40
codegen_flags: <defaults>
</compile_context>

<pallas_src>
import functools

import numpy as np
import jax
import jax.numpy as jnp
from jax.experimental import pallas as pl
from jax.experimental.pallas import tpu as pltpu

NUM_NODES = 50                    # implied by fc1 = Linear(4 * 3 * 50, 16)
HID = 4
NUM_BRANCHES = 3
NFEAT = HID * NUM_BRANCHES        # 12 concatenated branch features
NP = 64                           # node dim padded 50 -> 64 (clean sublane tiling)
OUT_PAD = 128                     # lane-dense padded logits width (real width = 2)
GMAX_BLOCK = 64                   # graphs per grid step (32-256 per review)
BN_EPS = 1e-5


def _round_up(v, m):
    return ((v + m - 1) // m) * m


def _const_spec(a):
    # default-arg capture (review: avoid late-binding lambdas in comprehensions)
    return pl.BlockSpec(a.shape, lambda i, nd=a.ndim: (0,) * nd)


# ----------------------------------------------------------------------------
# Fused kernel: GCN branches + fc1 per graph block, BN/fc2/BN/fc3 finalize.
# Layouts inside the kernel:
#   a_ref   : (GT, NP, NP)   per-graph normalized adjacency (zero padded)
#   x_ref   : (GT, 1,  NP)   node features transposed (nodes on lanes)
#   h1/h2   : (GT, 12, NP)   branch features on sublanes, nodes on lanes
#   fc1_acc : (Gp, 16)       VMEM scratch, persists across grid steps
# ----------------------------------------------------------------------------
def _make_kernel(g_real):
    def kernel(a_ref, x_ref,
               w1_ref, b1_ref, w2t_ref, b2_ref,
               wfc1_ref, bfc1_ref,
               g1_ref, be1_ref,
               wfc2_ref, bfc2_ref,
               g2_ref, be2_ref,
               wfc3_ref, bfc3_ref,
               o_ref, fc1_acc):
        i = pl.program_id(0)
        gt = a_ref.shape[0]

        a = a_ref[...]                                      # (GT, NP, NP)
        xt = x_ref[...]                                     # (GT, 1,  NP)

        # ---- conv1, all 3 branches fused (w1 is the concatenated (12,1) column)
        # (x @ W1_cat)^T : broadcast multiply since in_features == 1
        xw1 = w1_ref[...] * xt                              # (GT, 12, NP)
        # propagate: h1^T[g,f,n] = sum_m (xW1)^T[g,f,m] * A[g,n,m]
        h1 = jnp.einsum('gfm,gnm->gfn', xw1, a,
                        preferred_element_type=jnp.float32) + b1_ref[...]

        # ---- conv2, block-diagonal 12x12 weight (w2t_ref = W2_blockdiag^T)
        w2t = jnp.broadcast_to(w2t_ref[...], (gt, NFEAT, NFEAT))
        zt = jnp.einsum('gef,gfm->gem', w2t, h1,
                        preferred_element_type=jnp.float32)           # (GT,12,NP)
        h2 = jnp.einsum('gem,gnm->gen', zt, a,
                        preferred_element_type=jnp.float32) + b2_ref[...]

        # ---- fc1 fused in: flatten over (node, feature) == sum over the 12
        # feature slots of (GT, NP) @ (NP, 16) matmuls (wfc1_ref is (12, NP, 16),
        # zero at padded nodes).
        acc = jnp.zeros((gt, 16), jnp.float32)
        for f in range(NFEAT):
            acc = acc + jnp.dot(h2[:, f, :], wfc1_ref[f],
                                preferred_element_type=jnp.float32)
        acc = acc + bfc1_ref[...]

        g0 = pl.multiple_of(i * gt, gt)
        fc1_acc[pl.ds(g0, gt), :] = acc

        # ---- finalize once, on the last graph block: relu/BN1/fc2/relu/BN2/fc3
        @pl.when(i == pl.num_programs(0) - 1)
        def _():
            gp = fc1_acc.shape[0]
            rows = jax.lax.broadcasted_iota(jnp.int32, (gp, 1), 0)
            mask = (rows < g_real).astype(jnp.float32)      # exclude padded graphs
            inv_n = 1.0 / float(g_real)

            def bnorm(v, gamma, beta):
                mu = jnp.sum(v * mask, axis=0, keepdims=True) * inv_n
                var = jnp.sum(((v - mu) ** 2) * mask, axis=0,
                              keepdims=True) * inv_n        # biased (PyTorch train)
                return gamma * (v - mu) * jax.lax.rsqrt(var + BN_EPS) + beta

            h = jnp.maximum(fc1_acc[...], 0.0)
            h = bnorm(h, g1_ref[...], be1_ref[...])
            h = jnp.dot(h, wfc2_ref[...],
                        preferred_element_type=jnp.float32) + bfc2_ref[...]
            h = jnp.maximum(h, 0.0)
            h = bnorm(h, g2_ref[...], be2_ref[...])
            o_ref[...] = jnp.dot(h, wfc3_ref[...],
                                 preferred_element_type=jnp.float32) + bfc3_ref[...]

    return kernel


# ----------------------------------------------------------------------------
# Wrapper: pad / transpose inputs, build BlockSpecs, call the fused kernel.
# ----------------------------------------------------------------------------
def full_gcn_forward(x, a_norm, fp):
    G, N, _ = x.shape
    GT = min(GMAX_BLOCK, _round_up(G, 8))
    Gp = _round_up(G, GT)

    # zero-pad graphs to Gp and nodes to NP; transpose node features
    a_p = jnp.zeros((Gp, NP, NP), jnp.float32).at[:G, :N, :N].set(a_norm)
    x_t = jnp.zeros((Gp, 1, NP), jnp.float32).at[:G, 0, :N].set(x[:, :, 0])

    in_specs = [
        pl.BlockSpec((GT, NP, NP), lambda i: (i, 0, 0)),
        pl.BlockSpec((GT, 1, NP), lambda i: (i, 0, 0)),
        _const_spec(fp["w1_col"]), _const_spec(fp["b1_col"]),
        _const_spec(fp["w2t"]), _const_spec(fp["b2_col"]),
        _const_spec(fp["wfc1t"]), _const_spec(fp["bfc1"]),
        _const_spec(fp["bn1_g"]), _const_spec(fp["bn1_b"]),
        _const_spec(fp["wfc2"]), _const_spec(fp["bfc2"]),
        _const_spec(fp["bn2_g"]), _const_spec(fp["bn2_b"]),
        _const_spec(fp["wfc3p"]), _const_spec(fp["bfc3p"]),
    ]

    out = pl.pallas_call(
        _make_kernel(G),
        out_shape=jax.ShapeDtypeStruct((Gp, OUT_PAD), jnp.float32),
        grid=(Gp // GT,),
        in_specs=in_specs,
        out_specs=pl.BlockSpec((Gp, OUT_PAD), lambda i: (0, 0)),
        scratch_shapes=[pltpu.VMEM((Gp, 16), jnp.float32)],
        # graph axis carries the fc1 accumulator + last-step finalize -> arbitrary
        compiler_params=pltpu.CompilerParams(
            dimension_semantics=("arbitrary",)),
    )(a_p, x_t,
      fp["w1_col"], fp["b1_col"], fp["w2t"], fp["b2_col"],
      fp["wfc1t"], fp["bfc1"],
      fp["bn1_g"], fp["bn1_b"],
      fp["wfc2"], fp["bfc2"],
      fp["bn2_g"], fp["bn2_b"],
      fp["wfc3p"], fp["bfc3p"])

    logits = out[:G, :2]
    reg = jnp.zeros((0,), jnp.float32)                 # torch.tensor([])
    return logits, reg


# ----------------------------------------------------------------------------
# One-time host-side parameter packing (branch fusion + TPU-layout padding).
# ----------------------------------------------------------------------------
def build_fused_params(p):
    w1 = np.concatenate([np.asarray(p["gcn_w1"][t]) for t in range(NUM_BRANCHES)],
                        axis=1)                                   # (1, 12)
    b1 = np.concatenate([np.asarray(p["gcn_b1"][t]) for t in range(NUM_BRANCHES)],
                        axis=1)                                   # (1, 12)
    b2 = np.concatenate([np.asarray(p["gcn_b2"][t]) for t in range(NUM_BRANCHES)],
                        axis=1)                                   # (1, 12)
    w2_bd = np.zeros((NFEAT, NFEAT), np.float32)                  # block-diag conv2
    for t in range(NUM_BRANCHES):
        w2_bd[HID * t:HID * (t + 1), HID * t:HID * (t + 1)] = np.asarray(p["gcn_w2"][t])

    # fc1 weight (600,16) -> [node, feat, out] -> [feat, node(pad 64), out]
    wfc1 = np.asarray(p["wfc1"]).reshape(NUM_NODES, NFEAT, 16).transpose(1, 0, 2)
    wfc1t = np.zeros((NFEAT, NP, 16), np.float32)
    wfc1t[:, :NUM_NODES, :] = wfc1

    # fc3 padded to a lane-dense 128-wide slab
    wfc3p = np.zeros((32, OUT_PAD), np.float32)
    wfc3p[:, :2] = np.asarray(p["wfc3"])
    bfc3p = np.zeros((1, OUT_PAD), np.float32)
    bfc3p[:, :2] = np.asarray(p["bfc3"])

    return {
        "w1_col": jnp.asarray(w1.reshape(NFEAT, 1)),
        "b1_col": jnp.asarray(b1.reshape(NFEAT, 1)),
        "w2t": jnp.asarray(w2_bd.T),
        "b2_col": jnp.asarray(b2.reshape(NFEAT, 1)),
        "wfc1t": jnp.asarray(wfc1t),
        "bfc1": p["bfc1"],
        "bn1_g": p["bn1_g"], "bn1_b": p["bn1_b"],
        "wfc2": p["wfc2"], "bfc2": p["bfc2"],
        "bn2_g": p["bn2_g"], "bn2_b": p["bn2_b"],
        "wfc3p": jnp.asarray(wfc3p), "bfc3p": jnp.asarray(bfc3p),
    }


def init_params():
    key = jax.random.PRNGKey(42)
    ks = jax.random.split(key, 12)

    def w(k, shape, fan_in):
        return (jax.random.normal(k, shape, jnp.float32)
                / np.sqrt(float(fan_in)))

    return {
        "gcn_w1": w(ks[0], (NUM_BRANCHES, 1, HID), 1),
        "gcn_b1": jnp.zeros((NUM_BRANCHES, 1, HID), jnp.float32),
        "gcn_w2": w(ks[2], (NUM_BRANCHES, HID, HID), HID),
        "gcn_b2": jnp.zeros((NUM_BRANCHES, 1, HID), jnp.float32),
        "wfc1": w(ks[4], (NFEAT * NUM_NODES, 16), NFEAT * NUM_NODES),
        "bfc1": jnp.zeros((1, 16), jnp.float32),
        "bn1_g": jnp.ones((1, 16), jnp.float32),
        "bn1_b": jnp.zeros((1, 16), jnp.float32),
        "wfc2": w(ks[5], (16, 32), 16),
        "bfc2": jnp.zeros((1, 32), jnp.float32),
        "bn2_g": jnp.ones((1, 32), jnp.float32),
        "bn2_b": jnp.zeros((1, 32), jnp.float32),
        "wfc3": w(ks[6], (32, 2), 32),
        "bfc3": jnp.zeros((1, 2), jnp.float32),
    }


def make_ring_adjacency(num_graphs):
    # deterministic ring graph + self loops, symmetric D^-1/2 (A+I) D^-1/2
    A = np.zeros((NUM_NODES, NUM_NODES), np.float32)
    for i in range(NUM_NODES):
        A[i, (i + 1) % NUM_NODES] = 1.0
        A[(i + 1) % NUM_NODES, i] = 1.0
        A[i, i] = 1.0
    dinv = 1.0 / np.sqrt(A.sum(1))
    A_norm = (dinv[:, None] * A * dinv[None, :]).astype(np.float32)
    return jnp.broadcast_to(jnp.asarray(A_norm),
                            (num_graphs, NUM_NODES, NUM_NODES))


if __name__ == "__main__":
    G = 2  # num_graphs in the batch
    key = jax.random.PRNGKey(0)
    x = jax.random.normal(key, (G, NUM_NODES, 1), dtype=jnp.float32)
    a_norm = make_ring_adjacency(G)
    params = init_params()
    fused = build_fused_params(params)

    fwd = jax.jit(full_gcn_forward)
    logits, reg = fwd(x, a_norm, fused)
    jax.block_until_ready(logits)
    assert logits.shape == (G, 2)
    assert reg.shape == (0,)
    print("KERNEL_OK")
</pallas_src>

<mosaic_0001>
module attributes {stable_mosaic.version = 11 : i64} {
  func.func @kernel(%arg0: i32, %arg1: memref<8x64x64xf32, #tpu.memory_space<vmem>>, %arg2: memref<8x1x64xf32, #tpu.memory_space<vmem>>, %arg3: memref<12x1xf32, #tpu.memory_space<vmem>>, %arg4: memref<12x1xf32, #tpu.memory_space<vmem>>, %arg5: memref<12x12xf32, #tpu.memory_space<vmem>>, %arg6: memref<12x1xf32, #tpu.memory_space<vmem>>, %arg7: memref<12x64x16xf32, #tpu.memory_space<vmem>>, %arg8: memref<1x16xf32, #tpu.memory_space<vmem>>, %arg9: memref<1x16xf32, #tpu.memory_space<vmem>>, %arg10: memref<1x16xf32, #tpu.memory_space<vmem>>, %arg11: memref<16x32xf32, #tpu.memory_space<vmem>>, %arg12: memref<1x32xf32, #tpu.memory_space<vmem>>, %arg13: memref<1x32xf32, #tpu.memory_space<vmem>>, %arg14: memref<1x32xf32, #tpu.memory_space<vmem>>, %arg15: memref<32x128xf32, #tpu.memory_space<vmem>>, %arg16: memref<1x128xf32, #tpu.memory_space<vmem>>, %arg17: memref<8x128xf32, #tpu.memory_space<vmem>>, %arg18: memref<8x16xf32, #tpu.memory_space<vmem>>) attributes {dimension_semantics = [#tpu.dimension_semantics<arbitrary>], iteration_bounds = array<i64: 1>, scalar_prefetch = 0 : i64, scratch_operands = 1 : i64, tpu.core_type = #tpu.core_type<tc>, window_params = [{transform_indices = @transform_0, window_bounds = array<i64: 8, 64, 64>}, {transform_indices = @transform_1, window_bounds = array<i64: 8, 1, 64>}, {pipeline_mode = #tpu.pipeline_mode<synchronous>, transform_indices = @transform_2, window_bounds = array<i64: 12, 1>}, {pipeline_mode = #tpu.pipeline_mode<synchronous>, transform_indices = @transform_3, window_bounds = array<i64: 12, 1>}, {pipeline_mode = #tpu.pipeline_mode<synchronous>, transform_indices = @transform_4, window_bounds = array<i64: 12, 12>}, {pipeline_mode = #tpu.pipeline_mode<synchronous>, transform_indices = @transform_5, window_bounds = array<i64: 12, 1>}, {pipeline_mode = #tpu.pipeline_mode<synchronous>, transform_indices = @transform_6, window_bounds = array<i64: 12, 64, 16>}, {pipeline_mode = #tpu.pipeline_mode<synchronous>, transform_indices = @transform_7, window_bounds = array<i64: 1, 16>}, {pipeline_mode = #tpu.pipeline_mode<synchronous>, transform_indices = @transform_8, window_bounds = array<i64: 1, 16>}, {pipeline_mode = #tpu.pipeline_mode<synchronous>, transform_indices = @transform_9, window_bounds = array<i64: 1, 16>}, {pipeline_mode = #tpu.pipeline_mode<synchronous>, transform_indices = @transform_10, window_bounds = array<i64: 16, 32>}, {pipeline_mode = #tpu.pipeline_mode<synchronous>, transform_indices = @transform_11, window_bounds = array<i64: 1, 32>}, {pipeline_mode = #tpu.pipeline_mode<synchronous>, transform_indices = @transform_12, window_bounds = array<i64: 1, 32>}, {pipeline_mode = #tpu.pipeline_mode<synchronous>, transform_indices = @transform_13, window_bounds = array<i64: 1, 32>}, {pipeline_mode = #tpu.pipeline_mode<synchronous>, transform_indices = @transform_14, window_bounds = array<i64: 32, 128>}, {pipeline_mode = #tpu.pipeline_mode<synchronous>, transform_indices = @transform_15, window_bounds = array<i64: 1, 128>}, {pipeline_mode = #tpu.pipeline_mode<synchronous>, transform_indices = @transform_16, window_bounds = array<i64: 8, 128>}]} {
    %c0 = arith.constant 0 : index
    %c0_0 = arith.constant 0 : index
    %c0_1 = arith.constant 0 : index
    %0 = vector.load %arg1[%c0, %c0_0, %c0_1] : memref<8x64x64xf32, #tpu.memory_space<vmem>>, vector<8x64x64xf32>
    %c0_2 = arith.constant 0 : index
    %c0_3 = arith.constant 0 : index
    %c0_4 = arith.constant 0 : index
    %1 = vector.load %arg2[%c0_2, %c0_3, %c0_4] : memref<8x1x64xf32, #tpu.memory_space<vmem>>, vector<8x1x64xf32>
    %c0_5 = arith.constant 0 : index
    %c0_6 = arith.constant 0 : index
    %2 = vector.load %arg3[%c0_5, %c0_6] : memref<12x1xf32, #tpu.memory_space<vmem>>, vector<12x1xf32>
    %3 = vector.shape_cast %2 : vector<12x1xf32> to vector<1x12x1xf32>
    %4 = vector.broadcast %3 : vector<1x12x1xf32> to vector<8x12x64xf32>
    %5 = vector.broadcast %1 : vector<8x1x64xf32> to vector<8x12x64xf32>
    %6 = arith.mulf %4, %5 : vector<8x12x64xf32>
    "tpu.trace_start"() <{level = 10 : i32, message = "gfm,gnm->gfn"}> : () -> ()
    %cst = arith.constant dense<0.000000e+00> : vector<8x12x64xf32>
    %7 = tpu.matmul %6, %0, %cst {dimension_numbers = #tpu.dot_dimension_numbers<[2], [2], [1], [1], [0, 0, 0, 1, 1, 1], [0], [0]>} : vector<8x12x64xf32>, vector<8x64x64xf32>, vector<8x12x64xf32> -> vector<8x12x64xf32>
    "tpu.trace_stop"() : () -> ()
    %c0_7 = arith.constant 0 : index
    %c0_8 = arith.constant 0 : index
    %8 = vector.load %arg4[%c0_7, %c0_8] : memref<12x1xf32, #tpu.memory_space<vmem>>, vector<12x1xf32>
    %9 = vector.shape_cast %8 : vector<12x1xf32> to vector<1x12x1xf32>
    %10 = vector.broadcast %9 : vector<1x12x1xf32> to vector<8x12x64xf32>
    %11 = arith.addf %7, %10 : vector<8x12x64xf32>
    %c0_9 = arith.constant 0 : index
    %c0_10 = arith.constant 0 : index
    %12 = vector.load %arg5[%c0_9, %c0_10] : memref<12x12xf32, #tpu.memory_space<vmem>>, vector<12x12xf32>
    %13 = vector.shape_cast %12 : vector<12x12xf32> to vector<1x12x12xf32>
    %14 = vector.broadcast %13 : vector<1x12x12xf32> to vector<8x12x12xf32>
    "tpu.trace_start"() <{level = 10 : i32, message = "gef,gfm->gem"}> : () -> ()
    %cst_11 = arith.constant dense<0.000000e+00> : vector<8x12x64xf32>
    %15 = tpu.matmul %14, %11, %cst_11 {dimension_numbers = #tpu.dot_dimension_numbers<[2], [1], [1], [2], [0, 0, 0, 1, 1, 2], [0], [0]>} : vector<8x12x12xf32>, vector<8x12x64xf32>, vector<8x12x64xf32> -> vector<8x12x64xf32>
    "tpu.trace_stop"() : () -> ()
    "tpu.trace_start"() <{level = 10 : i32, message = "gem,gnm->gen"}> : () -> ()
    %cst_12 = arith.constant dense<0.000000e+00> : vector<8x12x64xf32>
    %16 = tpu.matmul %15, %0, %cst_12 {dimension_numbers = #tpu.dot_dimension_numbers<[2], [2], [1], [1], [0, 0, 0, 1, 1, 1], [0], [0]>} : vector<8x12x64xf32>, vector<8x64x64xf32>, vector<8x12x64xf32> -> vector<8x12x64xf32>
    "tpu.trace_stop"() : () -> ()
    %c0_13 = arith.constant 0 : index
    %c0_14 = arith.constant 0 : index
    %17 = vector.load %arg6[%c0_13, %c0_14] : memref<12x1xf32, #tpu.memory_space<vmem>>, vector<12x1xf32>
    %18 = vector.shape_cast %17 : vector<12x1xf32> to vector<1x12x1xf32>
    %19 = vector.broadcast %18 : vector<1x12x1xf32> to vector<8x12x64xf32>
    %20 = arith.addf %16, %19 : vector<8x12x64xf32>
    %cst_15 = arith.constant 0.000000e+00 : f32
    %21 = vector.broadcast %cst_15 : f32 to vector<8x16xf32>
    %22 = vector.extract_strided_slice %20 {offsets = [0, 0, 0], sizes = [8, 1, 64], strides = [1, 1, 1]} : vector<8x12x64xf32> to vector<8x1x64xf32>
    %23 = vector.shape_cast %22 : vector<8x1x64xf32> to vector<8x64xf32>
    %c0_16 = arith.constant 0 : index
    %c0_17 = arith.constant 0 : index
    %c0_18 = arith.constant 0 : index
    %24 = vector.load %arg7[%c0_16, %c0_17, %c0_18] : memref<12x64x16xf32, #tpu.memory_space<vmem>>, vector<1x64x16xf32>
    %25 = vector.shape_cast %24 : vector<1x64x16xf32> to vector<64x16xf32>
    %cst_19 = arith.constant dense<0.000000e+00> : vector<8x16xf32>
    %26 = tpu.matmul %23, %25, %cst_19 {dimension_numbers = #tpu.dot_dimension_numbers<[1], [0], [0], [1], [0, 0, 1, 1], [], []>} : vector<8x64xf32>, vector<64x16xf32>, vector<8x16xf32> -> vector<8x16xf32>
    %27 = arith.addf %21, %26 : vector<8x16xf32>
    %28 = vector.extract_strided_slice %20 {offsets = [0, 1, 0], sizes = [8, 1, 64], strides = [1, 1, 1]} : vector<8x12x64xf32> to vector<8x1x64xf32>
    %29 = vector.shape_cast %28 : vector<8x1x64xf32> to vector<8x64xf32>
    %c1 = arith.constant 1 : index
    %c0_20 = arith.constant 0 : index
    %c0_21 = arith.constant 0 : index
    %30 = vector.load %arg7[%c1, %c0_20, %c0_21] : memref<12x64x16xf32, #tpu.memory_space<vmem>>, vector<1x64x16xf32>
    %31 = vector.shape_cast %30 : vector<1x64x16xf32> to vector<64x16xf32>
    %cst_22 = arith.constant dense<0.000000e+00> : vector<8x16xf32>
    %32 = tpu.matmul %29, %31, %cst_22 {dimension_numbers = #tpu.dot_dimension_numbers<[1], [0], [0], [1], [0, 0, 1, 1], [], []>} : vector<8x64xf32>, vector<64x16xf32>, vector<8x16xf32> -> vector<8x16xf32>
    %33 = arith.addf %27, %32 : vector<8x16xf32>
    %34 = vector.extract_strided_slice %20 {offsets = [0, 2, 0], sizes = [8, 1, 64], strides = [1, 1, 1]} : vector<8x12x64xf32> to vector<8x1x64xf32>
    %35 = vector.shape_cast %34 : vector<8x1x64xf32> to vector<8x64xf32>
    %c2 = arith.constant 2 : index
    %c0_23 = arith.constant 0 : index
    %c0_24 = arith.constant 0 : index
    %36 = vector.load %arg7[%c2, %c0_23, %c0_24] : memref<12x64x16xf32, #tpu.memory_space<vmem>>, vector<1x64x16xf32>
    %37 = vector.shape_cast %36 : vector<1x64x16xf32> to vector<64x16xf32>
    %cst_25 = arith.constant dense<0.000000e+00> : vector<8x16xf32>
    %38 = tpu.matmul %35, %37, %cst_25 {dimension_numbers = #tpu.dot_dimension_numbers<[1], [0], [0], [1], [0, 0, 1, 1], [], []>} : vector<8x64xf32>, vector<64x16xf32>, vector<8x16xf32> -> vector<8x16xf32>
    %39 = arith.addf %33, %38 : vector<8x16xf32>
    %40 = vector.extract_strided_slice %20 {offsets = [0, 3, 0], sizes = [8, 1, 64], strides = [1, 1, 1]} : vector<8x12x64xf32> to vector<8x1x64xf32>
    %41 = vector.shape_cast %40 : vector<8x1x64xf32> to vector<8x64xf32>
    %c3 = arith.constant 3 : index
    %c0_26 = arith.constant 0 : index
    %c0_27 = arith.constant 0 : index
    %42 = vector.load %arg7[%c3, %c0_26, %c0_27] : memref<12x64x16xf32, #tpu.memory_space<vmem>>, vector<1x64x16xf32>
    %43 = vector.shape_cast %42 : vector<1x64x16xf32> to vector<64x16xf32>
    %cst_28 = arith.constant dense<0.000000e+00> : vector<8x16xf32>
    %44 = tpu.matmul %41, %43, %cst_28 {dimension_numbers = #tpu.dot_dimension_numbers<[1], [0], [0], [1], [0, 0, 1, 1], [], []>} : vector<8x64xf32>, vector<64x16xf32>, vector<8x16xf32> -> vector<8x16xf32>
    %45 = arith.addf %39, %44 : vector<8x16xf32>
    %46 = vector.extract_strided_slice %20 {offsets = [0, 4, 0], sizes = [8, 1, 64], strides = [1, 1, 1]} : vector<8x12x64xf32> to vector<8x1x64xf32>
    %47 = vector.shape_cast %46 : vector<8x1x64xf32> to vector<8x64xf32>
    %c4 = arith.constant 4 : index
    %c0_29 = arith.constant 0 : index
    %c0_30 = arith.constant 0 : index
    %48 = vector.load %arg7[%c4, %c0_29, %c0_30] : memref<12x64x16xf32, #tpu.memory_space<vmem>>, vector<1x64x16xf32>
    %49 = vector.shape_cast %48 : vector<1x64x16xf32> to vector<64x16xf32>
    %cst_31 = arith.constant dense<0.000000e+00> : vector<8x16xf32>
    %50 = tpu.matmul %47, %49, %cst_31 {dimension_numbers = #tpu.dot_dimension_numbers<[1], [0], [0], [1], [0, 0, 1, 1], [], []>} : vector<8x64xf32>, vector<64x16xf32>, vector<8x16xf32> -> vector<8x16xf32>
    %51 = arith.addf %45, %50 : vector<8x16xf32>
    %52 = vector.extract_strided_slice %20 {offsets = [0, 5, 0], sizes = [8, 1, 64], strides = [1, 1, 1]} : vector<8x12x64xf32> to vector<8x1x64xf32>
    %53 = vector.shape_cast %52 : vector<8x1x64xf32> to vector<8x64xf32>
    %c5 = arith.constant 5 : index
    %c0_32 = arith.constant 0 : index
    %c0_33 = arith.constant 0 : index
    %54 = vector.load %arg7[%c5, %c0_32, %c0_33] : memref<12x64x16xf32, #tpu.memory_space<vmem>>, vector<1x64x16xf32>
    %55 = vector.shape_cast %54 : vector<1x64x16xf32> to vector<64x16xf32>
    %cst_34 = arith.constant dense<0.000000e+00> : vector<8x16xf32>
    %56 = tpu.matmul %53, %55, %cst_34 {dimension_numbers = #tpu.dot_dimension_numbers<[1], [0], [0], [1], [0, 0, 1, 1], [], []>} : vector<8x64xf32>, vector<64x16xf32>, vector<8x16xf32> -> vector<8x16xf32>
    %57 = arith.addf %51, %56 : vector<8x16xf32>
    %58 = vector.extract_strided_slice %20 {offsets = [0, 6, 0], sizes = [8, 1, 64], strides = [1, 1, 1]} : vector<8x12x64xf32> to vector<8x1x64xf32>
    %59 = vector.shape_cast %58 : vector<8x1x64xf32> to vector<8x64xf32>
    %c6 = arith.constant 6 : index
    %c0_35 = arith.constant 0 : index
    %c0_36 = arith.constant 0 : index
    %60 = vector.load %arg7[%c6, %c0_35, %c0_36] : memref<12x64x16xf32, #tpu.memory_space<vmem>>, vector<1x64x16xf32>
    %61 = vector.shape_cast %60 : vector<1x64x16xf32> to vector<64x16xf32>
    %cst_37 = arith.constant dense<0.000000e+00> : vector<8x16xf32>
    %62 = tpu.matmul %59, %61, %cst_37 {dimension_numbers = #tpu.dot_dimension_numbers<[1], [0], [0], [1], [0, 0, 1, 1], [], []>} : vector<8x64xf32>, vector<64x16xf32>, vector<8x16xf32> -> vector<8x16xf32>
    %63 = arith.addf %57, %62 : vector<8x16xf32>
    %64 = vector.extract_strided_slice %20 {offsets = [0, 7, 0], sizes = [8, 1, 64], strides = [1, 1, 1]} : vector<8x12x64xf32> to vector<8x1x64xf32>
    %65 = vector.shape_cast %64 : vector<8x1x64xf32> to vector<8x64xf32>
    %c7 = arith.constant 7 : index
    %c0_38 = arith.constant 0 : index
    %c0_39 = arith.constant 0 : index
    %66 = vector.load %arg7[%c7, %c0_38, %c0_39] : memref<12x64x16xf32, #tpu.memory_space<vmem>>, vector<1x64x16xf32>
    %67 = vector.shape_cast %66 : vector<1x64x16xf32> to vector<64x16xf32>
    %cst_40 = arith.constant dense<0.000000e+00> : vector<8x16xf32>
    %68 = tpu.matmul %65, %67, %cst_40 {dimension_numbers = #tpu.dot_dimension_numbers<[1], [0], [0], [1], [0, 0, 1, 1], [], []>} : vector<8x64xf32>, vector<64x16xf32>, vector<8x16xf32> -> vector<8x16xf32>
    %69 = arith.addf %63, %68 : vector<8x16xf32>
    %70 = vector.extract_strided_slice %20 {offsets = [0, 8, 0], sizes = [8, 1, 64], strides = [1, 1, 1]} : vector<8x12x64xf32> to vector<8x1x64xf32>
    %71 = vector.shape_cast %70 : vector<8x1x64xf32> to vector<8x64xf32>
    %c8 = arith.constant 8 : index
    %c0_41 = arith.constant 0 : index
    %c0_42 = arith.constant 0 : index
    %72 = vector.load %arg7[%c8, %c0_41, %c0_42] : memref<12x64x16xf32, #tpu.memory_space<vmem>>, vector<1x64x16xf32>
    %73 = vector.shape_cast %72 : vector<1x64x16xf32> to vector<64x16xf32>
    %cst_43 = arith.constant dense<0.000000e+00> : vector<8x16xf32>
    %74 = tpu.matmul %71, %73, %cst_43 {dimension_numbers = #tpu.dot_dimension_numbers<[1], [0], [0], [1], [0, 0, 1, 1], [], []>} : vector<8x64xf32>, vector<64x16xf32>, vector<8x16xf32> -> vector<8x16xf32>
    %75 = arith.addf %69, %74 : vector<8x16xf32>
    %76 = vector.extract_strided_slice %20 {offsets = [0, 9, 0], sizes = [8, 1, 64], strides = [1, 1, 1]} : vector<8x12x64xf32> to vector<8x1x64xf32>
    %77 = vector.shape_cast %76 : vector<8x1x64xf32> to vector<8x64xf32>
    %c9 = arith.constant 9 : index
    %c0_44 = arith.constant 0 : index
    %c0_45 = arith.constant 0 : index
    %78 = vector.load %arg7[%c9, %c0_44, %c0_45] : memref<12x64x16xf32, #tpu.memory_space<vmem>>, vector<1x64x16xf32>
    %79 = vector.shape_cast %78 : vector<1x64x16xf32> to vector<64x16xf32>
    %cst_46 = arith.constant dense<0.000000e+00> : vector<8x16xf32>
    %80 = tpu.matmul %77, %79, %cst_46 {dimension_numbers = #tpu.dot_dimension_numbers<[1], [0], [0], [1], [0, 0, 1, 1], [], []>} : vector<8x64xf32>, vector<64x16xf32>, vector<8x16xf32> -> vector<8x16xf32>
    %81 = arith.addf %75, %80 : vector<8x16xf32>
    %82 = vector.extract_strided_slice %20 {offsets = [0, 10, 0], sizes = [8, 1, 64], strides = [1, 1, 1]} : vector<8x12x64xf32> to vector<8x1x64xf32>
    %83 = vector.shape_cast %82 : vector<8x1x64xf32> to vector<8x64xf32>
    %c10 = arith.constant 10 : index
    %c0_47 = arith.constant 0 : index
    %c0_48 = arith.constant 0 : index
    %84 = vector.load %arg7[%c10, %c0_47, %c0_48] : memref<12x64x16xf32, #tpu.memory_space<vmem>>, vector<1x64x16xf32>
    %85 = vector.shape_cast %84 : vector<1x64x16xf32> to vector<64x16xf32>
    %cst_49 = arith.constant dense<0.000000e+00> : vector<8x16xf32>
    %86 = tpu.matmul %83, %85, %cst_49 {dimension_numbers = #tpu.dot_dimension_numbers<[1], [0], [0], [1], [0, 0, 1, 1], [], []>} : vector<8x64xf32>, vector<64x16xf32>, vector<8x16xf32> -> vector<8x16xf32>
    %87 = arith.addf %81, %86 : vector<8x16xf32>
    %88 = vector.extract_strided_slice %20 {offsets = [0, 11, 0], sizes = [8, 1, 64], strides = [1, 1, 1]} : vector<8x12x64xf32> to vector<8x1x64xf32>
    %89 = vector.shape_cast %88 : vector<8x1x64xf32> to vector<8x64xf32>
    %c11 = arith.constant 11 : index
    %c0_50 = arith.constant 0 : index
    %c0_51 = arith.constant 0 : index
    %90 = vector.load %arg7[%c11, %c0_50, %c0_51] : memref<12x64x16xf32, #tpu.memory_space<vmem>>, vector<1x64x16xf32>
    %91 = vector.shape_cast %90 : vector<1x64x16xf32> to vector<64x16xf32>
    %cst_52 = arith.constant dense<0.000000e+00> : vector<8x16xf32>
    %92 = tpu.matmul %89, %91, %cst_52 {dimension_numbers = #tpu.dot_dimension_numbers<[1], [0], [0], [1], [0, 0, 1, 1], [], []>} : vector<8x64xf32>, vector<64x16xf32>, vector<8x16xf32> -> vector<8x16xf32>
    %93 = arith.addf %87, %92 : vector<8x16xf32>
    %c0_53 = arith.constant 0 : index
    %c0_54 = arith.constant 0 : index
    %94 = vector.load %arg8[%c0_53, %c0_54] : memref<1x16xf32, #tpu.memory_space<vmem>>, vector<1x16xf32>
    %95 = vector.broadcast %94 : vector<1x16xf32> to vector<8x16xf32>
    %96 = arith.addf %93, %95 : vector<8x16xf32>
    %c8_i32 = arith.constant 8 : i32
    %97 = arith.muli %arg0, %c8_i32 : i32
    %98 = tpu.assume_multiple %97, 8 : i32
    %99 = arith.index_cast %98 : i32 to index
    %c0_55 = arith.constant 0 : index
    %100 = vector.load %arg18[%99, %c0_55] : memref<8x16xf32, #tpu.memory_space<vmem>>, vector<8x16xf32>
    tpu.vector_store %arg18[%99, %c0_55], %96 {strides = array<i32>} : memref<8x16xf32, #tpu.memory_space<vmem>>, vector<8x16xf32>,
    %c0_i32 = arith.constant 0 : i32
    %101 = arith.cmpi eq, %arg0, %c0_i32 : i32
    %102 = arith.extui %101 : i1 to i32
    %c0_i32_56 = arith.constant 0 : i32
    %103 = arith.cmpi ne, %102, %c0_i32_56 : i32
    scf.if %103 {
      %104 = tpu.iota {dimensions = array<i32: 0>} : vector<8x1xi32>
      %c2_i32 = arith.constant 2 : i32
      %105 = vector.broadcast %c2_i32 : i32 to vector<8x1xi32>
      %106 = arith.cmpi slt, %104, %105 : vector<8x1xi32>
      %107 = arith.extui %106 : vector<8x1xi1> to vector<8x1xi32>
      %108 = arith.sitofp %107 : vector<8x1xi32> to vector<8x1xf32>
      %c0_57 = arith.constant 0 : index
      %c0_58 = arith.constant 0 : index
      %109 = vector.load %arg18[%c0_57, %c0_58] : memref<8x16xf32, #tpu.memory_space<vmem>>, vector<8x16xf32>
      %cst_59 = arith.constant 0.000000e+00 : f32
      %110 = vector.broadcast %cst_59 : f32 to vector<8x16xf32>
      %111 = arith.maximumf %109, %110 : vector<8x16xf32>
      %c0_60 = arith.constant 0 : index
      %c0_61 = arith.constant 0 : index
      %112 = vector.load %arg9[%c0_60, %c0_61] : memref<1x16xf32, #tpu.memory_space<vmem>>, vector<1x16xf32>
      %c0_62 = arith.constant 0 : index
      %c0_63 = arith.constant 0 : index
      %113 = vector.load %arg10[%c0_62, %c0_63] : memref<1x16xf32, #tpu.memory_space<vmem>>, vector<1x16xf32>
      %114 = vector.broadcast %108 : vector<8x1xf32> to vector<8x16xf32>
      %115 = arith.mulf %111, %114 : vector<8x16xf32>
      %cst_64 = arith.constant dense<0.000000e+00> : vector<16xf32>
      %116 = vector.multi_reduction <add>, %115, %cst_64 [0] : vector<8x16xf32> to vector<16xf32>
      %117 = vector.shape_cast %116 : vector<16xf32> to vector<1x16xf32>
      %cst_65 = arith.constant 5.000000e-01 : f32
      %118 = vector.broadcast %cst_65 : f32 to vector<1x16xf32>
      %119 = arith.mulf %117, %118 : vector<1x16xf32>
      %120 = vector.broadcast %119 : vector<1x16xf32> to vector<8x16xf32>
      %121 = arith.subf %111, %120 : vector<8x16xf32>
      %122 = arith.mulf %121, %121 : vector<8x16xf32>
      %123 = vector.broadcast %108 : vector<8x1xf32> to vector<8x16xf32>
      %124 = arith.mulf %122, %123 : vector<8x16xf32>
      %cst_66 = arith.constant dense<0.000000e+00> : vector<16xf32>
      %125 = vector.multi_reduction <add>, %124, %cst_66 [0] : vector<8x16xf32> to vector<16xf32>
      %126 = vector.shape_cast %125 : vector<16xf32> to vector<1x16xf32>
      %cst_67 = arith.constant 5.000000e-01 : f32
      %127 = vector.broadcast %cst_67 : f32 to vector<1x16xf32>
      %128 = arith.mulf %126, %127 : vector<1x16xf32>
      %129 = vector.broadcast %119 : vector<1x16xf32> to vector<8x16xf32>
      %130 = arith.subf %111, %129 : vector<8x16xf32>
      %131 = vector.broadcast %112 : vector<1x16xf32> to vector<8x16xf32>
      %132 = arith.mulf %131, %130 : vector<8x16xf32>
      %cst_68 = arith.constant 9.99999974E-6 : f32
      %133 = vector.broadcast %cst_68 : f32 to vector<1x16xf32>
      %134 = arith.addf %128, %133 : vector<1x16xf32>
      %135 = math.rsqrt %134 : vector<1x16xf32>
      %136 = vector.broadcast %135 : vector<1x16xf32> to vector<8x16xf32>
      %137 = arith.mulf %132, %136 : vector<8x16xf32>
      %138 = vector.broadcast %113 : vector<1x16xf32> to vector<8x16xf32>
      %139 = arith.addf %137, %138 : vector<8x16xf32>
      %c0_69 = arith.constant 0 : index
      %c0_70 = arith.constant 0 : index
      %140 = vector.load %arg11[%c0_69, %c0_70] : memref<16x32xf32, #tpu.memory_space<vmem>>, vector<16x32xf32>
      %cst_71 = arith.constant dense<0.000000e+00> : vector<8x32xf32>
      %141 = tpu.matmul %139, %140, %cst_71 {dimension_numbers = #tpu.dot_dimension_numbers<[1], [0], [0], [1], [0, 0, 1, 1], [], []>} : vector<8x16xf32>, vector<16x32xf32>, vector<8x32xf32> -> vector<8x32xf32>
      %c0_72 = arith.constant 0 : index
      %c0_73 = arith.constant 0 : index
      %142 = vector.load %arg12[%c0_72, %c0_73] : memref<1x32xf32, #tpu.memory_space<vmem>>, vector<1x32xf32>
      %143 = vector.broadcast %142 : vector<1x32xf32> to vector<8x32xf32>
      %144 = arith.addf %141, %143 : vector<8x32xf32>
      %cst_74 = arith.constant 0.000000e+00 : f32
      %145 = vector.broadcast %cst_74 : f32 to vector<8x32xf32>
      %146 = arith.maximumf %144, %145 : vector<8x32xf32>
      %c0_75 = arith.constant 0 : index
      %c0_76 = arith.constant 0 : index
      %147 = vector.load %arg13[%c0_75, %c0_76] : memref<1x32xf32, #tpu.memory_space<vmem>>, vector<1x32xf32>
      %c0_77 = arith.constant 0 : index
      %c0_78 = arith.constant 0 : index
      %148 = vector.load %arg14[%c0_77, %c0_78] : memref<1x32xf32, #tpu.memory_space<vmem>>, vector<1x32xf32>
      %149 = vector.broadcast %108 : vector<8x1xf32> to vector<8x32xf32>
      %150 = arith.mulf %146, %149 : vector<8x32xf32>
      %cst_79 = arith.constant dense<0.000000e+00> : vector<32xf32>
      %151 = vector.multi_reduction <add>, %150, %cst_79 [0] : vector<8x32xf32> to vector<32xf32>
      %152 = vector.shape_cast %151 : vector<32xf32> to vector<1x32xf32>
      %cst_80 = arith.constant 5.000000e-01 : f32
      %153 = vector.broadcast %cst_80 : f32 to vector<1x32xf32>
      %154 = arith.mulf %152, %153 : vector<1x32xf32>
      %155 = vector.broadcast %154 : vector<1x32xf32> to vector<8x32xf32>
      %156 = arith.subf %146, %155 : vector<8x32xf32>
      %157 = arith.mulf %156, %156 : vector<8x32xf32>
      %158 = vector.broadcast %108 : vector<8x1xf32> to vector<8x32xf32>
      %159 = arith.mulf %157, %158 : vector<8x32xf32>
      %cst_81 = arith.constant dense<0.000000e+00> : vector<32xf32>
      %160 = vector.multi_reduction <add>, %159, %cst_81 [0] : vector<8x32xf32> to vector<32xf32>
      %161 = vector.shape_cast %160 : vector<32xf32> to vector<1x32xf32>
      %cst_82 = arith.constant 5.000000e-01 : f32
      %162 = vector.broadcast %cst_82 : f32 to vector<1x32xf32>
      %163 = arith.mulf %161, %162 : vector<1x32xf32>
      %164 = vector.broadcast %154 : vector<1x32xf32> to vector<8x32xf32>
      %165 = arith.subf %146, %164 : vector<8x32xf32>
      %166 = vector.broadcast %147 : vector<1x32xf32> to vector<8x32xf32>
      %167 = arith.mulf %166, %165 : vector<8x32xf32>
      %cst_83 = arith.constant 9.99999974E-6 : f32
      %168 = vector.broadcast %cst_83 : f32 to vector<1x32xf32>
      %169 = arith.addf %163, %168 : vector<1x32xf32>
      %170 = math.rsqrt %169 : vector<1x32xf32>
      %171 = vector.broadcast %170 : vector<1x32xf32> to vector<8x32xf32>
      %172 = arith.mulf %167, %171 : vector<8x32xf32>
      %173 = vector.broadcast %148 : vector<1x32xf32> to vector<8x32xf32>
      %174 = arith.addf %172, %173 : vector<8x32xf32>
      %c0_84 = arith.constant 0 : index
      %c0_85 = arith.constant 0 : index
      %175 = vector.load %arg15[%c0_84, %c0_85] : memref<32x128xf32, #tpu.memory_space<vmem>>, vector<32x128xf32>
      %cst_86 = arith.constant dense<0.000000e+00> : vector<8x128xf32>
      %176 = tpu.matmul %174, %175, %cst_86 {dimension_numbers = #tpu.dot_dimension_numbers<[1], [0], [0], [1], [0, 0, 1, 1], [], []>} : vector<8x32xf32>, vector<32x128xf32>, vector<8x128xf32> -> vector<8x128xf32>
      %c0_87 = arith.constant 0 : index
      %c0_88 = arith.constant 0 : index
      %177 = vector.load %arg16[%c0_87, %c0_88] : memref<1x128xf32, #tpu.memory_space<vmem>>, vector<1x128xf32>
      %178 = vector.broadcast %177 : vector<1x128xf32> to vector<8x128xf32>
      %179 = arith.addf %176, %178 : vector<8x128xf32>
      %c0_89 = arith.constant 0 : index
      %c0_90 = arith.constant 0 : index
      %180 = vector.load %arg17[%c0_89, %c0_90] : memref<8x128xf32, #tpu.memory_space<vmem>>, vector<8x128xf32>
      tpu.vector_store %arg17[%c0_89, %c0_90], %179 {strides = array<i32>} : memref<8x128xf32, #tpu.memory_space<vmem>>, vector<8x128xf32>,
    } else {
    }
    return
  }
  func.func @transform_0(%arg0: i32) -> (i32, i32, i32) {
    %c0_i32 = arith.constant 0 : i32
    %c0_i32_0 = arith.constant 0 : i32
    %c0_i32_1 = arith.constant 0 : i32
    return %arg0, %c0_i32, %c0_i32_0 : i32, i32, i32
  }
  func.func @transform_1(%arg0: i32) -> (i32, i32, i32) {
    %c0_i32 = arith.constant 0 : i32
    %c0_i32_0 = arith.constant 0 : i32
    %c0_i32_1 = arith.constant 0 : i32
    return %arg0, %c0_i32, %c0_i32_0 : i32, i32, i32
  }
  func.func @transform_2(%arg0: i32) -> (i32, i32) {
    %c0_i32 = arith.constant 0 : i32
    %c0_i32_0 = arith.constant 0 : i32
    %c0_i32_1 = arith.constant 0 : i32
    return %c0_i32, %c0_i32_0 : i32, i32
  }
  func.func @transform_3(%arg0: i32) -> (i32, i32) {
    %c0_i32 = arith.constant 0 : i32
    %c0_i32_0 = arith.constant 0 : i32
    %c0_i32_1 = arith.constant 0 : i32
    return %c0_i32, %c0_i32_0 : i32, i32
  }
  func.func @transform_4(%arg0: i32) -> (i32, i32) {
    %c0_i32 = arith.constant 0 : i32
    %c0_i32_0 = arith.constant 0 : i32
    %c0_i32_1 = arith.constant 0 : i32
    return %c0_i32, %c0_i32_0 : i32, i32
  }
  func.func @transform_5(%arg0: i32) -> (i32, i32) {
    %c0_i32 = arith.constant 0 : i32
    %c0_i32_0 = arith.constant 0 : i32
    %c0_i32_1 = arith.constant 0 : i32
    return %c0_i32, %c0_i32_0 : i32, i32
  }
  func.func @transform_6(%arg0: i32) -> (i32, i32, i32) {
    %c0_i32 = arith.constant 0 : i32
    %c0_i32_0 = arith.constant 0 : i32
    %c0_i32_1 = arith.constant 0 : i32
    %c0_i32_2 = arith.constant 0 : i32
    return %c0_i32, %c0_i32_0, %c0_i32_1 : i32, i32, i32
  }
  func.func @transform_7(%arg0: i32) -> (i32, i32) {
    %c0_i32 = arith.constant 0 : i32
    %c0_i32_0 = arith.constant 0 : i32
    %c0_i32_1 = arith.constant 0 : i32
    return %c0_i32, %c0_i32_0 : i32, i32
  }
  func.func @transform_8(%arg0: i32) -> (i32, i32) {
    %c0_i32 = arith.constant 0 : i32
    %c0_i32_0 = arith.constant 0 : i32
    %c0_i32_1 = arith.constant 0 : i32
    return %c0_i32, %c0_i32_0 : i32, i32
  }
  func.func @transform_9(%arg0: i32) -> (i32, i32) {
    %c0_i32 = arith.constant 0 : i32
    %c0_i32_0 = arith.constant 0 : i32
    %c0_i32_1 = arith.constant 0 : i32
    return %c0_i32, %c0_i32_0 : i32, i32
  }
  func.func @transform_10(%arg0: i32) -> (i32, i32) {
    %c0_i32 = arith.constant 0 : i32
    %c0_i32_0 = arith.constant 0 : i32
    %c0_i32_1 = arith.constant 0 : i32
    return %c0_i32, %c0_i32_0 : i32, i32
  }
  func.func @transform_11(%arg0: i32) -> (i32, i32) {
    %c0_i32 = arith.constant 0 : i32
    %c0_i32_0 = arith.constant 0 : i32
    %c0_i32_1 = arith.constant 0 : i32
    return %c0_i32, %c0_i32_0 : i32, i32
  }
  func.func @transform_12(%arg0: i32) -> (i32, i32) {
    %c0_i32 = arith.constant 0 : i32
    %c0_i32_0 = arith.constant 0 : i32
    %c0_i32_1 = arith.constant 0 : i32
    return %c0_i32, %c0_i32_0 : i32, i32
  }
  func.func @transform_13(%arg0: i32) -> (i32, i32) {
    %c0_i32 = arith.constant 0 : i32
    %c0_i32_0 = arith.constant 0 : i32
    %c0_i32_1 = arith.constant 0 : i32
    return %c0_i32, %c0_i32_0 : i32, i32
  }
  func.func @transform_14(%arg0: i32) -> (i32, i32) {
    %c0_i32 = arith.constant 0 : i32
    %c0_i32_0 = arith.constant 0 : i32
    %c0_i32_1 = arith.constant 0 : i32
    return %c0_i32, %c0_i32_0 : i32, i32
  }
  func.func @transform_15(%arg0: i32) -> (i32, i32) {
    %c0_i32 = arith.constant 0 : i32
    %c0_i32_0 = arith.constant 0 : i32
    %c0_i32_1 = arith.constant 0 : i32
    return %c0_i32, %c0_i32_0 : i32, i32
  }
  func.func @transform_16(%arg0: i32) -> (i32, i32) {
    %c0_i32 = arith.constant 0 : i32
    %c0_i32_0 = arith.constant 0 : i32
    %c0_i32_1 = arith.constant 0 : i32
    return %c0_i32, %c0_i32_0 : i32, i32
  }
}

</mosaic_0001>

<llo_original>
// kernel: full_gcn_forward.1
$region0: #{full_gcn_forward.1}
  #allocation0 [shape = 'u32[]', space=smem, size = 0x4, offset = 0x4, fixed_abs, tag = 'smem constant byte address 0x4 - core index']
  #allocation1 [shape = 'u32[144,128]{1,0:T(1,128)}', space=vmem, size = 0x12000, scoped, tag = 'internal scratch']
  #allocation2 [shape = 'f32[8,16]{1,0:T(8,128)}', space=vmem, size = 0x1000, scoped, tag = 'scratch operand']
  %s0 = inlined_call_operand.vmem [shape: f32[8,64,64], index: 0, kind: input, shape index: {}]
  %s1 = inlined_call_operand.vmem [shape: f32[8,1,64], index: 1, kind: input, shape index: {}]
  %s2 = inlined_call_operand.vmem [shape: f32[12,1], index: 2, kind: input, shape index: {}]
  %s3 = inlined_call_operand.vmem [shape: f32[12,1], index: 3, kind: input, shape index: {}]
  %s4 = inlined_call_operand.vmem [shape: f32[12,12], index: 4, kind: input, shape index: {}]
  %s5 = inlined_call_operand.vmem [shape: f32[12,1], index: 5, kind: input, shape index: {}]
  %s6 = inlined_call_operand.vmem [shape: f32[12,64,16], index: 6, kind: input, shape index: {}]
  %s7 = inlined_call_operand.vmem [shape: f32[1,16], index: 7, kind: input, shape index: {}]
  %s8 = inlined_call_operand.vmem [shape: f32[1,16], index: 8, kind: input, shape index: {}]
  %s9 = inlined_call_operand.vmem [shape: f32[1,16], index: 9, kind: input, shape index: {}]
  %s10 = inlined_call_operand.vmem [shape: f32[16,32], index: 10, kind: input, shape index: {}]
  %s11 = inlined_call_operand.vmem [shape: f32[1,32], index: 11, kind: input, shape index: {}]
  %s12 = inlined_call_operand.vmem [shape: f32[1,32], index: 12, kind: input, shape index: {}]
  %s13 = inlined_call_operand.vmem [shape: f32[1,32], index: 13, kind: input, shape index: {}]
  %s14 = inlined_call_operand.vmem [shape: f32[32,128], index: 14, kind: input, shape index: {}]
  %s15 = inlined_call_operand.vmem [shape: f32[1,128], index: 15, kind: input, shape index: {}]
  %s16 = inlined_call_operand.vmem [shape: f32[8,128], index: 16, kind: output, shape index: {}]
  %s17 = sld [smem:[#allocation0]]
  $region78: #{full_gcn_forward.1} parent=0
    _
  %s19 = ssub.s32 1, %s17
  %s20 = scalar_select 0, %s19, %s17
  // Predicated region
  $region2: #{full_gcn_forward.1} parent=0 // pred_check
    _
  $region3: #{full_gcn_forward.1} parent=0 // pred_check_branch
    %22 = sbr.rel (0) target = $region5
  $region4: #{full_gcn_forward.1} parent=0 // pred_region
    _
  $region5: #{full_gcn_forward.1} parent=0 // pred_fallthru
    _
  // Predicated region
  $region6: #{full_gcn_forward.1} parent=0 // pred_check
    _
  $region7: #{full_gcn_forward.1} parent=0 // pred_check_branch
    %24 = sbr.rel (0) target = $region9
  $region8: #{full_gcn_forward.1} parent=0 // pred_region
    _
  $region9: #{full_gcn_forward.1} parent=0 // pred_fallthru
    _
  // Predicated region
  $region10: #{full_gcn_forward.1} parent=0 // pred_check
    _
  $region11: #{full_gcn_forward.1} parent=0 // pred_check_branch
    %26 = sbr.rel (0) target = $region13
  $region12: #{full_gcn_forward.1} parent=0 // pred_region
    _
  $region13: #{full_gcn_forward.1} parent=0 // pred_fallthru
    _
  // Predicated region
  $region14: #{full_gcn_forward.1} parent=0 // pred_check
    _
  $region15: #{full_gcn_forward.1} parent=0 // pred_check_branch
    %28 = sbr.rel (0) target = $region17
  $region16: #{full_gcn_forward.1} parent=0 // pred_region
    _
  $region17: #{full_gcn_forward.1} parent=0 // pred_fallthru
    _
  // Predicated region
  $region18: #{full_gcn_forward.1} parent=0 // pred_check
    _
  $region19: #{full_gcn_forward.1} parent=0 // pred_check_branch
    %30 = sbr.rel (0) target = $region21
  $region20: #{full_gcn_forward.1} parent=0 // pred_region
    _
  $region21: #{full_gcn_forward.1} parent=0 // pred_fallthru
    _
  // Predicated region
  $region22: #{full_gcn_forward.1} parent=0 // pred_check
    _
  $region23: #{full_gcn_forward.1} parent=0 // pred_check_branch
    %32 = sbr.rel (0) target = $region25
  $region24: #{full_gcn_forward.1} parent=0 // pred_region
    _
  $region25: #{full_gcn_forward.1} parent=0 // pred_fallthru
    _
  // Predicated region
  $region26: #{full_gcn_forward.1} parent=0 // pred_check
    _
  $region27: #{full_gcn_forward.1} parent=0 // pred_check_branch
    %34 = sbr.rel (0) target = $region29
  $region28: #{full_gcn_forward.1} parent=0 // pred_region
    _
  $region29: #{full_gcn_forward.1} parent=0 // pred_fallthru
    _
  // Predicated region
  $region30: #{full_gcn_forward.1} parent=0 // pred_check
    _
  $region31: #{full_gcn_forward.1} parent=0 // pred_check_branch
    %36 = sbr.rel (0) target = $region33
  $region32: #{full_gcn_forward.1} parent=0 // pred_region
    _
  $region33: #{full_gcn_forward.1} parent=0 // pred_fallthru
    _
  // Predicated region
  $region34: #{full_gcn_forward.1} parent=0 // pred_check
    _
  $region35: #{full_gcn_forward.1} parent=0 // pred_check_branch
    %38 = sbr.rel (0) target = $region37
  $region36: #{full_gcn_forward.1} parent=0 // pred_region
    _
  $region37: #{full_gcn_forward.1} parent=0 // pred_fallthru
    _
  // Predicated region
  $region38: #{full_gcn_forward.1} parent=0 // pred_check
    _
  $region39: #{full_gcn_forward.1} parent=0 // pred_check_branch
    %40 = sbr.rel (0) target = $region41
  $region40: #{full_gcn_forward.1} parent=0 // pred_region
    _
  $region41: #{full_gcn_forward.1} parent=0 // pred_fallthru
    _
  // Predicated region
  $region42: #{full_gcn_forward.1} parent=0 // pred_check
    _
  $region43: #{full_gcn_forward.1} parent=0 // pred_check_branch
    %42 = sbr.rel (0) target = $region45
  $region44: #{full_gcn_forward.1} parent=0 // pred_region
    _
  $region45: #{full_gcn_forward.1} parent=0 // pred_fallthru
    _
  // Predicated region
  $region46: #{full_gcn_forward.1} parent=0 // pred_check
    _
  $region47: #{full_gcn_forward.1} parent=0 // pred_check_branch
    %44 = sbr.rel (0) target = $region49
  $region48: #{full_gcn_forward.1} parent=0 // pred_region
    _
  $region49: #{full_gcn_forward.1} parent=0 // pred_fallthru
    _
  // Predicated region
  $region50: #{full_gcn_forward.1} parent=0 // pred_check
    _
  $region51: #{full_gcn_forward.1} parent=0 // pred_check_branch
    %46 = sbr.rel (0) target = $region53
  $region52: #{full_gcn_forward.1} parent=0 // pred_region
    _
  $region53: #{full_gcn_forward.1} parent=0 // pred_fallthru
    _
  // Predicated region
  $region54: #{full_gcn_forward.1} parent=0 // pred_check
    _
  $region55: #{full_gcn_forward.1} parent=0 // pred_check_branch
    %48 = sbr.rel (0) target = $region57
  $region56: #{full_gcn_forward.1} parent=0 // pred_region
    _
  $region57: #{full_gcn_forward.1} parent=0 // pred_fallthru
    _
  // Predicated region
  $region58: #{full_gcn_forward.1} parent=0 // pred_check
    _
  $region59: #{full_gcn_forward.1} parent=0 // pred_check_branch
    %50 = sbr.rel (0) target = $region61
  $region60: #{full_gcn_forward.1} parent=0 // pred_region
    _
  $region61: #{full_gcn_forward.1} parent=0 // pred_fallthru
    _
  // Predicated region
  $region62: #{full_gcn_forward.1} parent=0 // pred_check
    _
  $region63: #{full_gcn_forward.1} parent=0 // pred_check_branch
    %52 = sbr.rel (0) target = $region65
  $region64: #{full_gcn_forward.1} parent=0 // pred_region
    _
  $region65: #{full_gcn_forward.1} parent=0 // pred_fallthru
    _
  %v53 = vld [vmem:[%s0] sm:$0xff]
  %v54 = vld [vmem:[%s0 + $0x8] sm:$0xff]
  %v55 = vld [vmem:[%s0 + $0x10] sm:$0xff]
  %v56 = vld [vmem:[%s0 + $0x18] sm:$0xff]
  %v57 = vld [vmem:[%s0 + $0x20] sm:$0xff]
  %v58 = vld [vmem:[%s0 + $0x28] sm:$0xff]
  %v59 = vld [vmem:[%s0 + $0x30] sm:$0xff]
  %v60 = vld [vmem:[%s0 + $0x38] sm:$0xff]
  %v61 = vld [vmem:[%s0 + $0x40] sm:$0xff]
  %v62 = vld [vmem:[%s0 + $0x48] sm:$0xff]
  %v63 = vld [vmem:[%s0 + $0x50] sm:$0xff]
  %v64 = vld [vmem:[%s0 + $0x58] sm:$0xff]
  %v65 = vld [vmem:[%s0 + $0x60] sm:$0xff]
  %v66 = vld [vmem:[%s0 + $0x68] sm:$0xff]
  %v67 = vld [vmem:[%s0 + $0x70] sm:$0xff]
  %v68 = vld [vmem:[%s0 + $0x78] sm:$0xff]
  %v69 = vld [vmem:[%s0 + $0x80] sm:$0xff]
  %v70 = vld [vmem:[%s0 + $0x88] sm:$0xff]
  %v71 = vld [vmem:[%s0 + $0x90] sm:$0xff]
  %v72 = vld [vmem:[%s0 + $0x98] sm:$0xff]
  %v73 = vld [vmem:[%s0 + $0xa0] sm:$0xff]
  %v74 = vld [vmem:[%s0 + $0xa8] sm:$0xff]
  %v75 = vld [vmem:[%s0 + $0xb0] sm:$0xff]
  %v76 = vld [vmem:[%s0 + $0xb8] sm:$0xff]
  %v77 = vld [vmem:[%s0 + $0xc0] sm:$0xff]
  %v78 = vld [vmem:[%s0 + $0xc8] sm:$0xff]
  %v79 = vld [vmem:[%s0 + $0xd0] sm:$0xff]
  %v80 = vld [vmem:[%s0 + $0xd8] sm:$0xff]
  %v81 = vld [vmem:[%s0 + $0xe0] sm:$0xff]
  %v82 = vld [vmem:[%s0 + $0xe8] sm:$0xff]
  %v83 = vld [vmem:[%s0 + $0xf0] sm:$0xff]
  %v84 = vld [vmem:[%s0 + $0xf8] sm:$0xff]
  %v85 = vld [vmem:[%s0 + $0x100] sm:$0xff]
  %v86 = vld [vmem:[%s0 + $0x108] sm:$0xff]
  %v87 = vld [vmem:[%s0 + $0x110] sm:$0xff]
  %v88 = vld [vmem:[%s0 + $0x118] sm:$0xff]
  %v89 = vld [vmem:[%s0 + $0x120] sm:$0xff]
  %v90 = vld [vmem:[%s0 + $0x128] sm:$0xff]
  %v91 = vld [vmem:[%s0 + $0x130] sm:$0xff]
  %v92 = vld [vmem:[%s0 + $0x138] sm:$0xff]
  %v93 = vld [vmem:[%s0 + $0x140] sm:$0xff]
  %v94 = vld [vmem:[%s0 + $0x148] sm:$0xff]
  %v95 = vld [vmem:[%s0 + $0x150] sm:$0xff]
  %v96 = vld [vmem:[%s0 + $0x158] sm:$0xff]
  %v97 = vld [vmem:[%s0 + $0x160] sm:$0xff]
  %v98 = vld [vmem:[%s0 + $0x168] sm:$0xff]
  %v99 = vld [vmem:[%s0 + $0x170] sm:$0xff]
  %v100 = vld [vmem:[%s0 + $0x178] sm:$0xff]
  %v101 = vld [vmem:[%s0 + $0x180] sm:$0xff]
  %v102 = vld [vmem:[%s0 + $0x188] sm:$0xff]
  %v103 = vld [vmem:[%s0 + $0x190] sm:$0xff]
  %v104 = vld [vmem:[%s0 + $0x198] sm:$0xff]
  %v105 = vld [vmem:[%s0 + $0x1a0] sm:$0xff]
  %v106 = vld [vmem:[%s0 + $0x1a8] sm:$0xff]
  %v107 = vld [vmem:[%s0 + $0x1b0] sm:$0xff]
  %v108 = vld [vmem:[%s0 + $0x1b8] sm:$0xff]
  %v109 = vld [vmem:[%s0 + $0x1c0] sm:$0xff]
  %v110 = vld [vmem:[%s0 + $0x1c8] sm:$0xff]
  %v111 = vld [vmem:[%s0 + $0x1d0] sm:$0xff]
  %v112 = vld [vmem:[%s0 + $0x1d8] sm:$0xff]
  %v113 = vld [vmem:[%s0 + $0x1e0] sm:$0xff]
  %v114 = vld [vmem:[%s0 + $0x1e8] sm:$0xff]
  %v115 = vld [vmem:[%s0 + $0x1f0] sm:$0xff]
  %v116 = vld [vmem:[%s0 + $0x1f8] sm:$0xff]
  %v117 = vld [vmem:[%s1] sm:$0x1]
  %v118 = vld [vmem:[%s1 + $0x1] sm:$0x1]
  %v119 = vld [vmem:[%s1 + $0x2] sm:$0x1]
  %v120 = vld [vmem:[%s1 + $0x3] sm:$0x1]
  %v121 = vld [vmem:[%s1 + $0x4] sm:$0x1]
  %v122 = vld [vmem:[%s1 + $0x5] sm:$0x1]
  %v123 = vld [vmem:[%s1 + $0x6] sm:$0x1]
  %v124 = vld [vmem:[%s1 + $0x7] sm:$0x1]
  %v125 = vld [vmem:[%s2] sm:$0xff]
  %v126 = vld [vmem:[%s2 + $0x8] sm:$0xf]
  %128 = vset.pattern.permute.xlu0 0
  %129 = vperm.xlu0 %128, %v125
  %v130 = vpop.permute.xlu0 %129
  %133 = vset.pattern.permute.xlu0 0
  %134 = vperm.xlu0 %133, %v126
  %v135 = vpop.permute.xlu0 %134
  %v145 = vlaneseq
  %v146 = vshrl.u32 %v145, 7
  %v147 = vsub.s32 0, %v146
  %v148 = vrot.slane %v117, %v147
  %v149 = vlaneseq
  %v150 = vshrl.u32 %v149, 7
  %v151 = vsub.s32 0, %v150
  %v152 = vrot.slane %v118, %v151
  %v153 = vlaneseq
  %v154 = vshrl.u32 %v153, 7
  %v155 = vsub.s32 0, %v154
  %v156 = vrot.slane %v119, %v155
  %v157 = vlaneseq
  %v158 = vshrl.u32 %v157, 7
  %v159 = vsub.s32 0, %v158
  %v160 = vrot.slane %v120, %v159
  %v161 = vlaneseq
  %v162 = vshrl.u32 %v161, 7
  %v163 = vsub.s32 0, %v162
  %v164 = vrot.slane %v121, %v163
  %v165 = vlaneseq
  %v166 = vshrl.u32 %v165, 7
  %v167 = vsub.s32 0, %v166
  %v168 = vrot.slane %v122, %v167
  %v169 = vlaneseq
  %v170 = vshrl.u32 %v169, 7
  %v171 = vsub.s32 0, %v170
  %v172 = vrot.slane %v123, %v171
  %v173 = vlaneseq
  %v174 = vshrl.u32 %v173, 7
  %v175 = vsub.s32 0, %v174
  %v176 = vrot.slane %v124, %v175
  %v185 = vmul.f32 %v130, %v148
  %v186 = vmul.f32 %v135, %v148
  %v187 = vmul.f32 %v130, %v152
  %v188 = vmul.f32 %v135, %v152
  %v189 = vmul.f32 %v130, %v156
  %v190 = vmul.f32 %v135, %v156
  %v191 = vmul.f32 %v130, %v160
  %v192 = vmul.f32 %v135, %v160
  %v193 = vmul.f32 %v130, %v164
  %v194 = vmul.f32 %v135, %v164
  %v195 = vmul.f32 %v130, %v168
  %v196 = vmul.f32 %v135, %v168
  %v197 = vmul.f32 %v130, %v172
  %v198 = vmul.f32 %v135, %v172
  %v199 = vmul.f32 %v130, %v176
  %v200 = vmul.f32 %v135, %v176
  %v201 = vld [vmem:[%s3] sm:$0xff]
  %v202 = vld [vmem:[%s3 + $0x8] sm:$0xf]
  %204 = vset.pattern.permute.xlu0 0
  %205 = vperm.xlu0 %204, %v201
  %v206 = vpop.permute.xlu0 %205
  %209 = vset.pattern.permute.xlu0 0
  %210 = vperm.xlu0 %209, %v202
  %v211 = vpop.permute.xlu0 %210
  %vm213 = vcmask 523264
  %v215 = vsel %vm213, %v185, 0
  %v218 = vsel %vm213, %v186, 0
  %v221 = vsel %vm213, %v53, 0
  %v224 = vsel %vm213, %v54, 0
  %v227 = vsel %vm213, %v55, 0
  %v230 = vsel %vm213, %v56, 0
  %v233 = vsel %vm213, %v57, 0
  %v236 = vsel %vm213, %v58, 0
  %v239 = vsel %vm213, %v59, 0
  %v242 = vsel %vm213, %v60, 0
  %244 = vmatprep.subr.mxu0 0.0
  %245 = vmatpush1.xpose.msra.mxu0 0.0
  %246 = vmatprep.subr.mxu0 0.0
  %247 = vmatpush1.xpose.msra.mxu0 0.0
  %248 = vmatprep.subr.mxu0 0.0
  %249 = vmatpush1.xpose.msra.mxu0 0.0
  %250 = vmatprep.subr.mxu0 0.0
  %251 = vmatpush1.xpose.msra.mxu0 0.0
  %252 = vmatprep.subr.mxu0 0.0
  %253 = vmatpush1.xpose.msra.mxu0 0.0
  %254 = vmatprep.subr.mxu0 0.0
  %255 = vmatpush1.xpose.msra.mxu0 0.0
  %256 = vmatprep.subr.mxu0 0.0
  %257 = vmatpush1.xpose.msra.mxu0 0.0
  %258 = vmatprep.subr.mxu0 0.0
  %259 = vmatpush1.xpose.msra.mxu0 0.0
  %260 = vmatprep.subr.mxu0 0.0
  %261 = vmatpush1.xpose.msra.mxu0 %v242
  %262 = vmatprep.subr.mxu0 0.0
  %263 = vmatpush1.xpose.msra.mxu0 %v239
  %264 = vmatprep.subr.mxu0 0.0
  %265 = vmatpush1.xpose.msra.mxu0 %v236
  %266 = vmatprep.subr.mxu0 0.0
  %267 = vmatpush1.xpose.msra.mxu0 %v233
  %268 = vmatprep.subr.mxu0 0.0
  %269 = vmatpush1.xpose.msra.mxu0 %v230
  %270 = vmatprep.subr.mxu0 0.0
  %271 = vmatpush1.xpose.msra.mxu0 %v227
  %272 = vmatprep.subr.mxu0 0.0
  %273 = vmatpush1.xpose.msra.mxu0 %v224
  %274 = vmatprep.subr.mxu0 0.0
  %275 = vmatpush1.xpose.msra.mxu0 %v221
  %276 = vmatprep.subr.mxu0 0.0
  %277 = vmatpush2.xpose.msra.mxu0 0.0
  %278 = vmatprep.subr.mxu0 0.0
  %279 = vmatpush2.xpose.msra.mxu0 0.0
  %280 = vmatprep.subr.mxu0 0.0
  %281 = vmatpush2.xpose.msra.mxu0 0.0
  %282 = vmatprep.subr.mxu0 0.0
  %283 = vmatpush2.xpose.msra.mxu0 0.0
  %284 = vmatprep.subr.mxu0 0.0
  %285 = vmatpush2.xpose.msra.mxu0 0.0
  %286 = vmatprep.subr.mxu0 0.0
  %287 = vmatpush2.xpose.msra.mxu0 0.0
  %288 = vmatprep.subr.mxu0 0.0
  %289 = vmatpush2.xpose.msra.mxu0 0.0
  %290 = vmatprep.subr.mxu0 0.0
  %291 = vmatpush2.xpose.msra.mxu0 0.0
  %292 = vmatprep.subr.mxu0 0.0
  %293 = vmatpush2.xpose.msra.mxu0 0.0
  %294 = vmatprep.subr.mxu0 0.0
  %295 = vmatpush2.xpose.msra.mxu0 0.0
  %296 = vmatprep.subr.mxu0 0.0
  %297 = vmatpush2.xpose.msra.mxu0 0.0
  %298 = vmatprep.subr.mxu0 0.0
  %299 = vmatpush2.xpose.msra.mxu0 0.0
  %300 = vmatprep.subr.mxu0 0.0
  %301 = vmatpush2.xpose.msra.mxu0 0.0
  %302 = vmatprep.subr.mxu0 0.0
  %303 = vmatpush2.xpose.msra.mxu0 0.0
  %304 = vmatprep.subr.mxu0 0.0
  %305 = vmatpush2.xpose.msra.mxu0 0.0
  %306 = vmatprep.subr.mxu0 0.0
  %307 = vmatpush2.xpose.msra.mxu0 0.0
  %308 = vmatprep.mubr.f32.mxu0 0.0
  %309 = vmatmul.mubr.f32.gmra.mxu0 %v215
  %v310 = vpop.f32.mrf.mxu0
  %v311 = vadd.f32 %v206, %v310
  %v312 = vpop.f32.mrf.mxu0
  %313 = vmatprep.mubr.f32.mxu0 0.0
  %314 = vmatmul.mubr.f32.gmra.mxu0 %v218
  %v315 = vpop.f32.mrf.mxu0
  %v316 = vadd.f32 %v211, %v315
  %v317 = vpop.f32.mrf.mxu0
  %318 = vdwg.mxu0
  %v320 = vsel %vm213, %v187, 0
  %v323 = vsel %vm213, %v188, 0
  %v326 = vsel %vm213, %v61, 0
  %v329 = vsel %vm213, %v62, 0
  %v332 = vsel %vm213, %v63, 0
  %v335 = vsel %vm213, %v64, 0
  %v338 = vsel %vm213, %v65, 0
  %v341 = vsel %vm213, %v66, 0
  %v344 = vsel %vm213, %v67, 0
  %v347 = vsel %vm213, %v68, 0
  %349 = vmatprep.subr.mxu0 0.0
  %350 = vmatpush1.xpose.msra.mxu0 0.0
  %351 = vmatprep.subr.mxu0 0.0
  %352 = vmatpush1.xpose.msra.mxu0 0.0
  %353 = vmatprep.subr.mxu0 0.0
  %354 = vmatpush1.xpose.msra.mxu0 0.0
  %355 = vmatprep.subr.mxu0 0.0
  %356 = vmatpush1.xpose.msra.mxu0 0.0
  %357 = vmatprep.subr.mxu0 0.0
  %358 = vmatpush1.xpose.msra.mxu0 0.0
  %359 = vmatprep.subr.mxu0 0.0
  %360 = vmatpush1.xpose.msra.mxu0 0.0
  %361 = vmatprep.subr.mxu0 0.0
  %362 = vmatpush1.xpose.msra.mxu0 0.0
  %363 = vmatprep.subr.mxu0 0.0
  %364 = vmatpush1.xpose.msra.mxu0 0.0
  %365 = vmatprep.subr.mxu0 0.0
  %366 = vmatpush1.xpose.msra.mxu0 %v347
  %367 = vmatprep.subr.mxu0 0.0
  %368 = vmatpush1.xpose.msra.mxu0 %v344
  %369 = vmatprep.subr.mxu0 0.0
  %370 = vmatpush1.xpose.msra.mxu0 %v341
  %371 = vmatprep.subr.mxu0 0.0
  %372 = vmatpush1.xpose.msra.mxu0 %v338
  %373 = vmatprep.subr.mxu0 0.0
  %374 = vmatpush1.xpose.msra.mxu0 %v335
  %375 = vmatprep.subr.mxu0 0.0
  %376 = vmatpush1.xpose.msra.mxu0 %v332
  %377 = vmatprep.subr.mxu0 0.0
  %378 = vmatpush1.xpose.msra.mxu0 %v329
  %379 = vmatprep.subr.mxu0 0.0
  %380 = vmatpush1.xpose.msra.mxu0 %v326
  %381 = vmatprep.subr.mxu0 0.0
  %382 = vmatpush2.xpose.msra.mxu0 0.0
  %383 = vmatprep.subr.mxu0 0.0
  %384 = vmatpush2.xpose.msra.mxu0 0.0
  %385 = vmatprep.subr.mxu0 0.0
  %386 = vmatpush2.xpose.msra.mxu0 0.0
  %387 = vmatprep.subr.mxu0 0.0
  %388 = vmatpush2.xpose.msra.mxu0 0.0
  %389 = vmatprep.subr.mxu0 0.0
  %390 = vmatpush2.xpose.msra.mxu0 0.0
  %391 = vmatprep.subr.mxu0 0.0
  %392 = vmatpush2.xpose.msra.mxu0 0.0
  %393 = vmatprep.subr.mxu0 0.0
  %394 = vmatpush2.xpose.msra.mxu0 0.0
  %395 = vmatprep.subr.mxu0 0.0
  %396 = vmatpush2.xpose.msra.mxu0 0.0
  %397 = vmatprep.subr.mxu0 0.0
  %398 = vmatpush2.xpose.msra.mxu0 0.0
  %399 = vmatprep.subr.mxu0 0.0
  %400 = vmatpush2.xpose.msra.mxu0 0.0
  %401 = vmatprep.subr.mxu0 0.0
  %402 = vmatpush2.xpose.msra.mxu0 0.0
  %403 = vmatprep.subr.mxu0 0.0
  %404 = vmatpush2.xpose.msra.mxu0 0.0
  %405 = vmatprep.subr.mxu0 0.0
  %406 = vmatpush2.xpose.msra.mxu0 0.0
  %407 = vmatprep.subr.mxu0 0.0
  %408 = vmatpush2.xpose.msra.mxu0 0.0
  %409 = vmatprep.subr.mxu0 0.0
  %410 = vmatpush2.xpose.msra.mxu0 0.0
  %411 = vmatprep.subr.mxu0 0.0
  %412 = vmatpush2.xpose.msra.mxu0 0.0
  %413 = vmatprep.mubr.f32.mxu0 0.0
  %414 = vmatmul.mubr.f32.gmra.mxu0 %v320
  %v415 = vpop.f32.mrf.mxu0
  %v416 = vadd.f32 %v206, %v415
  %v417 = vpop.f32.mrf.mxu0
  %418 = vmatprep.mubr.f32.mxu0 0.0
  %419 = vmatmul.mubr.f32.gmra.mxu0 %v323
  %v420 = vpop.f32.mrf.mxu0
  %v421 = vadd.f32 %v211, %v420
  %v422 = vpop.f32.mrf.mxu0
  %423 = vdwg.mxu0
  %v425 = vsel %vm213, %v189, 0
  %v428 = vsel %vm213, %v190, 0
  %v431 = vsel %vm213, %v69, 0
  %v434 = vsel %vm213, %v70, 0
  %v437 = vsel %vm213, %v71, 0
  %v440 = vsel %vm213, %v72, 0
  %v443 = vsel %vm213, %v73, 0
  %v446 = vsel %vm213, %v74, 0
  %v449 = vsel %vm213, %v75, 0
  %v452 = vsel %vm213, %v76, 0
  %454 = vmatprep.subr.mxu0 0.0
  %455 = vmatpush1.xpose.msra.mxu0 0.0
  %456 = vmatprep.subr.mxu0 0.0
  %457 = vmatpush1.xpose.msra.mxu0 0.0
  %458 = vmatprep.subr.mxu0 0.0
  %459 = vmatpush1.xpose.msra.mxu0 0.0
  %460 = vmatprep.subr.mxu0 0.0
  %461 = vmatpush1.xpose.msra.mxu0 0.0
  %462 = vmatprep.subr.mxu0 0.0
  %463 = vmatpush1.xpose.msra.mxu0 0.0
  %464 = vmatprep.subr.mxu0 0.0
  %465 = vmatpush1.xpose.msra.mxu0 0.0
  %466 = vmatprep.subr.mxu0 0.0
  %467 = vmatpush1.xpose.msra.mxu0 0.0
  %468 = vmatprep.subr.mxu0 0.0
  %469 = vmatpush1.xpose.msra.mxu0 0.0
  %470 = vmatprep.subr.mxu0 0.0
  %471 = vmatpush1.xpose.msra.mxu0 %v452
  %472 = vmatprep.subr.mxu0 0.0
  %473 = vmatpush1.xpose.msra.mxu0 %v449
  %474 = vmatprep.subr.mxu0 0.0
  %475 = vmatpush1.xpose.msra.mxu0 %v446
  %476 = vmatprep.subr.mxu0 0.0
  %477 = vmatpush1.xpose.msra.mxu0 %v443
  %478 = vmatprep.subr.mxu0 0.0
  %479 = vmatpush1.xpose.msra.mxu0 %v440
  %480 = vmatprep.subr.mxu0 0.0
  %481 = vmatpush1.xpose.msra.mxu0 %v437
  %482 = vmatprep.subr.mxu0 0.0
  %483 = vmatpush1.xpose.msra.mxu0 %v434
  %484 = vmatprep.subr.mxu0 0.0
  %485 = vmatpush1.xpose.msra.mxu0 %v431
  %486 = vmatprep.subr.mxu0 0.0
  %487 = vmatpush2.xpose.msra.mxu0 0.0
  %488 = vmatprep.subr.mxu0 0.0
  %489 = vmatpush2.xpose.msra.mxu0 0.0
  %490 = vmatprep.subr.mxu0 0.0
  %491 = vmatpush2.xpose.msra.mxu0 0.0
  %492 = vmatprep.subr.mxu0 0.0
  %493 = vmatpush2.xpose.msra.mxu0 0.0
  %494 = vmatprep.subr.mxu0 0.0
  %495 = vmatpush2.xpose.msra.mxu0 0.0
  %496 = vmatprep.subr.mxu0 0.0
  %497 = vmatpush2.xpose.msra.mxu0 0.0
  %498 = vmatprep.subr.mxu0 0.0
  %499 = vmatpush2.xpose.msra.mxu0 0.0
  %500 = vmatprep.subr.mxu0 0.0
  %501 = vmatpush2.xpose.msra.mxu0 0.0
  %502 = vmatprep.subr.mxu0 0.0
  %503 = vmatpush2.xpose.msra.mxu0 0.0
  %504 = vmatprep.subr.mxu0 0.0
  %505 = vmatpush2.xpose.msra.mxu0 0.0
  %506 = vmatprep.subr.mxu0 0.0
  %507 = vmatpush2.xpose.msra.mxu0 0.0
  %508 = vmatprep.subr.mxu0 0.0
  %509 = vmatpush2.xpose.msra.mxu0 0.0
  %510 = vmatprep.subr.mxu0 0.0
  %511 = vmatpush2.xpose.msra.mxu0 0.0
  %512 = vmatprep.subr.mxu0 0.0
  %513 = vmatpush2.xpose.msra.mxu0 0.0
  %514 = vmatprep.subr.mxu0 0.0
  %515 = vmatpush2.xpose.msra.mxu0 0.0
  %516 = vmatprep.subr.mxu0 0.0
  %517 = vmatpush2.xpose.msra.mxu0 0.0
  %518 = vmatprep.mubr.f32.mxu0 0.0
  %519 = vmatmul.mubr.f32.gmra.mxu0 %v425
  %v520 = vpop.f32.mrf.mxu0
  %v521 = vadd.f32 %v206, %v520
  %v522 = vpop.f32.mrf.mxu0
  %523 = vmatprep.mubr.f32.mxu0 0.0
  %524 = vmatmul.mubr.f32.gmra.mxu0 %v428
  %v525 = vpop.f32.mrf.mxu0
  %v526 = vadd.f32 %v211, %v525
  %v527 = vpop.f32.mrf.mxu0
  %528 = vdwg.mxu0
  %v530 = vsel %vm213, %v191, 0
  %v533 = vsel %vm213, %v192, 0
  %v536 = vsel %vm213, %v77, 0
  %v539 = vsel %vm213, %v78, 0
  %v542 = vsel %vm213, %v79, 0
  %v545 = vsel %vm213, %v80, 0
  %v548 = vsel %vm213, %v81, 0
  %v551 = vsel %vm213, %v82, 0
  %v554 = vsel %vm213, %v83, 0
  %v557 = vsel %vm213, %v84, 0
  %559 = vmatprep.subr.mxu0 0.0
  %560 = vmatpush1.xpose.msra.mxu0 0.0
  %561 = vmatprep.subr.mxu0 0.0
  %562 = vmatpush1.xpose.msra.mxu0 0.0
  %563 = vmatprep.subr.mxu0 0.0
  %564 = vmatpush1.xpose.msra.mxu0 0.0
  %565 = vmatprep.subr.mxu0 0.0
  %566 = vmatpush1.xpose.msra.mxu0 0.0
  %567 = vmatprep.subr.mxu0 0.0
  %568 = vmatpush1.xpose.msra.mxu0 0.0
  %569 = vmatprep.subr.mxu0 0.0
  %570 = vmatpush1.xpose.msra.mxu0 0.0
  %571 = vmatprep.subr.mxu0 0.0
  %572 = vmatpush1.xpose.msra.mxu0 0.0
  %573 = vmatprep.subr.mxu0 0.0
  %574 = vmatpush1.xpose.msra.mxu0 0.0
  %575 = vmatprep.subr.mxu0 0.0
  %576 = vmatpush1.xpose.msra.mxu0 %v557
  %577 = vmatprep.subr.mxu0 0.0
  %578 = vmatpush1.xpose.msra.mxu0 %v554
  %579 = vmatprep.subr.mxu0 0.0
  %580 = vmatpush1.xpose.msra.mxu0 %v551
  %581 = vmatprep.subr.mxu0 0.0
  %582 = vmatpush1.xpose.msra.mxu0 %v548
  %583 = vmatprep.subr.mxu0 0.0
  %584 = vmatpush1.xpose.msra.mxu0 %v545
  %585 = vmatprep.subr.mxu0 0.0
  %586 = vmatpush1.xpose.msra.mxu0 %v542
  %587 = vmatprep.subr.mxu0 0.0
  %588 = vmatpush1.xpose.msra.mxu0 %v539
  %589 = vmatprep.subr.mxu0 0.0
  %590 = vmatpush1.xpose.msra.mxu0 %v536
  %591 = vmatprep.subr.mxu0 0.0
  %592 = vmatpush2.xpose.msra.mxu0 0.0
  %593 = vmatprep.subr.mxu0 0.0
  %594 = vmatpush2.xpose.msra.mxu0 0.0
  %595 = vmatprep.subr.mxu0 0.0
  %596 = vmatpush2.xpose.msra.mxu0 0.0
  %597 = vmatprep.subr.mxu0 0.0
  %598 = vmatpush2.xpose.msra.mxu0 0.0
  %599 = vmatprep.subr.mxu0 0.0
  %600 = vmatpush2.xpose.msra.mxu0 0.0
  %601 = vmatprep.subr.mxu0 0.0
  %602 = vmatpush2.xpose.msra.mxu0 0.0
  %603 = vmatprep.subr.mxu0 0.0
  %604 = vmatpush2.xpose.msra.mxu0 0.0
  %605 = vmatprep.subr.mxu0 0.0
  %606 = vmatpush2.xpose.msra.mxu0 0.0
  %607 = vmatprep.subr.mxu0 0.0
  %608 = vmatpush2.xpose.msra.mxu0 0.0
  %609 = vmatprep.subr.mxu0 0.0
  %610 = vmatpush2.xpose.msra.mxu0 0.0
  %611 = vmatprep.subr.mxu0 0.0
  %612 = vmatpush2.xpose.msra.mxu0 0.0
  %613 = vmatprep.subr.mxu0 0.0
  %614 = vmatpush2.xpose.msra.mxu0 0.0
  %615 = vmatprep.subr.mxu0 0.0
  %616 = vmatpush2.xpose.msra.mxu0 0.0
  %617 = vmatprep.subr.mxu0 0.0
  %618 = vmatpush2.xpose.msra.mxu0 0.0
  %619 = vmatprep.subr.mxu0 0.0
  %620 = vmatpush2.xpose.msra.mxu0 0.0
  %621 = vmatprep.subr.mxu0 0.0
  %622 = vmatpush2.xpose.msra.mxu0 0.0
  %623 = vmatprep.mubr.f32.mxu0 0.0
  %624 = vmatmul.mubr.f32.gmra.mxu0 %v530
  %v625 = vpop.f32.mrf.mxu0
  %v626 = vadd.f32 %v206, %v625
  %v627 = vpop.f32.mrf.mxu0
  %628 = vmatprep.mubr.f32.mxu0 0.0
  %629 = vmatmul.mubr.f32.gmra.mxu0 %v533
  %v630 = vpop.f32.mrf.mxu0
  %v631 = vadd.f32 %v211, %v630
  %v632 = vpop.f32.mrf.mxu0
  %633 = vdwg.mxu0
  %v635 = vsel %vm213, %v193, 0
  %v638 = vsel %vm213, %v194, 0
  %v641 = vsel %vm213, %v85, 0
  %v644 = vsel %vm213, %v86, 0
  %v647 = vsel %vm213, %v87, 0
  %v650 = vsel %vm213, %v88, 0
  %v653 = vsel %vm213, %v89, 0
  %v656 = vsel %vm213, %v90, 0
  %v659 = vsel %vm213, %v91, 0
  %v662 = vsel %vm213, %v92, 0
  %664 = vmatprep.subr.mxu0 0.0
  %665 = vmatpush1.xpose.msra.mxu0 0.0
  %666 = vmatprep.subr.mxu0 0.0
  %667 = vmatpush1.xpose.msra.mxu0 0.0
  %668 = vmatprep.subr.mxu0 0.0
  %669 = vmatpush1.xpose.msra.mxu0 0.0
  %670 = vmatprep.subr.mxu0 0.0
  %671 = vmatpush1.xpose.msra.mxu0 0.0
  %672 = vmatprep.subr.mxu0 0.0
  %673 = vmatpush1.xpose.msra.mxu0 0.0
  %674 = vmatprep.subr.mxu0 0.0
  %675 = vmatpush1.xpose.msra.mxu0 0.0
  %676 = vmatprep.subr.mxu0 0.0
  %677 = vmatpush1.xpose.msra.mxu0 0.0
  %678 = vmatprep.subr.mxu0 0.0
  %679 = vmatpush1.xpose.msra.mxu0 0.0
  %680 = vmatprep.subr.mxu0 0.0
  %681 = vmatpush1.xpose.msra.mxu0 %v662
  %682 = vmatprep.subr.mxu0 0.0
  %683 = vmatpush1.xpose.msra.mxu0 %v659
  %684 = vmatprep.subr.mxu0 0.0
  %685 = vmatpush1.xpose.msra.mxu0 %v656
  %686 = vmatprep.subr.mxu0 0.0
  %687 = vmatpush1.xpose.msra.mxu0 %v653
  %688 = vmatprep.subr.mxu0 0.0
  %689 = vmatpush1.xpose.msra.mxu0 %v650
  %690 = vmatprep.subr.mxu0 0.0
  %691 = vmatpush1.xpose.msra.mxu0 %v647
  %692 = vmatprep.subr.mxu0 0.0
  %693 = vmatpush1.xpose.msra.mxu0 %v644
  %694 = vmatprep.subr.mxu0 0.0
  %695 = vmatpush1.xpose.msra.mxu0 %v641
  %696 = vmatprep.subr.mxu0 0.0
  %697 = vmatpush2.xpose.msra.mxu0 0.0
  %698 = vmatprep.subr.mxu0 0.0
  %699 = vmatpush2.xpose.msra.mxu0 0.0
  %700 = vmatprep.subr.mxu0 0.0
  %701 = vmatpush2.xpose.msra.mxu0 0.0
  %702 = vmatprep.subr.mxu0 0.0
  %703 = vmatpush2.xpose.msra.mxu0 0.0
  %704 = vmatprep.subr.mxu0 0.0
  %705 = vmatpush2.xpose.msra.mxu0 0.0
  %706 = vmatprep.subr.mxu0 0.0
  %707 = vmatpush2.xpose.msra.mxu0 0.0
  %708 = vmatprep.subr.mxu0 0.0
  %709 = vmatpush2.xpose.msra.mxu0 0.0
  %710 = vmatprep.subr.mxu0 0.0
  %711 = vmatpush2.xpose.msra.mxu0 0.0
  %712 = vmatprep.subr.mxu0 0.0
  %713 = vmatpush2.xpose.msra.mxu0 0.0
  %714 = vmatprep.subr.mxu0 0.0
  %715 = vmatpush2.xpose.msra.mxu0 0.0
  %716 = vmatprep.subr.mxu0 0.0
  %717 = vmatpush2.xpose.msra.mxu0 0.0
  %718 = vmatprep.subr.mxu0 0.0
  %719 = vmatpush2.xpose.msra.mxu0 0.0
  %720 = vmatprep.subr.mxu0 0.0
  %721 = vmatpush2.xpose.msra.mxu0 0.0
  %722 = vmatprep.subr.mxu0 0.0
  %723 = vmatpush2.xpose.msra.mxu0 0.0
  %724 = vmatprep.subr.mxu0 0.0
  %725 = vmatpush2.xpose.msra.mxu0 0.0
  %726 = vmatprep.subr.mxu0 0.0
  %727 = vmatpush2.xpose.msra.mxu0 0.0
  %728 = vmatprep.mubr.f32.mxu0 0.0
  %729 = vmatmul.mubr.f32.gmra.mxu0 %v635
  %v730 = vpop.f32.mrf.mxu0
  %v731 = vadd.f32 %v206, %v730
  %v732 = vpop.f32.mrf.mxu0
  %733 = vmatprep.mubr.f32.mxu0 0.0
  %734 = vmatmul.mubr.f32.gmra.mxu0 %v638
  %v735 = vpop.f32.mrf.mxu0
  %v736 = vadd.f32 %v211, %v735
  %v737 = vpop.f32.mrf.mxu0
  %738 = vdwg.mxu0
  %v740 = vsel %vm213, %v195, 0
  %v743 = vsel %vm213, %v196, 0
  %v746 = vsel %vm213, %v93, 0
  %v749 = vsel %vm213, %v94, 0
  %v752 = vsel %vm213, %v95, 0
  %v755 = vsel %vm213, %v96, 0
  %v758 = vsel %vm213, %v97, 0
  %v761 = vsel %vm213, %v98, 0
  %v764 = vsel %vm213, %v99, 0
  %v767 = vsel %vm213, %v100, 0
  %769 = vmatprep.subr.mxu0 0.0
  %770 = vmatpush1.xpose.msra.mxu0 0.0
  %771 = vmatprep.subr.mxu0 0.0
  %772 = vmatpush1.xpose.msra.mxu0 0.0
  %773 = vmatprep.subr.mxu0 0.0
  %774 = vmatpush1.xpose.msra.mxu0 0.0
  %775 = vmatprep.subr.mxu0 0.0
  %776 = vmatpush1.xpose.msra.mxu0 0.0
  %777 = vmatprep.subr.mxu0 0.0
  %778 = vmatpush1.xpose.msra.mxu0 0.0
  %779 = vmatprep.subr.mxu0 0.0
  %780 = vmatpush1.xpose.msra.mxu0 0.0
  %781 = vmatprep.subr.mxu0 0.0
  %782 = vmatpush1.xpose.msra.mxu0 0.0
  %783 = vmatprep.subr.mxu0 0.0
  %784 = vmatpush1.xpose.msra.mxu0 0.0
  %785 = vmatprep.subr.mxu0 0.0
  %786 = vmatpush1.xpose.msra.mxu0 %v767
  %787 = vmatprep.subr.mxu0 0.0
  %788 = vmatpush1.xpose.msra.mxu0 %v764
  %789 = vmatprep.subr.mxu0 0.0
  %790 = vmatpush1.xpose.msra.mxu0 %v761
  %791 = vmatprep.subr.mxu0 0.0
  %792 = vmatpush1.xpose.msra.mxu0 %v758
  %793 = vmatprep.subr.mxu0 0.0
  %794 = vmatpush1.xpose.msra.mxu0 %v755
  %795 = vmatprep.subr.mxu0 0.0
  %796 = vmatpush1.xpose.msra.mxu0 %v752
  %797 = vmatprep.subr.mxu0 0.0
  %798 = vmatpush1.xpose.msra.mxu0 %v749
  %799 = vmatprep.subr.mxu0 0.0
  %800 = vmatpush1.xpose.msra.mxu0 %v746
  %801 = vmatprep.subr.mxu0 0.0
  %802 = vmatpush2.xpose.msra.mxu0 0.0
  %803 = vmatprep.subr.mxu0 0.0
  %804 = vmatpush2.xpose.msra.mxu0 0.0
  %805 = vmatprep.subr.mxu0 0.0
  %806 = vmatpush2.xpose.msra.mxu0 0.0
  %807 = vmatprep.subr.mxu0 0.0
  %808 = vmatpush2.xpose.msra.mxu0 0.0
  %809 = vmatprep.subr.mxu0 0.0
  %810 = vmatpush2.xpose.msra.mxu0 0.0
  %811 = vmatprep.subr.mxu0 0.0
  %812 = vmatpush2.xpose.msra.mxu0 0.0
  %813 = vmatprep.subr.mxu0 0.0
  %814 = vmatpush2.xpose.msra.mxu0 0.0
  %815 = vmatprep.subr.mxu0 0.0
  %816 = vmatpush2.xpose.msra.mxu0 0.0
  %817 = vmatprep.subr.mxu0 0.0
  %818 = vmatpush2.xpose.msra.mxu0 0.0
  %819 = vmatprep.subr.mxu0 0.0
  %820 = vmatpush2.xpose.msra.mxu0 0.0
  %821 = vmatprep.subr.mxu0 0.0
  %822 = vmatpush2.xpose.msra.mxu0 0.0
  %823 = vmatprep.subr.mxu0 0.0
  %824 = vmatpush2.xpose.msra.mxu0 0.0
  %825 = vmatprep.subr.mxu0 0.0
  %826 = vmatpush2.xpose.msra.mxu0 0.0
  %827 = vmatprep.subr.mxu0 0.0
  %828 = vmatpush2.xpose.msra.mxu0 0.0
  %829 = vmatprep.subr.mxu0 0.0
  %830 = vmatpush2.xpose.msra.mxu0 0.0
  %831 = vmatprep.subr.mxu0 0.0
  %832 = vmatpush2.xpose.msra.mxu0 0.0
  %833 = vmatprep.mubr.f32.mxu0 0.0
  %834 = vmatmul.mubr.f32.gmra.mxu0 %v740
  %v835 = vpop.f32.mrf.mxu0
  %v836 = vadd.f32 %v206, %v835
  %v837 = vpop.f32.mrf.mxu0
  %838 = vmatprep.mubr.f32.mxu0 0.0
  %839 = vmatmul.mubr.f32.gmra.mxu0 %v743
  %v840 = vpop.f32.mrf.mxu0
  %v841 = vadd.f32 %v211, %v840
  %v842 = vpop.f32.mrf.mxu0
  %843 = vdwg.mxu0
  %v845 = vsel %vm213, %v197, 0
  %v848 = vsel %vm213, %v198, 0
  %v851 = vsel %vm213, %v101, 0
  %v854 = vsel %vm213, %v102, 0
  %v857 = vsel %vm213, %v103, 0
  %v860 = vsel %vm213, %v104, 0
  %v863 = vsel %vm213, %v105, 0
  %v866 = vsel %vm213, %v106, 0
  %v869 = vsel %vm213, %v107, 0
  %v872 = vsel %vm213, %v108, 0
  %874 = vmatprep.subr.mxu0 0.0
  %875 = vmatpush1.xpose.msra.mxu0 0.0
  %876 = vmatprep.subr.mxu0 0.0
  %877 = vmatpush1.xpose.msra.mxu0 0.0
  %878 = vmatprep.subr.mxu0 0.0
  %879 = vmatpush1.xpose.msra.mxu0 0.0
  %880 = vmatprep.subr.mxu0 0.0
  %881 = vmatpush1.xpose.msra.mxu0 0.0
  %882 = vmatprep.subr.mxu0 0.0
  %883 = vmatpush1.xpose.msra.mxu0 0.0
  %884 = vmatprep.subr.mxu0 0.0
  %885 = vmatpush1.xpose.msra.mxu0 0.0
  %886 = vmatprep.subr.mxu0 0.0
  %887 = vmatpush1.xpose.msra.mxu0 0.0
  %888 = vmatprep.subr.mxu0 0.0
  %889 = vmatpush1.xpose.msra.mxu0 0.0
  %890 = vmatprep.subr.mxu0 0.0
  %891 = vmatpush1.xpose.msra.mxu0 %v872
  %892 = vmatprep.subr.mxu0 0.0
  %893 = vmatpush1.xpose.msra.mxu0 %v869
  %894 = vmatprep.subr.mxu0 0.0
  %895 = vmatpush1.xpose.msra.mxu0 %v866
  %896 = vmatprep.subr.mxu0 0.0
  %897 = vmatpush1.xpose.msra.mxu0 %v863
  %898 = vmatprep.subr.mxu0 0.0
  %899 = vmatpush1.xpose.msra.mxu0 %v860
  %900 = vmatprep.subr.mxu0 0.0
  %901 = vmatpush1.xpose.msra.mxu0 %v857
  %902 = vmatprep.subr.mxu0 0.0
  %903 = vmatpush1.xpose.msra.mxu0 %v854
  %904 = vmatprep.subr.mxu0 0.0
  %905 = vmatpush1.xpose.msra.mxu0 %v851
  %906 = vmatprep.subr.mxu0 0.0
  %907 = vmatpush2.xpose.msra.mxu0 0.0
  %908 = vmatprep.subr.mxu0 0.0
  %909 = vmatpush2.xpose.msra.mxu0 0.0
  %910 = vmatprep.subr.mxu0 0.0
  %911 = vmatpush2.xpose.msra.mxu0 0.0
  %912 = vmatprep.subr.mxu0 0.0
  %913 = vmatpush2.xpose.msra.mxu0 0.0
  %914 = vmatprep.subr.mxu0 0.0
  %915 = vmatpush2.xpose.msra.mxu0 0.0
  %916 = vmatprep.subr.mxu0 0.0
  %917 = vmatpush2.xpose.msra.mxu0 0.0
  %918 = vmatprep.subr.mxu0 0.0
  %919 = vmatpush2.xpose.msra.mxu0 0.0
  %920 = vmatprep.subr.mxu0 0.0
  %921 = vmatpush2.xpose.msra.mxu0 0.0
  %922 = vmatprep.subr.mxu0 0.0
  %923 = vmatpush2.xpose.msra.mxu0 0.0
  %924 = vmatprep.subr.mxu0 0.0
  %925 = vmatpush2.xpose.msra.mxu0 0.0
  %926 = vmatprep.subr.mxu0 0.0
  %927 = vmatpush2.xpose.msra.mxu0 0.0
  %928 = vmatprep.subr.mxu0 0.0
  %929 = vmatpush2.xpose.msra.mxu0 0.0
  %930 = vmatprep.subr.mxu0 0.0
  %931 = vmatpush2.xpose.msra.mxu0 0.0
  %932 = vmatprep.subr.mxu0 0.0
  %933 = vmatpush2.xpose.msra.mxu0 0.0
  %934 = vmatprep.subr.mxu0 0.0
  %935 = vmatpush2.xpose.msra.mxu0 0.0
  %936 = vmatprep.subr.mxu0 0.0
  %937 = vmatpush2.xpose.msra.mxu0 0.0
  %938 = vmatprep.mubr.f32.mxu0 0.0
  %939 = vmatmul.mubr.f32.gmra.mxu0 %v845
  %v940 = vpop.f32.mrf.mxu0
  %v941 = vadd.f32 %v206, %v940
  %v942 = vpop.f32.mrf.mxu0
  %943 = vmatprep.mubr.f32.mxu0 0.0
  %944 = vmatmul.mubr.f32.gmra.mxu0 %v848
  %v945 = vpop.f32.mrf.mxu0
  %v946 = vadd.f32 %v211, %v945
  %v947 = vpop.f32.mrf.mxu0
  %948 = vdwg.mxu0
  %v950 = vsel %vm213, %v199, 0
  %v953 = vsel %vm213, %v200, 0
  %v956 = vsel %vm213, %v109, 0
  %v959 = vsel %vm213, %v110, 0
  %v962 = vsel %vm213, %v111, 0
  %v965 = vsel %vm213, %v112, 0
  %v968 = vsel %vm213, %v113, 0
  %v971 = vsel %vm213, %v114, 0
  %v974 = vsel %vm213, %v115, 0
  %v977 = vsel %vm213, %v116, 0
  %979 = vmatprep.subr.mxu0 0.0
  %980 = vmatpush1.xpose.msra.mxu0 0.0
  %981 = vmatprep.subr.mxu0 0.0
  %982 = vmatpush1.xpose.msra.mxu0 0.0
  %983 = vmatprep.subr.mxu0 0.0
  %984 = vmatpush1.xpose.msra.mxu0 0.0
  %985 = vmatprep.subr.mxu0 0.0
  %986 = vmatpush1.xpose.msra.mxu0 0.0
  %987 = vmatprep.subr.mxu0 0.0
  %988 = vmatpush1.xpose.msra.mxu0 0.0
  %989 = vmatprep.subr.mxu0 0.0
  %990 = vmatpush1.xpose.msra.mxu0 0.0
  %991 = vmatprep.subr.mxu0 0.0
  %992 = vmatpush1.xpose.msra.mxu0 0.0
  %993 = vmatprep.subr.mxu0 0.0
  %994 = vmatpush1.xpose.msra.mxu0 0.0
  %995 = vmatprep.subr.mxu0 0.0
  %996 = vmatpush1.xpose.msra.mxu0 %v977
  %997 = vmatprep.subr.mxu0 0.0
  %998 = vmatpush1.xpose.msra.mxu0 %v974
  %999 = vmatprep.subr.mxu0 0.0
  %1000 = vmatpush1.xpose.msra.mxu0 %v971
  %1001 = vmatprep.subr.mxu0 0.0
  %1002 = vmatpush1.xpose.msra.mxu0 %v968
  %1003 = vmatprep.subr.mxu0 0.0
  %1004 = vmatpush1.xpose.msra.mxu0 %v965
  %1005 = vmatprep.subr.mxu0 0.0
  %1006 = vmatpush1.xpose.msra.mxu0 %v962
  %1007 = vmatprep.subr.mxu0 0.0
  %1008 = vmatpush1.xpose.msra.mxu0 %v959
  %1009 = vmatprep.subr.mxu0 0.0
  %1010 = vmatpush1.xpose.msra.mxu0 %v956
  %1011 = vmatprep.subr.mxu0 0.0
  %1012 = vmatpush2.xpose.msra.mxu0 0.0
  %1013 = vmatprep.subr.mxu0 0.0
  %1014 = vmatpush2.xpose.msra.mxu0 0.0
  %1015 = vmatprep.subr.mxu0 0.0
  %1016 = vmatpush2.xpose.msra.mxu0 0.0
  %1017 = vmatprep.subr.mxu0 0.0
  %1018 = vmatpush2.xpose.msra.mxu0 0.0
  %1019 = vmatprep.subr.mxu0 0.0
  %1020 = vmatpush2.xpose.msra.mxu0 0.0
  %1021 = vmatprep.subr.mxu0 0.0
  %1022 = vmatpush2.xpose.msra.mxu0 0.0
  %1023 = vmatprep.subr.mxu0 0.0
  %1024 = vmatpush2.xpose.msra.mxu0 0.0
  %1025 = vmatprep.subr.mxu0 0.0
  %1026 = vmatpush2.xpose.msra.mxu0 0.0
  %1027 = vmatprep.subr.mxu0 0.0
  %1028 = vmatpush2.xpose.msra.mxu0 0.0
  %1029 = vmatprep.subr.mxu0 0.0
  %1030 = vmatpush2.xpose.msra.mxu0 0.0
  %1031 = vmatprep.subr.mxu0 0.0
  %1032 = vmatpush2.xpose.msra.mxu0 0.0
  %1033 = vmatprep.subr.mxu0 0.0
  %1034 = vmatpush2.xpose.msra.mxu0 0.0
  %1035 = vmatprep.subr.mxu0 0.0
  %1036 = vmatpush2.xpose.msra.mxu0 0.0
  %1037 = vmatprep.subr.mxu0 0.0
  %1038 = vmatpush2.xpose.msra.mxu0 0.0
  %1039 = vmatprep.subr.mxu0 0.0
  %1040 = vmatpush2.xpose.msra.mxu0 0.0
  %1041 = vmatprep.subr.mxu0 0.0
  %1042 = vmatpush2.xpose.msra.mxu0 0.0
  %1043 = vmatprep.mubr.f32.mxu0 0.0
  %1044 = vmatmul.mubr.f32.gmra.mxu0 %v950
  %v1045 = vpop.f32.mrf.mxu0
  %v1046 = vadd.f32 %v206, %v1045
  %v1047 = vpop.f32.mrf.mxu0
  %1048 = vmatprep.mubr.f32.mxu0 0.0
  %1049 = vmatmul.mubr.f32.gmra.mxu0 %v953
  %v1050 = vpop.f32.mrf.mxu0
  %v1051 = vadd.f32 %v211, %v1050
  %v1052 = vpop.f32.mrf.mxu0
  %1053 = vdwg.mxu0
  %v1054 = vld [vmem:[%s4] sm:$0xff]
  %v1055 = vld [vmem:[%s4 + $0x8] sm:$0xf]
  %vm1056 = vcmask 97280
  %v1058 = vsel %vm1056, %v1054, 0
  %v1061 = vsel %vm1056, %v1055, 0
  %vm1063 = vcmask 1043456
  %v1065 = vsel %vm1063, %v316, 0
  %1067 = vmatprep.subr.mxu0 0.0
  %1068 = vmatpush1.msra.mxu0 0.0
  %1069 = vmatprep.subr.mxu0 0.0
  %1070 = vmatpush1.msra.mxu0 0.0
  %1071 = vmatprep.subr.mxu0 0.0
  %1072 = vmatpush1.msra.mxu0 0.0
  %1073 = vmatprep.subr.mxu0 0.0
  %1074 = vmatpush1.msra.mxu0 0.0
  %1075 = vmatprep.subr.mxu0 0.0
  %1076 = vmatpush1.msra.mxu0 0.0
  %1077 = vmatprep.subr.mxu0 0.0
  %1078 = vmatpush1.msra.mxu0 0.0
  %1079 = vmatprep.subr.mxu0 0.0
  %1080 = vmatpush1.msra.mxu0 0.0
  %1081 = vmatprep.subr.mxu0 0.0
  %1082 = vmatpush1.msra.mxu0 0.0
  %1083 = vmatprep.subr.mxu0 0.0
  %1084 = vmatpush1.msra.mxu0 0.0
  %1085 = vmatprep.subr.mxu0 0.0
  %1086 = vmatpush1.msra.mxu0 0.0
  %1087 = vmatprep.subr.mxu0 0.0
  %1088 = vmatpush1.msra.mxu0 0.0
  %1089 = vmatprep.subr.mxu0 0.0
  %1090 = vmatpush1.msra.mxu0 0.0
  %1091 = vmatprep.subr.mxu0 0.0
  %1092 = vmatpush1.msra.mxu0 0.0
  %1093 = vmatprep.subr.mxu0 0.0
  %1094 = vmatpush1.msra.mxu0 0.0
  %1095 = vmatprep.subr.mxu0 0.0
  %1096 = vmatpush1.msra.mxu0 %v1065
  %1097 = vmatprep.subr.mxu0 0.0
  %1098 = vmatpush1.msra.mxu0 %v311
  %1099 = vmatprep.subr.mxu0 0.0
  %1100 = vmatpush2.msra.mxu0 0.0
  %1101 = vmatprep.subr.mxu0 0.0
  %1102 = vmatpush2.msra.mxu0 0.0
  %1103 = vmatprep.subr.mxu0 0.0
  %1104 = vmatpush2.msra.mxu0 0.0
  %1105 = vmatprep.subr.mxu0 0.0
  %1106 = vmatpush2.msra.mxu0 0.0
  %1107 = vmatprep.subr.mxu0 0.0
  %1108 = vmatpush2.msra.mxu0 0.0
  %1109 = vmatprep.subr.mxu0 0.0
  %1110 = vmatpush2.msra.mxu0 0.0
  %1111 = vmatprep.subr.mxu0 0.0
  %1112 = vmatpush2.msra.mxu0 0.0
  %1113 = vmatprep.subr.mxu0 0.0
  %1114 = vmatpush2.msra.mxu0 0.0
  %1115 = vmatprep.subr.mxu0 0.0
  %1116 = vmatpush2.msra.mxu0 0.0
  %1117 = vmatprep.subr.mxu0 0.0
  %1118 = vmatpush2.msra.mxu0 0.0
  %1119 = vmatprep.subr.mxu0 0.0
  %1120 = vmatpush2.msra.mxu0 0.0
  %1121 = vmatprep.subr.mxu0 0.0
  %1122 = vmatpush2.msra.mxu0 0.0
  %1123 = vmatprep.subr.mxu0 0.0
  %1124 = vmatpush2.msra.mxu0 0.0
  %1125 = vmatprep.subr.mxu0 0.0
  %1126 = vmatpush2.msra.mxu0 0.0
  %1127 = vmatprep.subr.mxu0 0.0
  %1128 = vmatpush2.msra.mxu0 0.0
  %1129 = vmatprep.subr.mxu0 0.0
  %1130 = vmatpush2.msra.mxu0 0.0
  %1131 = vmatprep.mubr.f32.mxu0 0.0
  %1132 = vmatmul.mubr.f32.gmra.mxu0 %v1058
  %v1133 = vpop.f32.mrf.mxu0
  %v1134 = vadd.f32 0.0, %v1133
  %v1135 = vpop.f32.mrf.mxu0
  %1136 = vmatprep.mubr.f32.mxu0 0.0
  %1137 = vmatmul.mubr.f32.gmra.mxu0 %v1061
  %v1138 = vpop.f32.mrf.mxu0
  %v1139 = vadd.f32 0.0, %v1138
  %v1140 = vpop.f32.mrf.mxu0
  %1141 = vdwg.mxu0
  %v1143 = vsel %vm1063, %v421, 0
  %1145 = vmatprep.subr.mxu0 0.0
  %1146 = vmatpush1.msra.mxu0 0.0
  %1147 = vmatprep.subr.mxu0 0.0
  %1148 = vmatpush1.msra.mxu0 0.0
  %1149 = vmatprep.subr.mxu0 0.0
  %1150 = vmatpush1.msra.mxu0 0.0
  %1151 = vmatprep.subr.mxu0 0.0
  %1152 = vmatpush1.msra.mxu0 0.0
  %1153 = vmatprep.subr.mxu0 0.0
  %1154 = vmatpush1.msra.mxu0 0.0
  %1155 = vmatprep.subr.mxu0 0.0
  %1156 = vmatpush1.msra.mxu0 0.0
  %1157 = vmatprep.subr.mxu0 0.0
  %1158 = vmatpush1.msra.mxu0 0.0
  %1159 = vmatprep.subr.mxu0 0.0
  %1160 = vmatpush1.msra.mxu0 0.0
  %1161 = vmatprep.subr.mxu0 0.0
  %1162 = vmatpush1.msra.mxu0 0.0
  %1163 = vmatprep.subr.mxu0 0.0
  %1164 = vmatpush1.msra.mxu0 0.0
  %1165 = vmatprep.subr.mxu0 0.0
  %1166 = vmatpush1.msra.mxu0 0.0
  %1167 = vmatprep.subr.mxu0 0.0
  %1168 = vmatpush1.msra.mxu0 0.0
  %1169 = vmatprep.subr.mxu0 0.0
  %1170 = vmatpush1.msra.mxu0 0.0
  %1171 = vmatprep.subr.mxu0 0.0
  %1172 = vmatpush1.msra.mxu0 0.0
  %1173 = vmatprep.subr.mxu0 0.0
  %1174 = vmatpush1.msra.mxu0 %v1143
  %1175 = vmatprep.subr.mxu0 0.0
  %1176 = vmatpush1.msra.mxu0 %v416
  %1177 = vmatprep.subr.mxu0 0.0
  %1178 = vmatpush2.msra.mxu0 0.0
  %1179 = vmatprep.subr.mxu0 0.0
  %1180 = vmatpush2.msra.mxu0 0.0
  %1181 = vmatprep.subr.mxu0 0.0
  %1182 = vmatpush2.msra.mxu0 0.0
  %1183 = vmatprep.subr.mxu0 0.0
  %1184 = vmatpush2.msra.mxu0 0.0
  %1185 = vmatprep.subr.mxu0 0.0
  %1186 = vmatpush2.msra.mxu0 0.0
  %1187 = vmatprep.subr.mxu0 0.0
  %1188 = vmatpush2.msra.mxu0 0.0
  %1189 = vmatprep.subr.mxu0 0.0
  %1190 = vmatpush2.msra.mxu0 0.0
  %1191 = vmatprep.subr.mxu0 0.0
  %1192 = vmatpush2.msra.mxu0 0.0
  %1193 = vmatprep.subr.mxu0 0.0
  %1194 = vmatpush2.msra.mxu0 0.0
  %1195 = vmatprep.subr.mxu0 0.0
  %1196 = vmatpush2.msra.mxu0 0.0
  %1197 = vmatprep.subr.mxu0 0.0
  %1198 = vmatpush2.msra.mxu0 0.0
  %1199 = vmatprep.subr.mxu0 0.0
  %1200 = vmatpush2.msra.mxu0 0.0
  %1201 = vmatprep.subr.mxu0 0.0
  %1202 = vmatpush2.msra.mxu0 0.0
  %1203 = vmatprep.subr.mxu0 0.0
  %1204 = vmatpush2.msra.mxu0 0.0
  %1205 = vmatprep.subr.mxu0 0.0
  %1206 = vmatpush2.msra.mxu0 0.0
  %1207 = vmatprep.subr.mxu0 0.0
  %1208 = vmatpush2.msra.mxu0 0.0
  %1209 = vmatprep.mubr.f32.mxu0 0.0
  %1210 = vmatmul.mubr.f32.gmra.mxu0 %v1058
  %v1211 = vpop.f32.mrf.mxu0
  %v1212 = vadd.f32 0.0, %v1211
  %v1213 = vpop.f32.mrf.mxu0
  %1214 = vmatprep.mubr.f32.mxu0 0.0
  %1215 = vmatmul.mubr.f32.gmra.mxu0 %v1061
  %v1216 = vpop.f32.mrf.mxu0
  %v1217 = vadd.f32 0.0, %v1216
  %v1218 = vpop.f32.mrf.mxu0
  %1219 = vdwg.mxu0
  %v1221 = vsel %vm1063, %v526, 0
  %1223 = vmatprep.subr.mxu0 0.0
  %1224 = vmatpush1.msra.mxu0 0.0
  %1225 = vmatprep.subr.mxu0 0.0
  %1226 = vmatpush1.msra.mxu0 0.0
  %1227 = vmatprep.subr.mxu0 0.0
  %1228 = vmatpush1.msra.mxu0 0.0
  %1229 = vmatprep.subr.mxu0 0.0
  %1230 = vmatpush1.msra.mxu0 0.0
  %1231 = vmatprep.subr.mxu0 0.0
  %1232 = vmatpush1.msra.mxu0 0.0
  %1233 = vmatprep.subr.mxu0 0.0
  %1234 = vmatpush1.msra.mxu0 0.0
  %1235 = vmatprep.subr.mxu0 0.0
  %1236 = vmatpush1.msra.mxu0 0.0
  %1237 = vmatprep.subr.mxu0 0.0
  %1238 = vmatpush1.msra.mxu0 0.0
  %1239 = vmatprep.subr.mxu0 0.0
  %1240 = vmatpush1.msra.mxu0 0.0
  %1241 = vmatprep.subr.mxu0 0.0
  %1242 = vmatpush1.msra.mxu0 0.0
  %1243 = vmatprep.subr.mxu0 0.0
  %1244 = vmatpush1.msra.mxu0 0.0
  %1245 = vmatprep.subr.mxu0 0.0
  %1246 = vmatpush1.msra.mxu0 0.0
  %1247 = vmatprep.subr.mxu0 0.0
  %1248 = vmatpush1.msra.mxu0 0.0
  %1249 = vmatprep.subr.mxu0 0.0
  %1250 = vmatpush1.msra.mxu0 0.0
  %1251 = vmatprep.subr.mxu0 0.0
  %1252 = vmatpush1.msra.mxu0 %v1221
  %1253 = vmatprep.subr.mxu0 0.0
  %1254 = vmatpush1.msra.mxu0 %v521
  %1255 = vmatprep.subr.mxu0 0.0
  %1256 = vmatpush2.msra.mxu0 0.0
  %1257 = vmatprep.subr.mxu0 0.0
  %1258 = vmatpush2.msra.mxu0 0.0
  %1259 = vmatprep.subr.mxu0 0.0
  %1260 = vmatpush2.msra.mxu0 0.0
  %1261 = vmatprep.subr.mxu0 0.0
  %1262 = vmatpush2.msra.mxu0 0.0
  %1263 = vmatprep.subr.mxu0 0.0
  %1264 = vmatpush2.msra.mxu0 0.0
  %1265 = vmatprep.subr.mxu0 0.0
  %1266 = vmatpush2.msra.mxu0 0.0
  %1267 = vmatprep.subr.mxu0 0.0
  %1268 = vmatpush2.msra.mxu0 0.0
  %1269 = vmatprep.subr.mxu0 0.0
  %1270 = vmatpush2.msra.mxu0 0.0
  %1271 = vmatprep.subr.mxu0 0.0
  %1272 = vmatpush2.msra.mxu0 0.0
  %1273 = vmatprep.subr.mxu0 0.0
  %1274 = vmatpush2.msra.mxu0 0.0
  %1275 = vmatprep.subr.mxu0 0.0
  %1276 = vmatpush2.msra.mxu0 0.0
  %1277 = vmatprep.subr.mxu0 0.0
  %1278 = vmatpush2.msra.mxu0 0.0
  %1279 = vmatprep.subr.mxu0 0.0
  %1280 = vmatpush2.msra.mxu0 0.0
  %1281 = vmatprep.subr.mxu0 0.0
  %1282 = vmatpush2.msra.mxu0 0.0
  %1283 = vmatprep.subr.mxu0 0.0
  %1284 = vmatpush2.msra.mxu0 0.0
  %1285 = vmatprep.subr.mxu0 0.0
  %1286 = vmatpush2.msra.mxu0 0.0
  %1287 = vmatprep.mubr.f32.mxu0 0.0
  %1288 = vmatmul.mubr.f32.gmra.mxu0 %v1058
  %v1289 = vpop.f32.mrf.mxu0
  %v1290 = vadd.f32 0.0, %v1289
  %v1291 = vpop.f32.mrf.mxu0
  %1292 = vmatprep.mubr.f32.mxu0 0.0
  %1293 = vmatmul.mubr.f32.gmra.mxu0 %v1061
  %v1294 = vpop.f32.mrf.mxu0
  %v1295 = vadd.f32 0.0, %v1294
  %v1296 = vpop.f32.mrf.mxu0
  %1297 = vdwg.mxu0
  %v1299 = vsel %vm1063, %v631, 0
  %1301 = vmatprep.subr.mxu0 0.0
  %1302 = vmatpush1.msra.mxu0 0.0
  %1303 = vmatprep.subr.mxu0 0.0
  %1304 = vmatpush1.msra.mxu0 0.0
  %1305 = vmatprep.subr.mxu0 0.0
  %1306 = vmatpush1.msra.mxu0 0.0
  %1307 = vmatprep.subr.mxu0 0.0
  %1308 = vmatpush1.msra.mxu0 0.0
  %1309 = vmatprep.subr.mxu0 0.0
  %1310 = vmatpush1.msra.mxu0 0.0
  %1311 = vmatprep.subr.mxu0 0.0
  %1312 = vmatpush1.msra.mxu0 0.0
  %1313 = vmatprep.subr.mxu0 0.0
  %1314 = vmatpush1.msra.mxu0 0.0
  %1315 = vmatprep.subr.mxu0 0.0
  %1316 = vmatpush1.msra.mxu0 0.0
  %1317 = vmatprep.subr.mxu0 0.0
  %1318 = vmatpush1.msra.mxu0 0.0
  %1319 = vmatprep.subr.mxu0 0.0
  %1320 = vmatpush1.msra.mxu0 0.0
  %1321 = vmatprep.subr.mxu0 0.0
  %1322 = vmatpush1.msra.mxu0 0.0
  %1323 = vmatprep.subr.mxu0 0.0
  %1324 = vmatpush1.msra.mxu0 0.0
  %1325 = vmatprep.subr.mxu0 0.0
  %1326 = vmatpush1.msra.mxu0 0.0
  %1327 = vmatprep.subr.mxu0 0.0
  %1328 = vmatpush1.msra.mxu0 0.0
  %1329 = vmatprep.subr.mxu0 0.0
  %1330 = vmatpush1.msra.mxu0 %v1299
  %1331 = vmatprep.subr.mxu0 0.0
  %1332 = vmatpush1.msra.mxu0 %v626
  %1333 = vmatprep.subr.mxu0 0.0
  %1334 = vmatpush2.msra.mxu0 0.0
  %1335 = vmatprep.subr.mxu0 0.0
  %1336 = vmatpush2.msra.mxu0 0.0
  %1337 = vmatprep.subr.mxu0 0.0
  %1338 = vmatpush2.msra.mxu0 0.0
  %1339 = vmatprep.subr.mxu0 0.0
  %1340 = vmatpush2.msra.mxu0 0.0
  %1341 = vmatprep.subr.mxu0 0.0
  %1342 = vmatpush2.msra.mxu0 0.0
  %1343 = vmatprep.subr.mxu0 0.0
  %1344 = vmatpush2.msra.mxu0 0.0
  %1345 = vmatprep.subr.mxu0 0.0
  %1346 = vmatpush2.msra.mxu0 0.0
  %1347 = vmatprep.subr.mxu0 0.0
  %1348 = vmatpush2.msra.mxu0 0.0
  %1349 = vmatprep.subr.mxu0 0.0
  %1350 = vmatpush2.msra.mxu0 0.0
  %1351 = vmatprep.subr.mxu0 0.0
  %1352 = vmatpush2.msra.mxu0 0.0
  %1353 = vmatprep.subr.mxu0 0.0
  %1354 = vmatpush2.msra.mxu0 0.0
  %1355 = vmatprep.subr.mxu0 0.0
  %1356 = vmatpush2.msra.mxu0 0.0
  %1357 = vmatprep.subr.mxu0 0.0
  %1358 = vmatpush2.msra.mxu0 0.0
  %1359 = vmatprep.subr.mxu0 0.0
  %1360 = vmatpush2.msra.mxu0 0.0
  %1361 = vmatprep.subr.mxu0 0.0
  %1362 = vmatpush2.msra.mxu0 0.0
  %1363 = vmatprep.subr.mxu0 0.0
  %1364 = vmatpush2.msra.mxu0 0.0
  %1365 = vmatprep.mubr.f32.mxu0 0.0
  %1366 = vmatmul.mubr.f32.gmra.mxu0 %v1058
  %v1367 = vpop.f32.mrf.mxu0
  %v1368 = vadd.f32 0.0, %v1367
  %v1369 = vpop.f32.mrf.mxu0
  %1370 = vmatprep.mubr.f32.mxu0 0.0
  %1371 = vmatmul.mubr.f32.gmra.mxu0 %v1061
  %v1372 = vpop.f32.mrf.mxu0
  %v1373 = vadd.f32 0.0, %v1372
  %v1374 = vpop.f32.mrf.mxu0
  %1375 = vdwg.mxu0
  %v1377 = vsel %vm1063, %v736, 0
  %1379 = vmatprep.subr.mxu0 0.0
  %1380 = vmatpush1.msra.mxu0 0.0
  %1381 = vmatprep.subr.mxu0 0.0
  %1382 = vmatpush1.msra.mxu0 0.0
  %1383 = vmatprep.subr.mxu0 0.0
  %1384 = vmatpush1.msra.mxu0 0.0
  %1385 = vmatprep.subr.mxu0 0.0
  %1386 = vmatpush1.msra.mxu0 0.0
  %1387 = vmatprep.subr.mxu0 0.0
  %1388 = vmatpush1.msra.mxu0 0.0
  %1389 = vmatprep.subr.mxu0 0.0
  %1390 = vmatpush1.msra.mxu0 0.0
  %1391 = vmatprep.subr.mxu0 0.0
  %1392 = vmatpush1.msra.mxu0 0.0
  %1393 = vmatprep.subr.mxu0 0.0
  %1394 = vmatpush1.msra.mxu0 0.0
  %1395 = vmatprep.subr.mxu0 0.0
  %1396 = vmatpush1.msra.mxu0 0.0
  %1397 = vmatprep.subr.mxu0 0.0
  %1398 = vmatpush1.msra.mxu0 0.0
  %1399 = vmatprep.subr.mxu0 0.0
  %1400 = vmatpush1.msra.mxu0 0.0
  %1401 = vmatprep.subr.mxu0 0.0
  %1402 = vmatpush1.msra.mxu0 0.0
  %1403 = vmatprep.subr.mxu0 0.0
  %1404 = vmatpush1.msra.mxu0 0.0
  %1405 = vmatprep.subr.mxu0 0.0
  %1406 = vmatpush1.msra.mxu0 0.0
  %1407 = vmatprep.subr.mxu0 0.0
  %1408 = vmatpush1.msra.mxu0 %v1377
  %1409 = vmatprep.subr.mxu0 0.0
  %1410 = vmatpush1.msra.mxu0 %v731
  %1411 = vmatprep.subr.mxu0 0.0
  %1412 = vmatpush2.msra.mxu0 0.0
  %1413 = vmatprep.subr.mxu0 0.0
  %1414 = vmatpush2.msra.mxu0 0.0
  %1415 = vmatprep.subr.mxu0 0.0
  %1416 = vmatpush2.msra.mxu0 0.0
  %1417 = vmatprep.subr.mxu0 0.0
  %1418 = vmatpush2.msra.mxu0 0.0
  %1419 = vmatprep.subr.mxu0 0.0
  %1420 = vmatpush2.msra.mxu0 0.0
  %1421 = vmatprep.subr.mxu0 0.0
  %1422 = vmatpush2.msra.mxu0 0.0
  %1423 = vmatprep.subr.mxu0 0.0
  %1424 = vmatpush2.msra.mxu0 0.0
  %1425 = vmatprep.subr.mxu0 0.0
  %1426 = vmatpush2.msra.mxu0 0.0
  %1427 = vmatprep.subr.mxu0 0.0
  %1428 = vmatpush2.msra.mxu0 0.0
  %1429 = vmatprep.subr.mxu0 0.0
  %1430 = vmatpush2.msra.mxu0 0.0
  %1431 = vmatprep.subr.mxu0 0.0
  %1432 = vmatpush2.msra.mxu0 0.0
  %1433 = vmatprep.subr.mxu0 0.0
  %1434 = vmatpush2.msra.mxu0 0.0
  %1435 = vmatprep.subr.mxu0 0.0
  %1436 = vmatpush2.msra.mxu0 0.0
  %1437 = vmatprep.subr.mxu0 0.0
  %1438 = vmatpush2.msra.mxu0 0.0
  %1439 = vmatprep.subr.mxu0 0.0
  %1440 = vmatpush2.msra.mxu0 0.0
  %1441 = vmatprep.subr.mxu0 0.0
  %1442 = vmatpush2.msra.mxu0 0.0
  %1443 = vmatprep.mubr.f32.mxu0 0.0
  %1444 = vmatmul.mubr.f32.gmra.mxu0 %v1058
  %v1445 = vpop.f32.mrf.mxu0
  %v1446 = vadd.f32 0.0, %v1445
  %v1447 = vpop.f32.mrf.mxu0
  %1448 = vmatprep.mubr.f32.mxu0 0.0
  %1449 = vmatmul.mubr.f32.gmra.mxu0 %v1061
  %v1450 = vpop.f32.mrf.mxu0
  %v1451 = vadd.f32 0.0, %v1450
  %v1452 = vpop.f32.mrf.mxu0
  %1453 = vdwg.mxu0
  %v1455 = vsel %vm1063, %v841, 0
  %1457 = vmatprep.subr.mxu0 0.0
  %1458 = vmatpush1.msra.mxu0 0.0
  %1459 = vmatprep.subr.mxu0 0.0
  %1460 = vmatpush1.msra.mxu0 0.0
  %1461 = vmatprep.subr.mxu0 0.0
  %1462 = vmatpush1.msra.mxu0 0.0
  %1463 = vmatprep.subr.mxu0 0.0
  %1464 = vmatpush1.msra.mxu0 0.0
  %1465 = vmatprep.subr.mxu0 0.0
  %1466 = vmatpush1.msra.mxu0 0.0
  %1467 = vmatprep.subr.mxu0 0.0
  %1468 = vmatpush1.msra.mxu0 0.0
  %1469 = vmatprep.subr.mxu0 0.0
  %1470 = vmatpush1.msra.mxu0 0.0
  %1471 = vmatprep.subr.mxu0 0.0
  %1472 = vmatpush1.msra.mxu0 0.0
  %1473 = vmatprep.subr.mxu0 0.0
  %1474 = vmatpush1.msra.mxu0 0.0
  %1475 = vmatprep.subr.mxu0 0.0
  %1476 = vmatpush1.msra.mxu0 0.0
  %1477 = vmatprep.subr.mxu0 0.0
  %1478 = vmatpush1.msra.mxu0 0.0
  %1479 = vmatprep.subr.mxu0 0.0
  %1480 = vmatpush1.msra.mxu0 0.0
  %1481 = vmatprep.subr.mxu0 0.0
  %1482 = vmatpush1.msra.mxu0 0.0
  %1483 = vmatprep.subr.mxu0 0.0
  %1484 = vmatpush1.msra.mxu0 0.0
  %1485 = vmatprep.subr.mxu0 0.0
  %1486 = vmatpush1.msra.mxu0 %v1455
  %1487 = vmatprep.subr.mxu0 0.0
  %1488 = vmatpush1.msra.mxu0 %v836
  %1489 = vmatprep.subr.mxu0 0.0
  %1490 = vmatpush2.msra.mxu0 0.0
  %1491 = vmatprep.subr.mxu0 0.0
  %1492 = vmatpush2.msra.mxu0 0.0
  %1493 = vmatprep.subr.mxu0 0.0
  %1494 = vmatpush2.msra.mxu0 0.0
  %1495 = vmatprep.subr.mxu0 0.0
  %1496 = vmatpush2.msra.mxu0 0.0
  %1497 = vmatprep.subr.mxu0 0.0
  %1498 = vmatpush2.msra.mxu0 0.0
  %1499 = vmatprep.subr.mxu0 0.0
  %1500 = vmatpush2.msra.mxu0 0.0
  %1501 = vmatprep.subr.mxu0 0.0
  %1502 = vmatpush2.msra.mxu0 0.0
  %1503 = vmatprep.subr.mxu0 0.0
  %1504 = vmatpush2.msra.mxu0 0.0
  %1505 = vmatprep.subr.mxu0 0.0
  %1506 = vmatpush2.msra.mxu0 0.0
  %1507 = vmatprep.subr.mxu0 0.0
  %1508 = vmatpush2.msra.mxu0 0.0
  %1509 = vmatprep.subr.mxu0 0.0
  %1510 = vmatpush2.msra.mxu0 0.0
  %1511 = vmatprep.subr.mxu0 0.0
  %1512 = vmatpush2.msra.mxu0 0.0
  %1513 = vmatprep.subr.mxu0 0.0
  %1514 = vmatpush2.msra.mxu0 0.0
  %1515 = vmatprep.subr.mxu0 0.0
  %1516 = vmatpush2.msra.mxu0 0.0
  %1517 = vmatprep.subr.mxu0 0.0
  %1518 = vmatpush2.msra.mxu0 0.0
  %1519 = vmatprep.subr.mxu0 0.0
  %1520 = vmatpush2.msra.mxu0 0.0
  %1521 = vmatprep.mubr.f32.mxu0 0.0
  %1522 = vmatmul.mubr.f32.gmra.mxu0 %v1058
  %v1523 = vpop.f32.mrf.mxu0
  %v1524 = vadd.f32 0.0, %v1523
  %v1525 = vpop.f32.mrf.mxu0
  %1526 = vmatprep.mubr.f32.mxu0 0.0
  %1527 = vmatmul.mubr.f32.gmra.mxu0 %v1061
  %v1528 = vpop.f32.mrf.mxu0
  %v1529 = vadd.f32 0.0, %v1528
  %v1530 = vpop.f32.mrf.mxu0
  %1531 = vdwg.mxu0
  %v1533 = vsel %vm1063, %v946, 0
  %1535 = vmatprep.subr.mxu0 0.0
  %1536 = vmatpush1.msra.mxu0 0.0
  %1537 = vmatprep.subr.mxu0 0.0
  %1538 = vmatpush1.msra.mxu0 0.0
  %1539 = vmatprep.subr.mxu0 0.0
  %1540 = vmatpush1.msra.mxu0 0.0
  %1541 = vmatprep.subr.mxu0 0.0
  %1542 = vmatpush1.msra.mxu0 0.0
  %1543 = vmatprep.subr.mxu0 0.0
  %1544 = vmatpush1.msra.mxu0 0.0
  %1545 = vmatprep.subr.mxu0 0.0
  %1546 = vmatpush1.msra.mxu0 0.0
  %1547 = vmatprep.subr.mxu0 0.0
  %1548 = vmatpush1.msra.mxu0 0.0
  %1549 = vmatprep.subr.mxu0 0.0
  %1550 = vmatpush1.msra.mxu0 0.0
  %1551 = vmatprep.subr.mxu0 0.0
  %1552 = vmatpush1.msra.mxu0 0.0
  %1553 = vmatprep.subr.mxu0 0.0
  %1554 = vmatpush1.msra.mxu0 0.0
  %1555 = vmatprep.subr.mxu0 0.0
  %1556 = vmatpush1.msra.mxu0 0.0
  %1557 = vmatprep.subr.mxu0 0.0
  %1558 = vmatpush1.msra.mxu0 0.0
  %1559 = vmatprep.subr.mxu0 0.0
  %1560 = vmatpush1.msra.mxu0 0.0
  %1561 = vmatprep.subr.mxu0 0.0
  %1562 = vmatpush1.msra.mxu0 0.0
  %1563 = vmatprep.subr.mxu0 0.0
  %1564 = vmatpush1.msra.mxu0 %v1533
  %1565 = vmatprep.subr.mxu0 0.0
  %1566 = vmatpush1.msra.mxu0 %v941
  %1567 = vmatprep.subr.mxu0 0.0
  %1568 = vmatpush2.msra.mxu0 0.0
  %1569 = vmatprep.subr.mxu0 0.0
  %1570 = vmatpush2.msra.mxu0 0.0
  %1571 = vmatprep.subr.mxu0 0.0
  %1572 = vmatpush2.msra.mxu0 0.0
  %1573 = vmatprep.subr.mxu0 0.0
  %1574 = vmatpush2.msra.mxu0 0.0
  %1575 = vmatprep.subr.mxu0 0.0
  %1576 = vmatpush2.msra.mxu0 0.0
  %1577 = vmatprep.subr.mxu0 0.0
  %1578 = vmatpush2.msra.mxu0 0.0
  %1579 = vmatprep.subr.mxu0 0.0
  %1580 = vmatpush2.msra.mxu0 0.0
  %1581 = vmatprep.subr.mxu0 0.0
  %1582 = vmatpush2.msra.mxu0 0.0
  %1583 = vmatprep.subr.mxu0 0.0
  %1584 = vmatpush2.msra.mxu0 0.0
  %1585 = vmatprep.subr.mxu0 0.0
  %1586 = vmatpush2.msra.mxu0 0.0
  %1587 = vmatprep.subr.mxu0 0.0
  %1588 = vmatpush2.msra.mxu0 0.0
  %1589 = vmatprep.subr.mxu0 0.0
  %1590 = vmatpush2.msra.mxu0 0.0
  %1591 = vmatprep.subr.mxu0 0.0
  %1592 = vmatpush2.msra.mxu0 0.0
  %1593 = vmatprep.subr.mxu0 0.0
  %1594 = vmatpush2.msra.mxu0 0.0
  %1595 = vmatprep.subr.mxu0 0.0
  %1596 = vmatpush2.msra.mxu0 0.0
  %1597 = vmatprep.subr.mxu0 0.0
  %1598 = vmatpush2.msra.mxu0 0.0
  %1599 = vmatprep.mubr.f32.mxu0 0.0
  %1600 = vmatmul.mubr.f32.gmra.mxu0 %v1058
  %v1601 = vpop.f32.mrf.mxu0
  %v1602 = vadd.f32 0.0, %v1601
  %v1603 = vpop.f32.mrf.mxu0
  %1604 = vmatprep.mubr.f32.mxu0 0.0
  %1605 = vmatmul.mubr.f32.gmra.mxu0 %v1061
  %v1606 = vpop.f32.mrf.mxu0
  %v1607 = vadd.f32 0.0, %v1606
  %v1608 = vpop.f32.mrf.mxu0
  %1609 = vdwg.mxu0
  %v1611 = vsel %vm1063, %v1051, 0
  %1613 = vmatprep.subr.mxu0 0.0
  %1614 = vmatpush1.msra.mxu0 0.0
  %1615 = vmatprep.subr.mxu0 0.0
  %1616 = vmatpush1.msra.mxu0 0.0
  %1617 = vmatprep.subr.mxu0 0.0
  %1618 = vmatpush1.msra.mxu0 0.0
  %1619 = vmatprep.subr.mxu0 0.0
  %1620 = vmatpush1.msra.mxu0 0.0
  %1621 = vmatprep.subr.mxu0 0.0
  %1622 = vmatpush1.msra.mxu0 0.0
  %1623 = vmatprep.subr.mxu0 0.0
  %1624 = vmatpush1.msra.mxu0 0.0
  %1625 = vmatprep.subr.mxu0 0.0
  %1626 = vmatpush1.msra.mxu0 0.0
  %1627 = vmatprep.subr.mxu0 0.0
  %1628 = vmatpush1.msra.mxu0 0.0
  %1629 = vmatprep.subr.mxu0 0.0
  %1630 = vmatpush1.msra.mxu0 0.0
  %1631 = vmatprep.subr.mxu0 0.0
  %1632 = vmatpush1.msra.mxu0 0.0
  %1633 = vmatprep.subr.mxu0 0.0
  %1634 = vmatpush1.msra.mxu0 0.0
  %1635 = vmatprep.subr.mxu0 0.0
  %1636 = vmatpush1.msra.mxu0 0.0
  %1637 = vmatprep.subr.mxu0 0.0
  %1638 = vmatpush1.msra.mxu0 0.0
  %1639 = vmatprep.subr.mxu0 0.0
  %1640 = vmatpush1.msra.mxu0 0.0
  %1641 = vmatprep.subr.mxu0 0.0
  %1642 = vmatpush1.msra.mxu0 %v1611
  %1643 = vmatprep.subr.mxu0 0.0
  %1644 = vmatpush1.msra.mxu0 %v1046
  %1645 = vmatprep.subr.mxu0 0.0
  %1646 = vmatpush2.msra.mxu0 0.0
  %1647 = vmatprep.subr.mxu0 0.0
  %1648 = vmatpush2.msra.mxu0 0.0
  %1649 = vmatprep.subr.mxu0 0.0
  %1650 = vmatpush2.msra.mxu0 0.0
  %1651 = vmatprep.subr.mxu0 0.0
  %1652 = vmatpush2.msra.mxu0 0.0
  %1653 = vmatprep.subr.mxu0 0.0
  %1654 = vmatpush2.msra.mxu0 0.0
  %1655 = vmatprep.subr.mxu0 0.0
  %1656 = vmatpush2.msra.mxu0 0.0
  %1657 = vmatprep.subr.mxu0 0.0
  %1658 = vmatpush2.msra.mxu0 0.0
  %1659 = vmatprep.subr.mxu0 0.0
  %1660 = vmatpush2.msra.mxu0 0.0
  %1661 = vmatprep.subr.mxu0 0.0
  %1662 = vmatpush2.msra.mxu0 0.0
  %1663 = vmatprep.subr.mxu0 0.0
  %1664 = vmatpush2.msra.mxu0 0.0
  %1665 = vmatprep.subr.mxu0 0.0
  %1666 = vmatpush2.msra.mxu0 0.0
  %1667 = vmatprep.subr.mxu0 0.0
  %1668 = vmatpush2.msra.mxu0 0.0
  %1669 = vmatprep.subr.mxu0 0.0
  %1670 = vmatpush2.msra.mxu0 0.0
  %1671 = vmatprep.subr.mxu0 0.0
  %1672 = vmatpush2.msra.mxu0 0.0
  %1673 = vmatprep.subr.mxu0 0.0
  %1674 = vmatpush2.msra.mxu0 0.0
  %1675 = vmatprep.subr.mxu0 0.0
  %1676 = vmatpush2.msra.mxu0 0.0
  %1677 = vmatprep.mubr.f32.mxu0 0.0
  %1678 = vmatmul.mubr.f32.gmra.mxu0 %v1058
  %v1679 = vpop.f32.mrf.mxu0
  %v1680 = vadd.f32 0.0, %v1679
  %v1681 = vpop.f32.mrf.mxu0
  %1682 = vmatprep.mubr.f32.mxu0 0.0
  %1683 = vmatmul.mubr.f32.gmra.mxu0 %v1061
  %v1684 = vpop.f32.mrf.mxu0
  %v1685 = vadd.f32 0.0, %v1684
  %v1686 = vpop.f32.mrf.mxu0
  %1687 = vdwg.mxu0
  %v1688 = vld [vmem:[%s5] sm:$0xff]
  %v1689 = vld [vmem:[%s5 + $0x8] sm:$0xf]
  %1691 = vset.pattern.permute.xlu0 0
  %1692 = vperm.xlu0 %1691, %v1688
  %v1693 = vpop.permute.xlu0 %1692
  %1696 = vset.pattern.permute.xlu0 0
  %1697 = vperm.xlu0 %1696, %v1689
  %v1698 = vpop.permute.xlu0 %1697
  %v1701 = vsel %vm213, %v1134, 0
  %v1704 = vsel %vm213, %v1139, 0
  %1706 = vmatprep.subr.mxu0 0.0
  %1707 = vmatpush1.xpose.msra.mxu0 0.0
  %1708 = vmatprep.subr.mxu0 0.0
  %1709 = vmatpush1.xpose.msra.mxu0 0.0
  %1710 = vmatprep.subr.mxu0 0.0
  %1711 = vmatpush1.xpose.msra.mxu0 0.0
  %1712 = vmatprep.subr.mxu0 0.0
  %1713 = vmatpush1.xpose.msra.mxu0 0.0
  %1714 = vmatprep.subr.mxu0 0.0
  %1715 = vmatpush1.xpose.msra.mxu0 0.0
  %1716 = vmatprep.subr.mxu0 0.0
  %1717 = vmatpush1.xpose.msra.mxu0 0.0
  %1718 = vmatprep.subr.mxu0 0.0
  %1719 = vmatpush1.xpose.msra.mxu0 0.0
  %1720 = vmatprep.subr.mxu0 0.0
  %1721 = vmatpush1.xpose.msra.mxu0 0.0
  %1722 = vmatprep.subr.mxu0 0.0
  %1723 = vmatpush1.xpose.msra.mxu0 %v242
  %1724 = vmatprep.subr.mxu0 0.0
  %1725 = vmatpush1.xpose.msra.mxu0 %v239
  %1726 = vmatprep.subr.mxu0 0.0
  %1727 = vmatpush1.xpose.msra.mxu0 %v236
  %1728 = vmatprep.subr.mxu0 0.0
  %1729 = vmatpush1.xpose.msra.mxu0 %v233
  %1730 = vmatprep.subr.mxu0 0.0
  %1731 = vmatpush1.xpose.msra.mxu0 %v230
  %1732 = vmatprep.subr.mxu0 0.0
  %1733 = vmatpush1.xpose.msra.mxu0 %v227
  %1734 = vmatprep.subr.mxu0 0.0
  %1735 = vmatpush1.xpose.msra.mxu0 %v224
  %1736 = vmatprep.subr.mxu0 0.0
  %1737 = vmatpush1.xpose.msra.mxu0 %v221
  %1738 = vmatprep.subr.mxu0 0.0
  %1739 = vmatpush2.xpose.msra.mxu0 0.0
  %1740 = vmatprep.subr.mxu0 0.0
  %1741 = vmatpush2.xpose.msra.mxu0 0.0
  %1742 = vmatprep.subr.mxu0 0.0
  %1743 = vmatpush2.xpose.msra.mxu0 0.0
  %1744 = vmatprep.subr.mxu0 0.0
  %1745 = vmatpush2.xpose.msra.mxu0 0.0
  %1746 = vmatprep.subr.mxu0 0.0
  %1747 = vmatpush2.xpose.msra.mxu0 0.0
  %1748 = vmatprep.subr.mxu0 0.0
  %1749 = vmatpush2.xpose.msra.mxu0 0.0
  %1750 = vmatprep.subr.mxu0 0.0
  %1751 = vmatpush2.xpose.msra.mxu0 0.0
  %1752 = vmatprep.subr.mxu0 0.0
  %1753 = vmatpush2.xpose.msra.mxu0 0.0
  %1754 = vmatprep.subr.mxu0 0.0
  %1755 = vmatpush2.xpose.msra.mxu0 0.0
  %1756 = vmatprep.subr.mxu0 0.0
  %1757 = vmatpush2.xpose.msra.mxu0 0.0
  %1758 = vmatprep.subr.mxu0 0.0
  %1759 = vmatpush2.xpose.msra.mxu0 0.0
  %1760 = vmatprep.subr.mxu0 0.0
  %1761 = vmatpush2.xpose.msra.mxu0 0.0
  %1762 = vmatprep.subr.mxu0 0.0
  %1763 = vmatpush2.xpose.msra.mxu0 0.0
  %1764 = vmatprep.subr.mxu0 0.0
  %1765 = vmatpush2.xpose.msra.mxu0 0.0
  %1766 = vmatprep.subr.mxu0 0.0
  %1767 = vmatpush2.xpose.msra.mxu0 0.0
  %1768 = vmatprep.subr.mxu0 0.0
  %1769 = vmatpush2.xpose.msra.mxu0 0.0
  %1770 = vmatprep.mubr.f32.mxu0 0.0
  %1771 = vmatmul.mubr.f32.gmra.mxu0 %v1701
  %v1772 = vpop.f32.mrf.mxu0
  %v1773 = vadd.f32 %v1693, %v1772
  %v1774 = vpop.f32.mrf.mxu0
  %1775 = vmatprep.mubr.f32.mxu0 0.0
  %1776 = vmatmul.mubr.f32.gmra.mxu0 %v1704
  %v1777 = vpop.f32.mrf.mxu0
  %v1778 = vadd.f32 %v1698, %v1777
  %v1779 = vpop.f32.mrf.mxu0
  %1780 = vdwg.mxu0
  %v1782 = vsel %vm213, %v1212, 0
  %v1785 = vsel %vm213, %v1217, 0
  %1787 = vmatprep.subr.mxu0 0.0
  %1788 = vmatpush1.xpose.msra.mxu0 0.0
  %1789 = vmatprep.subr.mxu0 0.0
  %1790 = vmatpush1.xpose.msra.mxu0 0.0
  %1791 = vmatprep.subr.mxu0 0.0
  %1792 = vmatpush1.xpose.msra.mxu0 0.0
  %1793 = vmatprep.subr.mxu0 0.0
  %1794 = vmatpush1.xpose.msra.mxu0 0.0
  %1795 = vmatprep.subr.mxu0 0.0
  %1796 = vmatpush1.xpose.msra.mxu0 0.0
  %1797 = vmatprep.subr.mxu0 0.0
  %1798 = vmatpush1.xpose.msra.mxu0 0.0
  %1799 = vmatprep.subr.mxu0 0.0
  %1800 = vmatpush1.xpose.msra.mxu0 0.0
  %1801 = vmatprep.subr.mxu0 0.0
  %1802 = vmatpush1.xpose.msra.mxu0 0.0
  %1803 = vmatprep.subr.mxu0 0.0
  %1804 = vmatpush1.xpose.msra.mxu0 %v347
  %1805 = vmatprep.subr.mxu0 0.0
  %1806 = vmatpush1.xpose.msra.mxu0 %v344
  %1807 = vmatprep.subr.mxu0 0.0
  %1808 = vmatpush1.xpose.msra.mxu0 %v341
  %1809 = vmatprep.subr.mxu0 0.0
  %1810 = vmatpush1.xpose.msra.mxu0 %v338
  %1811 = vmatprep.subr.mxu0 0.0
  %1812 = vmatpush1.xpose.msra.mxu0 %v335
  %1813 = vmatprep.subr.mxu0 0.0
  %1814 = vmatpush1.xpose.msra.mxu0 %v332
  %1815 = vmatprep.subr.mxu0 0.0
  %1816 = vmatpush1.xpose.msra.mxu0 %v329
  %1817 = vmatprep.subr.mxu0 0.0
  %1818 = vmatpush1.xpose.msra.mxu0 %v326
  %1819 = vmatprep.subr.mxu0 0.0
  %1820 = vmatpush2.xpose.msra.mxu0 0.0
  %1821 = vmatprep.subr.mxu0 0.0
  %1822 = vmatpush2.xpose.msra.mxu0 0.0
  %1823 = vmatprep.subr.mxu0 0.0
  %1824 = vmatpush2.xpose.msra.mxu0 0.0
  %1825 = vmatprep.subr.mxu0 0.0
  %1826 = vmatpush2.xpose.msra.mxu0 0.0
  %1827 = vmatprep.subr.mxu0 0.0
  %1828 = vmatpush2.xpose.msra.mxu0 0.0
  %1829 = vmatprep.subr.mxu0 0.0
  %1830 = vmatpush2.xpose.msra.mxu0 0.0
  %1831 = vmatprep.subr.mxu0 0.0
  %1832 = vmatpush2.xpose.msra.mxu0 0.0
  %1833 = vmatprep.subr.mxu0 0.0
  %1834 = vmatpush2.xpose.msra.mxu0 0.0
  %1835 = vmatprep.subr.mxu0 0.0
  %1836 = vmatpush2.xpose.msra.mxu0 0.0
  %1837 = vmatprep.subr.mxu0 0.0
  %1838 = vmatpush2.xpose.msra.mxu0 0.0
  %1839 = vmatprep.subr.mxu0 0.0
  %1840 = vmatpush2.xpose.msra.mxu0 0.0
  %1841 = vmatprep.subr.mxu0 0.0
  %1842 = vmatpush2.xpose.msra.mxu0 0.0
  %1843 = vmatprep.subr.mxu0 0.0
  %1844 = vmatpush2.xpose.msra.mxu0 0.0
  %1845 = vmatprep.subr.mxu0 0.0
  %1846 = vmatpush2.xpose.msra.mxu0 0.0
  %1847 = vmatprep.subr.mxu0 0.0
  %1848 = vmatpush2.xpose.msra.mxu0 0.0
  %1849 = vmatprep.subr.mxu0 0.0
  %1850 = vmatpush2.xpose.msra.mxu0 0.0
  %1851 = vmatprep.mubr.f32.mxu0 0.0
  %1852 = vmatmul.mubr.f32.gmra.mxu0 %v1782
  %v1853 = vpop.f32.mrf.mxu0
  %v1854 = vadd.f32 %v1693, %v1853
  %v1855 = vpop.f32.mrf.mxu0
  %1856 = vmatprep.mubr.f32.mxu0 0.0
  %1857 = vmatmul.mubr.f32.gmra.mxu0 %v1785
  %v1858 = vpop.f32.mrf.mxu0
  %v1859 = vadd.f32 %v1698, %v1858
  %v1860 = vpop.f32.mrf.mxu0
  %1861 = vdwg.mxu0
  %v1863 = vsel %vm213, %v1290, 0
  %v1866 = vsel %vm213, %v1295, 0
  %1868 = vmatprep.subr.mxu0 0.0
  %1869 = vmatpush1.xpose.msra.mxu0 0.0
  %1870 = vmatprep.subr.mxu0 0.0
  %1871 = vmatpush1.xpose.msra.mxu0 0.0
  %1872 = vmatprep.subr.mxu0 0.0
  %1873 = vmatpush1.xpose.msra.mxu0 0.0
  %1874 = vmatprep.subr.mxu0 0.0
  %1875 = vmatpush1.xpose.msra.mxu0 0.0
  %1876 = vmatprep.subr.mxu0 0.0
  %1877 = vmatpush1.xpose.msra.mxu0 0.0
  %1878 = vmatprep.subr.mxu0 0.0
  %1879 = vmatpush1.xpose.msra.mxu0 0.0
  %1880 = vmatprep.subr.mxu0 0.0
  %1881 = vmatpush1.xpose.msra.mxu0 0.0
  %1882 = vmatprep.subr.mxu0 0.0
  %1883 = vmatpush1.xpose.msra.mxu0 0.0
  %1884 = vmatprep.subr.mxu0 0.0
  %1885 = vmatpush1.xpose.msra.mxu0 %v452
  %1886 = vmatprep.subr.mxu0 0.0
  %1887 = vmatpush1.xpose.msra.mxu0 %v449
  %1888 = vmatprep.subr.mxu0 0.0
  %1889 = vmatpush1.xpose.msra.mxu0 %v446
  %1890 = vmatprep.subr.mxu0 0.0
  %1891 = vmatpush1.xpose.msra.mxu0 %v443
  %1892 = vmatprep.subr.mxu0 0.0
  %1893 = vmatpush1.xpose.msra.mxu0 %v440
  %1894 = vmatprep.subr.mxu0 0.0
  %1895 = vmatpush1.xpose.msra.mxu0 %v437
  %1896 = vmatprep.subr.mxu0 0.0
  %1897 = vmatpush1.xpose.msra.mxu0 %v434
  %1898 = vmatprep.subr.mxu0 0.0
  %1899 = vmatpush1.xpose.msra.mxu0 %v431
  %1900 = vmatprep.subr.mxu0 0.0
  %1901 = vmatpush2.xpose.msra.mxu0 0.0
  %1902 = vmatprep.subr.mxu0 0.0
  %1903 = vmatpush2.xpose.msra.mxu0 0.0
  %1904 = vmatprep.subr.mxu0 0.0
  %1905 = vmatpush2.xpose.msra.mxu0 0.0
  %1906 = vmatprep.subr.mxu0 0.0
  %1907 = vmatpush2.xpose.msra.mxu0 0.0
  %1908 = vmatprep.subr.mxu0 0.0
  %1909 = vmatpush2.xpose.msra.mxu0 0.0
  %1910 = vmatprep.subr.mxu0 0.0
  %1911 = vmatpush2.xpose.msra.mxu0 0.0
  %1912 = vmatprep.subr.mxu0 0.0
  %1913 = vmatpush2.xpose.msra.mxu0 0.0
  %1914 = vmatprep.subr.mxu0 0.0
  %1915 = vmatpush2.xpose.msra.mxu0 0.0
  %1916 = vmatprep.subr.mxu0 0.0
  %1917 = vmatpush2.xpose.msra.mxu0 0.0
  %1918 = vmatprep.subr.mxu0 0.0
  %1919 = vmatpush2.xpose.msra.mxu0 0.0
  %1920 = vmatprep.subr.mxu0 0.0
  %1921 = vmatpush2.xpose.msra.mxu0 0.0
  %1922 = vmatprep.subr.mxu0 0.0
  %1923 = vmatpush2.xpose.msra.mxu0 0.0
  %1924 = vmatprep.subr.mxu0 0.0
  %1925 = vmatpush2.xpose.msra.mxu0 0.0
  %1926 = vmatprep.subr.mxu0 0.0
  %1927 = vmatpush2.xpose.msra.mxu0 0.0
  %1928 = vmatprep.subr.mxu0 0.0
  %1929 = vmatpush2.xpose.msra.mxu0 0.0
  %1930 = vmatprep.subr.mxu0 0.0
  %1931 = vmatpush2.xpose.msra.mxu0 0.0
  %1932 = vmatprep.mubr.f32.mxu0 0.0
  %1933 = vmatmul.mubr.f32.gmra.mxu0 %v1863
  %v1934 = vpop.f32.mrf.mxu0
  %v1935 = vadd.f32 %v1693, %v1934
  %v1936 = vpop.f32.mrf.mxu0
  %1937 = vmatprep.mubr.f32.mxu0 0.0
  %1938 = vmatmul.mubr.f32.gmra.mxu0 %v1866
  %v1939 = vpop.f32.mrf.mxu0
  %v1940 = vadd.f32 %v1698, %v1939
  %v1941 = vpop.f32.mrf.mxu0
  %1942 = vdwg.mxu0
  %v1944 = vsel %vm213, %v1368, 0
  %v1947 = vsel %vm213, %v1373, 0
  %1949 = vmatprep.subr.mxu0 0.0
  %1950 = vmatpush1.xpose.msra.mxu0 0.0
  %1951 = vmatprep.subr.mxu0 0.0
  %1952 = vmatpush1.xpose.msra.mxu0 0.0
  %1953 = vmatprep.subr.mxu0 0.0
  %1954 = vmatpush1.xpose.msra.mxu0 0.0
  %1955 = vmatprep.subr.mxu0 0.0
  %1956 = vmatpush1.xpose.msra.mxu0 0.0
  %1957 = vmatprep.subr.mxu0 0.0
  %1958 = vmatpush1.xpose.msra.mxu0 0.0
  %1959 = vmatprep.subr.mxu0 0.0
  %1960 = vmatpush1.xpose.msra.mxu0 0.0
  %1961 = vmatprep.subr.mxu0 0.0
  %1962 = vmatpush1.xpose.msra.mxu0 0.0
  %1963 = vmatprep.subr.mxu0 0.0
  %1964 = vmatpush1.xpose.msra.mxu0 0.0
  %1965 = vmatprep.subr.mxu0 0.0
  %1966 = vmatpush1.xpose.msra.mxu0 %v557
  %1967 = vmatprep.subr.mxu0 0.0
  %1968 = vmatpush1.xpose.msra.mxu0 %v554
  %1969 = vmatprep.subr.mxu0 0.0
  %1970 = vmatpush1.xpose.msra.mxu0 %v551
  %1971 = vmatprep.subr.mxu0 0.0
  %1972 = vmatpush1.xpose.msra.mxu0 %v548
  %1973 = vmatprep.subr.mxu0 0.0
  %1974 = vmatpush1.xpose.msra.mxu0 %v545
  %1975 = vmatprep.subr.mxu0 0.0
  %1976 = vmatpush1.xpose.msra.mxu0 %v542
  %1977 = vmatprep.subr.mxu0 0.0
  %1978 = vmatpush1.xpose.msra.mxu0 %v539
  %1979 = vmatprep.subr.mxu0 0.0
  %1980 = vmatpush1.xpose.msra.mxu0 %v536
  %1981 = vmatprep.subr.mxu0 0.0
  %1982 = vmatpush2.xpose.msra.mxu0 0.0
  %1983 = vmatprep.subr.mxu0 0.0
  %1984 = vmatpush2.xpose.msra.mxu0 0.0
  %1985 = vmatprep.subr.mxu0 0.0
  %1986 = vmatpush2.xpose.msra.mxu0 0.0
  %1987 = vmatprep.subr.mxu0 0.0
  %1988 = vmatpush2.xpose.msra.mxu0 0.0
  %1989 = vmatprep.subr.mxu0 0.0
  %1990 = vmatpush2.xpose.msra.mxu0 0.0
  %1991 = vmatprep.subr.mxu0 0.0
  %1992 = vmatpush2.xpose.msra.mxu0 0.0
  %1993 = vmatprep.subr.mxu0 0.0
  %1994 = vmatpush2.xpose.msra.mxu0 0.0
  %1995 = vmatprep.subr.mxu0 0.0
  %1996 = vmatpush2.xpose.msra.mxu0 0.0
  %1997 = vmatprep.subr.mxu0 0.0
  %1998 = vmatpush2.xpose.msra.mxu0 0.0
  %1999 = vmatprep.subr.mxu0 0.0
  %2000 = vmatpush2.xpose.msra.mxu0 0.0
  %2001 = vmatprep.subr.mxu0 0.0
  %2002 = vmatpush2.xpose.msra.mxu0 0.0
  %2003 = vmatprep.subr.mxu0 0.0
  %2004 = vmatpush2.xpose.msra.mxu0 0.0
  %2005 = vmatprep.subr.mxu0 0.0
  %2006 = vmatpush2.xpose.msra.mxu0 0.0
  %2007 = vmatprep.subr.mxu0 0.0
  %2008 = vmatpush2.xpose.msra.mxu0 0.0
  %2009 = vmatprep.subr.mxu0 0.0
  %2010 = vmatpush2.xpose.msra.mxu0 0.0
  %2011 = vmatprep.subr.mxu0 0.0
  %2012 = vmatpush2.xpose.msra.mxu0 0.0
  %2013 = vmatprep.mubr.f32.mxu0 0.0
  %2014 = vmatmul.mubr.f32.gmra.mxu0 %v1944
  %v2015 = vpop.f32.mrf.mxu0
  %v2016 = vadd.f32 %v1693, %v2015
  %v2017 = vpop.f32.mrf.mxu0
  %2018 = vmatprep.mubr.f32.mxu0 0.0
  %2019 = vmatmul.mubr.f32.gmra.mxu0 %v1947
  %v2020 = vpop.f32.mrf.mxu0
  %v2021 = vadd.f32 %v1698, %v2020
  %v2022 = vpop.f32.mrf.mxu0
  %2023 = vdwg.mxu0
  %v2025 = vsel %vm213, %v1446, 0
  %v2028 = vsel %vm213, %v1451, 0
  %2030 = vmatprep.subr.mxu0 0.0
  %2031 = vmatpush1.xpose.msra.mxu0 0.0
  %2032 = vmatprep.subr.mxu0 0.0
  %2033 = vmatpush1.xpose.msra.mxu0 0.0
  %2034 = vmatprep.subr.mxu0 0.0
  %2035 = vmatpush1.xpose.msra.mxu0 0.0
  %2036 = vmatprep.subr.mxu0 0.0
  %2037 = vmatpush1.xpose.msra.mxu0 0.0
  %2038 = vmatprep.subr.mxu0 0.0
  %2039 = vmatpush1.xpose.msra.mxu0 0.0
  %2040 = vmatprep.subr.mxu0 0.0
  %2041 = vmatpush1.xpose.msra.mxu0 0.0
  %2042 = vmatprep.subr.mxu0 0.0
  %2043 = vmatpush1.xpose.msra.mxu0 0.0
  %2044 = vmatprep.subr.mxu0 0.0
  %2045 = vmatpush1.xpose.msra.mxu0 0.0
  %2046 = vmatprep.subr.mxu0 0.0
  %2047 = vmatpush1.xpose.msra.mxu0 %v662
  %2048 = vmatprep.subr.mxu0 0.0
  %2049 = vmatpush1.xpose.msra.mxu0 %v659
  %2050 = vmatprep.subr.mxu0 0.0
  %2051 = vmatpush1.xpose.msra.mxu0 %v656
  %2052 = vmatprep.subr.mxu0 0.0
  %2053 = vmatpush1.xpose.msra.mxu0 %v653
  %2054 = vmatprep.subr.mxu0 0.0
  %2055 = vmatpush1.xpose.msra.mxu0 %v650
  %2056 = vmatprep.subr.mxu0 0.0
  %2057 = vmatpush1.xpose.msra.mxu0 %v647
  %2058 = vmatprep.subr.mxu0 0.0
  %2059 = vmatpush1.xpose.msra.mxu0 %v644
  %2060 = vmatprep.subr.mxu0 0.0
  %2061 = vmatpush1.xpose.msra.mxu0 %v641
  %2062 = vmatprep.subr.mxu0 0.0
  %2063 = vmatpush2.xpose.msra.mxu0 0.0
  %2064 = vmatprep.subr.mxu0 0.0
  %2065 = vmatpush2.xpose.msra.mxu0 0.0
  %2066 = vmatprep.subr.mxu0 0.0
  %2067 = vmatpush2.xpose.msra.mxu0 0.0
  %2068 = vmatprep.subr.mxu0 0.0
  %2069 = vmatpush2.xpose.msra.mxu0 0.0
  %2070 = vmatprep.subr.mxu0 0.0
  %2071 = vmatpush2.xpose.msra.mxu0 0.0
  %2072 = vmatprep.subr.mxu0 0.0
  %2073 = vmatpush2.xpose.msra.mxu0 0.0
  %2074 = vmatprep.subr.mxu0 0.0
  %2075 = vmatpush2.xpose.msra.mxu0 0.0
  %2076 = vmatprep.subr.mxu0 0.0
  %2077 = vmatpush2.xpose.msra.mxu0 0.0
  %2078 = vmatprep.subr.mxu0 0.0
  %2079 = vmatpush2.xpose.msra.mxu0 0.0
  %2080 = vmatprep.subr.mxu0 0.0
  %2081 = vmatpush2.xpose.msra.mxu0 0.0
  %2082 = vmatprep.subr.mxu0 0.0
  %2083 = vmatpush2.xpose.msra.mxu0 0.0
  %2084 = vmatprep.subr.mxu0 0.0
  %2085 = vmatpush2.xpose.msra.mxu0 0.0
  %2086 = vmatprep.subr.mxu0 0.0
  %2087 = vmatpush2.xpose.msra.mxu0 0.0
  %2088 = vmatprep.subr.mxu0 0.0
  %2089 = vmatpush2.xpose.msra.mxu0 0.0
  %2090 = vmatprep.subr.mxu0 0.0
  %2091 = vmatpush2.xpose.msra.mxu0 0.0
  %2092 = vmatprep.subr.mxu0 0.0
  %2093 = vmatpush2.xpose.msra.mxu0 0.0
  %2094 = vmatprep.mubr.f32.mxu0 0.0
  %2095 = vmatmul.mubr.f32.gmra.mxu0 %v2025
  %v2096 = vpop.f32.mrf.mxu0
  %v2097 = vadd.f32 %v1693, %v2096
  %v2098 = vpop.f32.mrf.mxu0
  %2099 = vmatprep.mubr.f32.mxu0 0.0
  %2100 = vmatmul.mubr.f32.gmra.mxu0 %v2028
  %v2101 = vpop.f32.mrf.mxu0
  %v2102 = vadd.f32 %v1698, %v2101
  %v2103 = vpop.f32.mrf.mxu0
  %2104 = vdwg.mxu0
  %v2106 = vsel %vm213, %v1524, 0
  %v2109 = vsel %vm213, %v1529, 0
  %2111 = vmatprep.subr.mxu0 0.0
  %2112 = vmatpush1.xpose.msra.mxu0 0.0
  %2113 = vmatprep.subr.mxu0 0.0
  %2114 = vmatpush1.xpose.msra.mxu0 0.0
  %2115 = vmatprep.subr.mxu0 0.0
  %2116 = vmatpush1.xpose.msra.mxu0 0.0
  %2117 = vmatprep.subr.mxu0 0.0
  %2118 = vmatpush1.xpose.msra.mxu0 0.0
  %2119 = vmatprep.subr.mxu0 0.0
  %2120 = vmatpush1.xpose.msra.mxu0 0.0
  %2121 = vmatprep.subr.mxu0 0.0
  %2122 = vmatpush1.xpose.msra.mxu0 0.0
  %2123 = vmatprep.subr.mxu0 0.0
  %2124 = vmatpush1.xpose.msra.mxu0 0.0
  %2125 = vmatprep.subr.mxu0 0.0
  %2126 = vmatpush1.xpose.msra.mxu0 0.0
  %2127 = vmatprep.subr.mxu0 0.0
  %2128 = vmatpush1.xpose.msra.mxu0 %v767
  %2129 = vmatprep.subr.mxu0 0.0
  %2130 = vmatpush1.xpose.msra.mxu0 %v764
  %2131 = vmatprep.subr.mxu0 0.0
  %2132 = vmatpush1.xpose.msra.mxu0 %v761
  %2133 = vmatprep.subr.mxu0 0.0
  %2134 = vmatpush1.xpose.msra.mxu0 %v758
  %2135 = vmatprep.subr.mxu0 0.0
  %2136 = vmatpush1.xpose.msra.mxu0 %v755
  %2137 = vmatprep.subr.mxu0 0.0
  %2138 = vmatpush1.xpose.msra.mxu0 %v752
  %2139 = vmatprep.subr.mxu0 0.0
  %2140 = vmatpush1.xpose.msra.mxu0 %v749
  %2141 = vmatprep.subr.mxu0 0.0
  %2142 = vmatpush1.xpose.msra.mxu0 %v746
  %2143 = vmatprep.subr.mxu0 0.0
  %2144 = vmatpush2.xpose.msra.mxu0 0.0
  %2145 = vmatprep.subr.mxu0 0.0
  %2146 = vmatpush2.xpose.msra.mxu0 0.0
  %2147 = vmatprep.subr.mxu0 0.0
  %2148 = vmatpush2.xpose.msra.mxu0 0.0
  %2149 = vmatprep.subr.mxu0 0.0
  %2150 = vmatpush2.xpose.msra.mxu0 0.0
  %2151 = vmatprep.subr.mxu0 0.0
  %2152 = vmatpush2.xpose.msra.mxu0 0.0
  %2153 = vmatprep.subr.mxu0 0.0
  %2154 = vmatpush2.xpose.msra.mxu0 0.0
  %2155 = vmatprep.subr.mxu0 0.0
  %2156 = vmatpush2.xpose.msra.mxu0 0.0
  %2157 = vmatprep.subr.mxu0 0.0
  %2158 = vmatpush2.xpose.msra.mxu0 0.0
  %2159 = vmatprep.subr.mxu0 0.0
  %2160 = vmatpush2.xpose.msra.mxu0 0.0
  %2161 = vmatprep.subr.mxu0 0.0
  %2162 = vmatpush2.xpose.msra.mxu0 0.0
  %2163 = vmatprep.subr.mxu0 0.0
  %2164 = vmatpush2.xpose.msra.mxu0 0.0
  %2165 = vmatprep.subr.mxu0 0.0
  %2166 = vmatpush2.xpose.msra.mxu0 0.0
  %2167 = vmatprep.subr.mxu0 0.0
  %2168 = vmatpush2.xpose.msra.mxu0 0.0
  %2169 = vmatprep.subr.mxu0 0.0
  %2170 = vmatpush2.xpose.msra.mxu0 0.0
  %2171 = vmatprep.subr.mxu0 0.0
  %2172 = vmatpush2.xpose.msra.mxu0 0.0
  %2173 = vmatprep.subr.mxu0 0.0
  %2174 = vmatpush2.xpose.msra.mxu0 0.0
  %2175 = vmatprep.mubr.f32.mxu0 0.0
  %2176 = vmatmul.mubr.f32.gmra.mxu0 %v2106
  %v2177 = vpop.f32.mrf.mxu0
  %v2178 = vadd.f32 %v1693, %v2177
  %v2179 = vpop.f32.mrf.mxu0
  %2180 = vmatprep.mubr.f32.mxu0 0.0
  %2181 = vmatmul.mubr.f32.gmra.mxu0 %v2109
  %v2182 = vpop.f32.mrf.mxu0
  %v2183 = vadd.f32 %v1698, %v2182
  %v2184 = vpop.f32.mrf.mxu0
  %2185 = vdwg.mxu0
  %v2187 = vsel %vm213, %v1602, 0
  %v2190 = vsel %vm213, %v1607, 0
  %2192 = vmatprep.subr.mxu0 0.0
  %2193 = vmatpush1.xpose.msra.mxu0 0.0
  %2194 = vmatprep.subr.mxu0 0.0
  %2195 = vmatpush1.xpose.msra.mxu0 0.0
  %2196 = vmatprep.subr.mxu0 0.0
  %2197 = vmatpush1.xpose.msra.mxu0 0.0
  %2198 = vmatprep.subr.mxu0 0.0
  %2199 = vmatpush1.xpose.msra.mxu0 0.0
  %2200 = vmatprep.subr.mxu0 0.0
  %2201 = vmatpush1.xpose.msra.mxu0 0.0
  %2202 = vmatprep.subr.mxu0 0.0
  %2203 = vmatpush1.xpose.msra.mxu0 0.0
  %2204 = vmatprep.subr.mxu0 0.0
  %2205 = vmatpush1.xpose.msra.mxu0 0.0
  %2206 = vmatprep.subr.mxu0 0.0
  %2207 = vmatpush1.xpose.msra.mxu0 0.0
  %2208 = vmatprep.subr.mxu0 0.0
  %2209 = vmatpush1.xpose.msra.mxu0 %v872
  %2210 = vmatprep.subr.mxu0 0.0
  %2211 = vmatpush1.xpose.msra.mxu0 %v869
  %2212 = vmatprep.subr.mxu0 0.0
  %2213 = vmatpush1.xpose.msra.mxu0 %v866
  %2214 = vmatprep.subr.mxu0 0.0
  %2215 = vmatpush1.xpose.msra.mxu0 %v863
  %2216 = vmatprep.subr.mxu0 0.0
  %2217 = vmatpush1.xpose.msra.mxu0 %v860
  %2218 = vmatprep.subr.mxu0 0.0
  %2219 = vmatpush1.xpose.msra.mxu0 %v857
  %2220 = vmatprep.subr.mxu0 0.0
  %2221 = vmatpush1.xpose.msra.mxu0 %v854
  %2222 = vmatprep.subr.mxu0 0.0
  %2223 = vmatpush1.xpose.msra.mxu0 %v851
  %2224 = vmatprep.subr.mxu0 0.0
  %2225 = vmatpush2.xpose.msra.mxu0 0.0
  %2226 = vmatprep.subr.mxu0 0.0
  %2227 = vmatpush2.xpose.msra.mxu0 0.0
  %2228 = vmatprep.subr.mxu0 0.0
  %2229 = vmatpush2.xpose.msra.mxu0 0.0
  %2230 = vmatprep.subr.mxu0 0.0
  %2231 = vmatpush2.xpose.msra.mxu0 0.0
  %2232 = vmatprep.subr.mxu0 0.0
  %2233 = vmatpush2.xpose.msra.mxu0 0.0
  %2234 = vmatprep.subr.mxu0 0.0
  %2235 = vmatpush2.xpose.msra.mxu0 0.0
  %2236 = vmatprep.subr.mxu0 0.0
  %2237 = vmatpush2.xpose.msra.mxu0 0.0
  %2238 = vmatprep.subr.mxu0 0.0
  %2239 = vmatpush2.xpose.msra.mxu0 0.0
  %2240 = vmatprep.subr.mxu0 0.0
  %2241 = vmatpush2.xpose.msra.mxu0 0.0
  %2242 = vmatprep.subr.mxu0 0.0
  %2243 = vmatpush2.xpose.msra.mxu0 0.0
  %2244 = vmatprep.subr.mxu0 0.0
  %2245 = vmatpush2.xpose.msra.mxu0 0.0
  %2246 = vmatprep.subr.mxu0 0.0
  %2247 = vmatpush2.xpose.msra.mxu0 0.0
  %2248 = vmatprep.subr.mxu0 0.0
  %2249 = vmatpush2.xpose.msra.mxu0 0.0
  %2250 = vmatprep.subr.mxu0 0.0
  %2251 = vmatpush2.xpose.msra.mxu0 0.0
  %2252 = vmatprep.subr.mxu0 0.0
  %2253 = vmatpush2.xpose.msra.mxu0 0.0
  %2254 = vmatprep.subr.mxu0 0.0
  %2255 = vmatpush2.xpose.msra.mxu0 0.0
  %2256 = vmatprep.mubr.f32.mxu0 0.0
  %2257 = vmatmul.mubr.f32.gmra.mxu0 %v2187
  %v2258 = vpop.f32.mrf.mxu0
  %v2259 = vadd.f32 %v1693, %v2258
  %v2260 = vpop.f32.mrf.mxu0
  %2261 = vmatprep.mubr.f32.mxu0 0.0
  %2262 = vmatmul.mubr.f32.gmra.mxu0 %v2190
  %v2263 = vpop.f32.mrf.mxu0
  %v2264 = vadd.f32 %v1698, %v2263
  %v2265 = vpop.f32.mrf.mxu0
  %2266 = vdwg.mxu0
  %v2268 = vsel %vm213, %v1680, 0
  %v2271 = vsel %vm213, %v1685, 0
  %2273 = vmatprep.subr.mxu0 0.0
  %2274 = vmatpush1.xpose.msra.mxu0 0.0
  %2275 = vmatprep.subr.mxu0 0.0
  %2276 = vmatpush1.xpose.msra.mxu0 0.0
  %2277 = vmatprep.subr.mxu0 0.0
  %2278 = vmatpush1.xpose.msra.mxu0 0.0
  %2279 = vmatprep.subr.mxu0 0.0
  %2280 = vmatpush1.xpose.msra.mxu0 0.0
  %2281 = vmatprep.subr.mxu0 0.0
  %2282 = vmatpush1.xpose.msra.mxu0 0.0
  %2283 = vmatprep.subr.mxu0 0.0
  %2284 = vmatpush1.xpose.msra.mxu0 0.0
  %2285 = vmatprep.subr.mxu0 0.0
  %2286 = vmatpush1.xpose.msra.mxu0 0.0
  %2287 = vmatprep.subr.mxu0 0.0
  %2288 = vmatpush1.xpose.msra.mxu0 0.0
  %2289 = vmatprep.subr.mxu0 0.0
  %2290 = vmatpush1.xpose.msra.mxu0 %v977
  %2291 = vmatprep.subr.mxu0 0.0
  %2292 = vmatpush1.xpose.msra.mxu0 %v974
  %2293 = vmatprep.subr.mxu0 0.0
  %2294 = vmatpush1.xpose.msra.mxu0 %v971
  %2295 = vmatprep.subr.mxu0 0.0
  %2296 = vmatpush1.xpose.msra.mxu0 %v968
  %2297 = vmatprep.subr.mxu0 0.0
  %2298 = vmatpush1.xpose.msra.mxu0 %v965
  %2299 = vmatprep.subr.mxu0 0.0
  %2300 = vmatpush1.xpose.msra.mxu0 %v962
  %2301 = vmatprep.subr.mxu0 0.0
  %2302 = vmatpush1.xpose.msra.mxu0 %v959
  %2303 = vmatprep.subr.mxu0 0.0
  %2304 = vmatpush1.xpose.msra.mxu0 %v956
  %2305 = vmatprep.subr.mxu0 0.0
  %2306 = vmatpush2.xpose.msra.mxu0 0.0
  %2307 = vmatprep.subr.mxu0 0.0
  %2308 = vmatpush2.xpose.msra.mxu0 0.0
  %2309 = vmatprep.subr.mxu0 0.0
  %2310 = vmatpush2.xpose.msra.mxu0 0.0
  %2311 = vmatprep.subr.mxu0 0.0
  %2312 = vmatpush2.xpose.msra.mxu0 0.0
  %2313 = vmatprep.subr.mxu0 0.0
  %2314 = vmatpush2.xpose.msra.mxu0 0.0
  %2315 = vmatprep.subr.mxu0 0.0
  %2316 = vmatpush2.xpose.msra.mxu0 0.0
  %2317 = vmatprep.subr.mxu0 0.0
  %2318 = vmatpush2.xpose.msra.mxu0 0.0
  %2319 = vmatprep.subr.mxu0 0.0
  %2320 = vmatpush2.xpose.msra.mxu0 0.0
  %2321 = vmatprep.subr.mxu0 0.0
  %2322 = vmatpush2.xpose.msra.mxu0 0.0
  %2323 = vmatprep.subr.mxu0 0.0
  %2324 = vmatpush2.xpose.msra.mxu0 0.0
  %2325 = vmatprep.subr.mxu0 0.0
  %2326 = vmatpush2.xpose.msra.mxu0 0.0
  %2327 = vmatprep.subr.mxu0 0.0
  %2328 = vmatpush2.xpose.msra.mxu0 0.0
  %2329 = vmatprep.subr.mxu0 0.0
  %2330 = vmatpush2.xpose.msra.mxu0 0.0
  %2331 = vmatprep.subr.mxu0 0.0
  %2332 = vmatpush2.xpose.msra.mxu0 0.0
  %2333 = vmatprep.subr.mxu0 0.0
  %2334 = vmatpush2.xpose.msra.mxu0 0.0
  %2335 = vmatprep.subr.mxu0 0.0
  %2336 = vmatpush2.xpose.msra.mxu0 0.0
  %2337 = vmatprep.mubr.f32.mxu0 0.0
  %2338 = vmatmul.mubr.f32.gmra.mxu0 %v2268
  %v2339 = vpop.f32.mrf.mxu0
  %v2340 = vadd.f32 %v1693, %v2339
  %v2341 = vpop.f32.mrf.mxu0
  %2342 = vmatprep.mubr.f32.mxu0 0.0
  %2343 = vmatmul.mubr.f32.gmra.mxu0 %v2271
  %v2344 = vpop.f32.mrf.mxu0
  %v2345 = vadd.f32 %v1698, %v2344
  %v2346 = vpop.f32.mrf.mxu0
  %2347 = vdwg.mxu0
  %v2348 = vld [vmem:[%s6] sm:$0xff]
  %v2349 = vld [vmem:[%s6 + $0x8] sm:$0xff]
  %v2350 = vld [vmem:[%s6 + $0x10] sm:$0xff]
  %v2351 = vld [vmem:[%s6 + $0x18] sm:$0xff]
  %v2352 = vld [vmem:[%s6 + $0x20] sm:$0xff]
  %v2353 = vld [vmem:[%s6 + $0x28] sm:$0xff]
  %v2354 = vld [vmem:[%s6 + $0x30] sm:$0xff]
  %v2355 = vld [vmem:[%s6 + $0x38] sm:$0xff]
  %s2356 = scalar_lea.vmem %s6, 64
  %v2357 = vld [vmem:[%s2356] sm:$0xff]
  %v2358 = vld [vmem:[%s2356 + $0x8] sm:$0xff]
  %v2359 = vld [vmem:[%s2356 + $0x10] sm:$0xff]
  %v2360 = vld [vmem:[%s2356 + $0x18] sm:$0xff]
  %v2361 = vld [vmem:[%s2356 + $0x20] sm:$0xff]
  %v2362 = vld [vmem:[%s2356 + $0x28] sm:$0xff]
  %v2363 = vld [vmem:[%s2356 + $0x30] sm:$0xff]
  %v2364 = vld [vmem:[%s2356 + $0x38] sm:$0xff]
  %v2373 = vrot.slane %v1773, 1
  %vm2374 = vcmask 1041409
  %v2375 = vsel %vm2374, %v1854, %v2373
  %v2376 = vrot.slane %v1935, 7
  %vm2377 = vcmask 1042434
  %v2378 = vsel %vm2377, %v2376, %v2375
  %v2379 = vrot.slane %v2016, 6
  %vm2380 = vcmask 1043459
  %v2381 = vsel %vm2380, %v2379, %v2378
  %v2382 = vrot.slane %v2097, 5
  %vm2383 = vcmask 1044484
  %v2384 = vsel %vm2383, %v2382, %v2381
  %v2385 = vrot.slane %v2178, 4
  %vm2386 = vcmask 1045509
  %v2387 = vsel %vm2386, %v2385, %v2384
  %v2388 = vrot.slane %v2259, 3
  %vm2389 = vcmask 1046534
  %v2390 = vsel %vm2389, %v2388, %v2387
  %v2391 = vrot.slane %v2340, 2
  %vm2392 = vcmask 1047559
  %v2393 = vsel %vm2392, %v2391, %v2390
  %v2394 = vsel %vm213, %v2393, 0
  %2396 = vmatprep.subr.mxu0 0.0
  %2397 = vmatpush1.msra.mxu0 0.0
  %2398 = vmatprep.subr.mxu0 0.0
  %2399 = vmatpush1.msra.mxu0 0.0
  %2400 = vmatprep.subr.mxu0 0.0
  %2401 = vmatpush1.msra.mxu0 0.0
  %2402 = vmatprep.subr.mxu0 0.0
  %2403 = vmatpush1.msra.mxu0 0.0
  %2404 = vmatprep.subr.mxu0 0.0
  %2405 = vmatpush1.msra.mxu0 0.0
  %2406 = vmatprep.subr.mxu0 0.0
  %2407 = vmatpush1.msra.mxu0 0.0
  %2408 = vmatprep.subr.mxu0 0.0
  %2409 = vmatpush1.msra.mxu0 0.0
  %2410 = vmatprep.subr.mxu0 0.0
  %2411 = vmatpush1.msra.mxu0 0.0
  %2412 = vmatprep.subr.mxu0 0.0
  %2413 = vmatpush1.msra.mxu0 %v2364
  %2414 = vmatprep.subr.mxu0 0.0
  %2415 = vmatpush1.msra.mxu0 %v2363
  %2416 = vmatprep.subr.mxu0 0.0
  %2417 = vmatpush1.msra.mxu0 %v2362
  %2418 = vmatprep.subr.mxu0 0.0
  %2419 = vmatpush1.msra.mxu0 %v2361
  %2420 = vmatprep.subr.mxu0 0.0
  %2421 = vmatpush1.msra.mxu0 %v2360
  %2422 = vmatprep.subr.mxu0 0.0
  %2423 = vmatpush1.msra.mxu0 %v2359
  %2424 = vmatprep.subr.mxu0 0.0
  %2425 = vmatpush1.msra.mxu0 %v2358
  %2426 = vmatprep.subr.mxu0 0.0
  %2427 = vmatpush1.msra.mxu0 %v2357
  %2428 = vmatprep.subr.mxu0 0.0
  %2429 = vmatpush2.msra.mxu0 0.0
  %2430 = vmatprep.subr.mxu0 0.0
  %2431 = vmatpush2.msra.mxu0 0.0
  %2432 = vmatprep.subr.mxu0 0.0
  %2433 = vmatpush2.msra.mxu0 0.0
  %2434 = vmatprep.subr.mxu0 0.0
  %2435 = vmatpush2.msra.mxu0 0.0
  %2436 = vmatprep.subr.mxu0 0.0
  %2437 = vmatpush2.msra.mxu0 0.0
  %2438 = vmatprep.subr.mxu0 0.0
  %2439 = vmatpush2.msra.mxu0 0.0
  %2440 = vmatprep.subr.mxu0 0.0
  %2441 = vmatpush2.msra.mxu0 0.0
  %2442 = vmatprep.subr.mxu0 0.0
  %2443 = vmatpush2.msra.mxu0 0.0
  %2444 = vmatprep.subr.mxu0 0.0
  %2445 = vmatpush2.msra.mxu0 0.0
  %2446 = vmatprep.subr.mxu0 0.0
  %2447 = vmatpush2.msra.mxu0 0.0
  %2448 = vmatprep.subr.mxu0 0.0
  %2449 = vmatpush2.msra.mxu0 0.0
  %2450 = vmatprep.subr.mxu0 0.0
  %2451 = vmatpush2.msra.mxu0 0.0
  %2452 = vmatprep.subr.mxu0 0.0
  %2453 = vmatpush2.msra.mxu0 0.0
  %2454 = vmatprep.subr.mxu0 0.0
  %2455 = vmatpush2.msra.mxu0 0.0
  %2456 = vmatprep.subr.mxu0 0.0
  %2457 = vmatpush2.msra.mxu0 0.0
  %2458 = vmatprep.subr.mxu0 0.0
  %2459 = vmatpush2.msra.mxu0 0.0
  %2460 = vmatprep.mubr.f32.mxu0 0.0
  %2461 = vmatmul.mubr.f32.gmra.mxu0 %v2394
  %v2462 = vpop.f32.mrf.mxu0
  %v2463 = vadd.f32 0.0, %v2462
  %v2464 = vpop.f32.mrf.mxu0
  %2465 = vdwg.mxu0
  %v2466 = vrot.slane %v1854, 7
  %v2467 = vsel %vm2374, %v2466, %v1773
  %v2468 = vrot.slane %v1935, 6
  %v2469 = vsel %vm2377, %v2468, %v2467
  %v2470 = vrot.slane %v2016, 5
  %v2471 = vsel %vm2380, %v2470, %v2469
  %v2472 = vrot.slane %v2097, 4
  %v2473 = vsel %vm2383, %v2472, %v2471
  %v2474 = vrot.slane %v2178, 3
  %v2475 = vsel %vm2386, %v2474, %v2473
  %v2476 = vrot.slane %v2259, 2
  %v2477 = vsel %vm2389, %v2476, %v2475
  %v2478 = vrot.slane %v2340, 1
  %v2479 = vsel %vm2392, %v2478, %v2477
  %v2480 = vsel %vm213, %v2479, 0
  %2482 = vmatprep.subr.mxu0 0.0
  %2483 = vmatpush1.msra.mxu0 0.0
  %2484 = vmatprep.subr.mxu0 0.0
  %2485 = vmatpush1.msra.mxu0 0.0
  %2486 = vmatprep.subr.mxu0 0.0
  %2487 = vmatpush1.msra.mxu0 0.0
  %2488 = vmatprep.subr.mxu0 0.0
  %2489 = vmatpush1.msra.mxu0 0.0
  %2490 = vmatprep.subr.mxu0 0.0
  %2491 = vmatpush1.msra.mxu0 0.0
  %2492 = vmatprep.subr.mxu0 0.0
  %2493 = vmatpush1.msra.mxu0 0.0
  %2494 = vmatprep.subr.mxu0 0.0
  %2495 = vmatpush1.msra.mxu0 0.0
  %2496 = vmatprep.subr.mxu0 0.0
  %2497 = vmatpush1.msra.mxu0 0.0
  %2498 = vmatprep.subr.mxu0 0.0
  %2499 = vmatpush1.msra.mxu0 %v2355
  %2500 = vmatprep.subr.mxu0 0.0
  %2501 = vmatpush1.msra.mxu0 %v2354
  %2502 = vmatprep.subr.mxu0 0.0
  %2503 = vmatpush1.msra.mxu0 %v2353
  %2504 = vmatprep.subr.mxu0 0.0
  %2505 = vmatpush1.msra.mxu0 %v2352
  %2506 = vmatprep.subr.mxu0 0.0
  %2507 = vmatpush1.msra.mxu0 %v2351
  %2508 = vmatprep.subr.mxu0 0.0
  %2509 = vmatpush1.msra.mxu0 %v2350
  %2510 = vmatprep.subr.mxu0 0.0
  %2511 = vmatpush1.msra.mxu0 %v2349
  %2512 = vmatprep.subr.mxu0 0.0
  %2513 = vmatpush1.msra.mxu0 %v2348
  %2514 = vmatprep.subr.mxu0 0.0
  %2515 = vmatpush2.msra.mxu0 0.0
  %2516 = vmatprep.subr.mxu0 0.0
  %2517 = vmatpush2.msra.mxu0 0.0
  %2518 = vmatprep.subr.mxu0 0.0
  %2519 = vmatpush2.msra.mxu0 0.0
  %2520 = vmatprep.subr.mxu0 0.0
  %2521 = vmatpush2.msra.mxu0 0.0
  %2522 = vmatprep.subr.mxu0 0.0
  %2523 = vmatpush2.msra.mxu0 0.0
  %2524 = vmatprep.subr.mxu0 0.0
  %2525 = vmatpush2.msra.mxu0 0.0
  %2526 = vmatprep.subr.mxu0 0.0
  %2527 = vmatpush2.msra.mxu0 0.0
  %2528 = vmatprep.subr.mxu0 0.0
  %2529 = vmatpush2.msra.mxu0 0.0
  %2530 = vmatprep.subr.mxu0 0.0
  %2531 = vmatpush2.msra.mxu0 0.0
  %2532 = vmatprep.subr.mxu0 0.0
  %2533 = vmatpush2.msra.mxu0 0.0
  %2534 = vmatprep.subr.mxu0 0.0
  %2535 = vmatpush2.msra.mxu0 0.0
  %2536 = vmatprep.subr.mxu0 0.0
  %2537 = vmatpush2.msra.mxu0 0.0
  %2538 = vmatprep.subr.mxu0 0.0
  %2539 = vmatpush2.msra.mxu0 0.0
  %2540 = vmatprep.subr.mxu0 0.0
  %2541 = vmatpush2.msra.mxu0 0.0
  %2542 = vmatprep.subr.mxu0 0.0
  %2543 = vmatpush2.msra.mxu0 0.0
  %2544 = vmatprep.subr.mxu0 0.0
  %2545 = vmatpush2.msra.mxu0 0.0
  %2546 = vmatprep.mubr.f32.mxu0 0.0
  %2547 = vmatmul.mubr.f32.gmra.mxu0 %v2480
  %v2548 = vpop.f32.mrf.mxu0
  %v2549 = vadd.f32 %v2463, %v2548
  %v2550 = vpop.f32.mrf.mxu0
  %2551 = vdwg.mxu0
  %s2552 = scalar_lea.vmem %s6, 128
  %v2553 = vld [vmem:[%s2552] sm:$0xff]
  %v2554 = vld [vmem:[%s2552 + $0x8] sm:$0xff]
  %v2555 = vld [vmem:[%s2552 + $0x10] sm:$0xff]
  %v2556 = vld [vmem:[%s2552 + $0x18] sm:$0xff]
  %v2557 = vld [vmem:[%s2552 + $0x20] sm:$0xff]
  %v2558 = vld [vmem:[%s2552 + $0x28] sm:$0xff]
  %v2559 = vld [vmem:[%s2552 + $0x30] sm:$0xff]
  %v2560 = vld [vmem:[%s2552 + $0x38] sm:$0xff]
  %v2561 = vrot.slane %v1773, 2
  %v2562 = vrot.slane %v1854, 1
  %v2563 = vsel %vm2374, %v2562, %v2561
  %v2564 = vsel %vm2377, %v1935, %v2563
  %v2565 = vrot.slane %v2016, 7
  %v2566 = vsel %vm2380, %v2565, %v2564
  %v2567 = vrot.slane %v2097, 6
  %v2568 = vsel %vm2383, %v2567, %v2566
  %v2569 = vrot.slane %v2178, 5
  %v2570 = vsel %vm2386, %v2569, %v2568
  %v2571 = vrot.slane %v2259, 4
  %v2572 = vsel %vm2389, %v2571, %v2570
  %v2573 = vrot.slane %v2340, 3
  %v2574 = vsel %vm2392, %v2573, %v2572
  %v2575 = vsel %vm213, %v2574, 0
  %2577 = vmatprep.subr.mxu0 0.0
  %2578 = vmatpush1.msra.mxu0 0.0
  %2579 = vmatprep.subr.mxu0 0.0
  %2580 = vmatpush1.msra.mxu0 0.0
  %2581 = vmatprep.subr.mxu0 0.0
  %2582 = vmatpush1.msra.mxu0 0.0
  %2583 = vmatprep.subr.mxu0 0.0
  %2584 = vmatpush1.msra.mxu0 0.0
  %2585 = vmatprep.subr.mxu0 0.0
  %2586 = vmatpush1.msra.mxu0 0.0
  %2587 = vmatprep.subr.mxu0 0.0
  %2588 = vmatpush1.msra.mxu0 0.0
  %2589 = vmatprep.subr.mxu0 0.0
  %2590 = vmatpush1.msra.mxu0 0.0
  %2591 = vmatprep.subr.mxu0 0.0
  %2592 = vmatpush1.msra.mxu0 0.0
  %2593 = vmatprep.subr.mxu0 0.0
  %2594 = vmatpush1.msra.mxu0 %v2560
  %2595 = vmatprep.subr.mxu0 0.0
  %2596 = vmatpush1.msra.mxu0 %v2559
  %2597 = vmatprep.subr.mxu0 0.0
  %2598 = vmatpush1.msra.mxu0 %v2558
  %2599 = vmatprep.subr.mxu0 0.0
  %2600 = vmatpush1.msra.mxu0 %v2557
  %2601 = vmatprep.subr.mxu0 0.0
  %2602 = vmatpush1.msra.mxu0 %v2556
  %2603 = vmatprep.subr.mxu0 0.0
  %2604 = vmatpush1.msra.mxu0 %v2555
  %2605 = vmatprep.subr.mxu0 0.0
  %2606 = vmatpush1.msra.mxu0 %v2554
  %2607 = vmatprep.subr.mxu0 0.0
  %2608 = vmatpush1.msra.mxu0 %v2553
  %2609 = vmatprep.subr.mxu0 0.0
  %2610 = vmatpush2.msra.mxu0 0.0
  %2611 = vmatprep.subr.mxu0 0.0
  %2612 = vmatpush2.msra.mxu0 0.0
  %2613 = vmatprep.subr.mxu0 0.0
  %2614 = vmatpush2.msra.mxu0 0.0
  %2615 = vmatprep.subr.mxu0 0.0
  %2616 = vmatpush2.msra.mxu0 0.0
  %2617 = vmatprep.subr.mxu0 0.0
  %2618 = vmatpush2.msra.mxu0 0.0
  %2619 = vmatprep.subr.mxu0 0.0
  %2620 = vmatpush2.msra.mxu0 0.0
  %2621 = vmatprep.subr.mxu0 0.0
  %2622 = vmatpush2.msra.mxu0 0.0
  %2623 = vmatprep.subr.mxu0 0.0
  %2624 = vmatpush2.msra.mxu0 0.0
  %2625 = vmatprep.subr.mxu0 0.0
  %2626 = vmatpush2.msra.mxu0 0.0
  %2627 = vmatprep.subr.mxu0 0.0
  %2628 = vmatpush2.msra.mxu0 0.0
  %2629 = vmatprep.subr.mxu0 0.0
  %2630 = vmatpush2.msra.mxu0 0.0
  %2631 = vmatprep.subr.mxu0 0.0
  %2632 = vmatpush2.msra.mxu0 0.0
  %2633 = vmatprep.subr.mxu0 0.0
  %2634 = vmatpush2.msra.mxu0 0.0
  %2635 = vmatprep.subr.mxu0 0.0
  %2636 = vmatpush2.msra.mxu0 0.0
  %2637 = vmatprep.subr.mxu0 0.0
  %2638 = vmatpush2.msra.mxu0 0.0
  %2639 = vmatprep.subr.mxu0 0.0
  %2640 = vmatpush2.msra.mxu0 0.0
  %2641 = vmatprep.mubr.f32.mxu0 0.0
  %2642 = vmatmul.mubr.f32.gmra.mxu0 %v2575
  %v2643 = vpop.f32.mrf.mxu0
  %v2644 = vadd.f32 0.0, %v2643
  %v2645 = vpop.f32.mrf.mxu0
  %2646 = vdwg.mxu0
  %v2647 = vadd.f32 %v2549, %v2644
  %s2648 = scalar_lea.vmem %s6, 192
  %v2649 = vld [vmem:[%s2648] sm:$0xff]
  %v2650 = vld [vmem:[%s2648 + $0x8] sm:$0xff]
  %v2651 = vld [vmem:[%s2648 + $0x10] sm:$0xff]
  %v2652 = vld [vmem:[%s2648 + $0x18] sm:$0xff]
  %v2653 = vld [vmem:[%s2648 + $0x20] sm:$0xff]
  %v2654 = vld [vmem:[%s2648 + $0x28] sm:$0xff]
  %v2655 = vld [vmem:[%s2648 + $0x30] sm:$0xff]
  %v2656 = vld [vmem:[%s2648 + $0x38] sm:$0xff]
  %v2657 = vrot.slane %v1773, 3
  %v2658 = vrot.slane %v1854, 2
  %v2659 = vsel %vm2374, %v2658, %v2657
  %v2660 = vrot.slane %v1935, 1
  %v2661 = vsel %vm2377, %v2660, %v2659
  %v2662 = vsel %vm2380, %v2016, %v2661
  %v2663 = vrot.slane %v2097, 7
  %v2664 = vsel %vm2383, %v2663, %v2662
  %v2665 = vrot.slane %v2178, 6
  %v2666 = vsel %vm2386, %v2665, %v2664
  %v2667 = vrot.slane %v2259, 5
  %v2668 = vsel %vm2389, %v2667, %v2666
  %v2669 = vrot.slane %v2340, 4
  %v2670 = vsel %vm2392, %v2669, %v2668
  %v2671 = vsel %vm213, %v2670, 0
  %2673 = vmatprep.subr.mxu0 0.0
  %2674 = vmatpush1.msra.mxu0 0.0
  %2675 = vmatprep.subr.mxu0 0.0
  %2676 = vmatpush1.msra.mxu0 0.0
  %2677 = vmatprep.subr.mxu0 0.0
  %2678 = vmatpush1.msra.mxu0 0.0
  %2679 = vmatprep.subr.mxu0 0.0
  %2680 = vmatpush1.msra.mxu0 0.0
  %2681 = vmatprep.subr.mxu0 0.0
  %2682 = vmatpush1.msra.mxu0 0.0
  %2683 = vmatprep.subr.mxu0 0.0
  %2684 = vmatpush1.msra.mxu0 0.0
  %2685 = vmatprep.subr.mxu0 0.0
  %2686 = vmatpush1.msra.mxu0 0.0
  %2687 = vmatprep.subr.mxu0 0.0
  %2688 = vmatpush1.msra.mxu0 0.0
  %2689 = vmatprep.subr.mxu0 0.0
  %2690 = vmatpush1.msra.mxu0 %v2656
  %2691 = vmatprep.subr.mxu0 0.0
  %2692 = vmatpush1.msra.mxu0 %v2655
  %2693 = vmatprep.subr.mxu0 0.0
  %2694 = vmatpush1.msra.mxu0 %v2654
  %2695 = vmatprep.subr.mxu0 0.0
  %2696 = vmatpush1.msra.mxu0 %v2653
  %2697 = vmatprep.subr.mxu0 0.0
  %2698 = vmatpush1.msra.mxu0 %v2652
  %2699 = vmatprep.subr.mxu0 0.0
  %2700 = vmatpush1.msra.mxu0 %v2651
  %2701 = vmatprep.subr.mxu0 0.0
  %2702 = vmatpush1.msra.mxu0 %v2650
  %2703 = vmatprep.subr.mxu0 0.0
  %2704 = vmatpush1.msra.mxu0 %v2649
  %2705 = vmatprep.subr.mxu0 0.0
  %2706 = vmatpush2.msra.mxu0 0.0
  %2707 = vmatprep.subr.mxu0 0.0
  %2708 = vmatpush2.msra.mxu0 0.0
  %2709 = vmatprep.subr.mxu0 0.0
  %2710 = vmatpush2.msra.mxu0 0.0
  %2711 = vmatprep.subr.mxu0 0.0
  %2712 = vmatpush2.msra.mxu0 0.0
  %2713 = vmatprep.subr.mxu0 0.0
  %2714 = vmatpush2.msra.mxu0 0.0
  %2715 = vmatprep.subr.mxu0 0.0
  %2716 = vmatpush2.msra.mxu0 0.0
  %2717 = vmatprep.subr.mxu0 0.0
  %2718 = vmatpush2.msra.mxu0 0.0
  %2719 = vmatprep.subr.mxu0 0.0
  %2720 = vmatpush2.msra.mxu0 0.0
  %2721 = vmatprep.subr.mxu0 0.0
  %2722 = vmatpush2.msra.mxu0 0.0
  %2723 = vmatprep.subr.mxu0 0.0
  %2724 = vmatpush2.msra.mxu0 0.0
  %2725 = vmatprep.subr.mxu0 0.0
  %2726 = vmatpush2.msra.mxu0 0.0
  %2727 = vmatprep.subr.mxu0 0.0
  %2728 = vmatpush2.msra.mxu0 0.0
  %2729 = vmatprep.subr.mxu0 0.0
  %2730 = vmatpush2.msra.mxu0 0.0
  %2731 = vmatprep.subr.mxu0 0.0
  %2732 = vmatpush2.msra.mxu0 0.0
  %2733 = vmatprep.subr.mxu0 0.0
  %2734 = vmatpush2.msra.mxu0 0.0
  %2735 = vmatprep.subr.mxu0 0.0
  %2736 = vmatpush2.msra.mxu0 0.0
  %2737 = vmatprep.mubr.f32.mxu0 0.0
  %2738 = vmatmul.mubr.f32.gmra.mxu0 %v2671
  %v2739 = vpop.f32.mrf.mxu0
  %v2740 = vadd.f32 0.0, %v2739
  %v2741 = vpop.f32.mrf.mxu0
  %2742 = vdwg.mxu0
  %v2743 = vadd.f32 %v2647, %v2740
  %s2744 = scalar_lea.vmem %s6, 256
  %v2745 = vld [vmem:[%s2744] sm:$0xff]
  %v2746 = vld [vmem:[%s2744 + $0x8] sm:$0xff]
  %v2747 = vld [vmem:[%s2744 + $0x10] sm:$0xff]
  %v2748 = vld [vmem:[%s2744 + $0x18] sm:$0xff]
  %v2749 = vld [vmem:[%s2744 + $0x20] sm:$0xff]
  %v2750 = vld [vmem:[%s2744 + $0x28] sm:$0xff]
  %v2751 = vld [vmem:[%s2744 + $0x30] sm:$0xff]
  %v2752 = vld [vmem:[%s2744 + $0x38] sm:$0xff]
  %v2753 = vrot.slane %v1773, 4
  %v2754 = vrot.slane %v1854, 3
  %v2755 = vsel %vm2374, %v2754, %v2753
  %v2756 = vrot.slane %v1935, 2
  %v2757 = vsel %vm2377, %v2756, %v2755
  %v2758 = vrot.slane %v2016, 1
  %v2759 = vsel %vm2380, %v2758, %v2757
  %v2760 = vsel %vm2383, %v2097, %v2759
  %v2761 = vrot.slane %v2178, 7
  %v2762 = vsel %vm2386, %v2761, %v2760
  %v2763 = vrot.slane %v2259, 6
  %v2764 = vsel %vm2389, %v2763, %v2762
  %v2765 = vrot.slane %v2340, 5
  %v2766 = vsel %vm2392, %v2765, %v2764
  %v2767 = vsel %vm213, %v2766, 0
  %2769 = vmatprep.subr.mxu0 0.0
  %2770 = vmatpush1.msra.mxu0 0.0
  %2771 = vmatprep.subr.mxu0 0.0
  %2772 = vmatpush1.msra.mxu0 0.0
  %2773 = vmatprep.subr.mxu0 0.0
  %2774 = vmatpush1.msra.mxu0 0.0
  %2775 = vmatprep.subr.mxu0 0.0
  %2776 = vmatpush1.msra.mxu0 0.0
  %2777 = vmatprep.subr.mxu0 0.0
  %2778 = vmatpush1.msra.mxu0 0.0
  %2779 = vmatprep.subr.mxu0 0.0
  %2780 = vmatpush1.msra.mxu0 0.0
  %2781 = vmatprep.subr.mxu0 0.0
  %2782 = vmatpush1.msra.mxu0 0.0
  %2783 = vmatprep.subr.mxu0 0.0
  %2784 = vmatpush1.msra.mxu0 0.0
  %2785 = vmatprep.subr.mxu0 0.0
  %2786 = vmatpush1.msra.mxu0 %v2752
  %2787 = vmatprep.subr.mxu0 0.0
  %2788 = vmatpush1.msra.mxu0 %v2751
  %2789 = vmatprep.subr.mxu0 0.0
  %2790 = vmatpush1.msra.mxu0 %v2750
  %2791 = vmatprep.subr.mxu0 0.0
  %2792 = vmatpush1.msra.mxu0 %v2749
  %2793 = vmatprep.subr.mxu0 0.0
  %2794 = vmatpush1.msra.mxu0 %v2748
  %2795 = vmatprep.subr.mxu0 0.0
  %2796 = vmatpush1.msra.mxu0 %v2747
  %2797 = vmatprep.subr.mxu0 0.0
  %2798 = vmatpush1.msra.mxu0 %v2746
  %2799 = vmatprep.subr.mxu0 0.0
  %2800 = vmatpush1.msra.mxu0 %v2745
  %2801 = vmatprep.subr.mxu0 0.0
  %2802 = vmatpush2.msra.mxu0 0.0
  %2803 = vmatprep.subr.mxu0 0.0
  %2804 = vmatpush2.msra.mxu0 0.0
  %2805 = vmatprep.subr.mxu0 0.0
  %2806 = vmatpush2.msra.mxu0 0.0
  %2807 = vmatprep.subr.mxu0 0.0
  %2808 = vmatpush2.msra.mxu0 0.0
  %2809 = vmatprep.subr.mxu0 0.0
  %2810 = vmatpush2.msra.mxu0 0.0
  %2811 = vmatprep.subr.mxu0 0.0
  %2812 = vmatpush2.msra.mxu0 0.0
  %2813 = vmatprep.subr.mxu0 0.0
  %2814 = vmatpush2.msra.mxu0 0.0
  %2815 = vmatprep.subr.mxu0 0.0
  %2816 = vmatpush2.msra.mxu0 0.0
  %2817 = vmatprep.subr.mxu0 0.0
  %2818 = vmatpush2.msra.mxu0 0.0
  %2819 = vmatprep.subr.mxu0 0.0
  %2820 = vmatpush2.msra.mxu0 0.0
  %2821 = vmatprep.subr.mxu0 0.0
  %2822 = vmatpush2.msra.mxu0 0.0
  %2823 = vmatprep.subr.mxu0 0.0
  %2824 = vmatpush2.msra.mxu0 0.0
  %2825 = vmatprep.subr.mxu0 0.0
  %2826 = vmatpush2.msra.mxu0 0.0
  %2827 = vmatprep.subr.mxu0 0.0
  %2828 = vmatpush2.msra.mxu0 0.0
  %2829 = vmatprep.subr.mxu0 0.0
  %2830 = vmatpush2.msra.mxu0 0.0
  %2831 = vmatprep.subr.mxu0 0.0
  %2832 = vmatpush2.msra.mxu0 0.0
  %2833 = vmatprep.mubr.f32.mxu0 0.0
  %2834 = vmatmul.mubr.f32.gmra.mxu0 %v2767
  %v2835 = vpop.f32.mrf.mxu0
  %v2836 = vadd.f32 0.0, %v2835
  %v2837 = vpop.f32.mrf.mxu0
  %2838 = vdwg.mxu0
  %v2839 = vadd.f32 %v2743, %v2836
  %s2840 = scalar_lea.vmem %s6, 320
  %v2841 = vld [vmem:[%s2840] sm:$0xff]
  %v2842 = vld [vmem:[%s2840 + $0x8] sm:$0xff]
  %v2843 = vld [vmem:[%s2840 + $0x10] sm:$0xff]
  %v2844 = vld [vmem:[%s2840 + $0x18] sm:$0xff]
  %v2845 = vld [vmem:[%s2840 + $0x20] sm:$0xff]
  %v2846 = vld [vmem:[%s2840 + $0x28] sm:$0xff]
  %v2847 = vld [vmem:[%s2840 + $0x30] sm:$0xff]
  %v2848 = vld [vmem:[%s2840 + $0x38] sm:$0xff]
  %v2849 = vrot.slane %v1773, 5
  %v2850 = vrot.slane %v1854, 4
  %v2851 = vsel %vm2374, %v2850, %v2849
  %v2852 = vrot.slane %v1935, 3
  %v2853 = vsel %vm2377, %v2852, %v2851
  %v2854 = vrot.slane %v2016, 2
  %v2855 = vsel %vm2380, %v2854, %v2853
  %v2856 = vrot.slane %v2097, 1
  %v2857 = vsel %vm2383, %v2856, %v2855
  %v2858 = vsel %vm2386, %v2178, %v2857
  %v2859 = vrot.slane %v2259, 7
  %v2860 = vsel %vm2389, %v2859, %v2858
  %v2861 = vrot.slane %v2340, 6
  %v2862 = vsel %vm2392, %v2861, %v2860
  %v2863 = vsel %vm213, %v2862, 0
  %2865 = vmatprep.subr.mxu0 0.0
  %2866 = vmatpush1.msra.mxu0 0.0
  %2867 = vmatprep.subr.mxu0 0.0
  %2868 = vmatpush1.msra.mxu0 0.0
  %2869 = vmatprep.subr.mxu0 0.0
  %2870 = vmatpush1.msra.mxu0 0.0
  %2871 = vmatprep.subr.mxu0 0.0
  %2872 = vmatpush1.msra.mxu0 0.0
  %2873 = vmatprep.subr.mxu0 0.0
  %2874 = vmatpush1.msra.mxu0 0.0
  %2875 = vmatprep.subr.mxu0 0.0
  %2876 = vmatpush1.msra.mxu0 0.0
  %2877 = vmatprep.subr.mxu0 0.0
  %2878 = vmatpush1.msra.mxu0 0.0
  %2879 = vmatprep.subr.mxu0 0.0
  %2880 = vmatpush1.msra.mxu0 0.0
  %2881 = vmatprep.subr.mxu0 0.0
  %2882 = vmatpush1.msra.mxu0 %v2848
  %2883 = vmatprep.subr.mxu0 0.0
  %2884 = vmatpush1.msra.mxu0 %v2847
  %2885 = vmatprep.subr.mxu0 0.0
  %2886 = vmatpush1.msra.mxu0 %v2846
  %2887 = vmatprep.subr.mxu0 0.0
  %2888 = vmatpush1.msra.mxu0 %v2845
  %2889 = vmatprep.subr.mxu0 0.0
  %2890 = vmatpush1.msra.mxu0 %v2844
  %2891 = vmatprep.subr.mxu0 0.0
  %2892 = vmatpush1.msra.mxu0 %v2843
  %2893 = vmatprep.subr.mxu0 0.0
  %2894 = vmatpush1.msra.mxu0 %v2842
  %2895 = vmatprep.subr.mxu0 0.0
  %2896 = vmatpush1.msra.mxu0 %v2841
  %2897 = vmatprep.subr.mxu0 0.0
  %2898 = vmatpush2.msra.mxu0 0.0
  %2899 = vmatprep.subr.mxu0 0.0
  %2900 = vmatpush2.msra.mxu0 0.0
  %2901 = vmatprep.subr.mxu0 0.0
  %2902 = vmatpush2.msra.mxu0 0.0
  %2903 = vmatprep.subr.mxu0 0.0
  %2904 = vmatpush2.msra.mxu0 0.0
  %2905 = vmatprep.subr.mxu0 0.0
  %2906 = vmatpush2.msra.mxu0 0.0
  %2907 = vmatprep.subr.mxu0 0.0
  %2908 = vmatpush2.msra.mxu0 0.0
  %2909 = vmatprep.subr.mxu0 0.0
  %2910 = vmatpush2.msra.mxu0 0.0
  %2911 = vmatprep.subr.mxu0 0.0
  %2912 = vmatpush2.msra.mxu0 0.0
  %2913 = vmatprep.subr.mxu0 0.0
  %2914 = vmatpush2.msra.mxu0 0.0
  %2915 = vmatprep.subr.mxu0 0.0
  %2916 = vmatpush2.msra.mxu0 0.0
  %2917 = vmatprep.subr.mxu0 0.0
  %2918 = vmatpush2.msra.mxu0 0.0
  %2919 = vmatprep.subr.mxu0 0.0
  %2920 = vmatpush2.msra.mxu0 0.0
  %2921 = vmatprep.subr.mxu0 0.0
  %2922 = vmatpush2.msra.mxu0 0.0
  %2923 = vmatprep.subr.mxu0 0.0
  %2924 = vmatpush2.msra.mxu0 0.0
  %2925 = vmatprep.subr.mxu0 0.0
  %2926 = vmatpush2.msra.mxu0 0.0
  %2927 = vmatprep.subr.mxu0 0.0
  %2928 = vmatpush2.msra.mxu0 0.0
  %2929 = vmatprep.mubr.f32.mxu0 0.0
  %2930 = vmatmul.mubr.f32.gmra.mxu0 %v2863
  %v2931 = vpop.f32.mrf.mxu0
  %v2932 = vadd.f32 0.0, %v2931
  %v2933 = vpop.f32.mrf.mxu0
  %2934 = vdwg.mxu0
  %v2935 = vadd.f32 %v2839, %v2932
  %s2936 = scalar_lea.vmem %s6, 384
  %v2937 = vld [vmem:[%s2936] sm:$0xff]
  %v2938 = vld [vmem:[%s2936 + $0x8] sm:$0xff]
  %v2939 = vld [vmem:[%s2936 + $0x10] sm:$0xff]
  %v2940 = vld [vmem:[%s2936 + $0x18] sm:$0xff]
  %v2941 = vld [vmem:[%s2936 + $0x20] sm:$0xff]
  %v2942 = vld [vmem:[%s2936 + $0x28] sm:$0xff]
  %v2943 = vld [vmem:[%s2936 + $0x30] sm:$0xff]
  %v2944 = vld [vmem:[%s2936 + $0x38] sm:$0xff]
  %v2945 = vrot.slane %v1773, 6
  %v2946 = vrot.slane %v1854, 5
  %v2947 = vsel %vm2374, %v2946, %v2945
  %v2948 = vrot.slane %v1935, 4
  %v2949 = vsel %vm2377, %v2948, %v2947
  %v2950 = vrot.slane %v2016, 3
  %v2951 = vsel %vm2380, %v2950, %v2949
  %v2952 = vrot.slane %v2097, 2
  %v2953 = vsel %vm2383, %v2952, %v2951
  %v2954 = vrot.slane %v2178, 1
  %v2955 = vsel %vm2386, %v2954, %v2953
  %v2956 = vsel %vm2389, %v2259, %v2955
  %v2957 = vrot.slane %v2340, 7
  %v2958 = vsel %vm2392, %v2957, %v2956
  %v2959 = vsel %vm213, %v2958, 0
  %2961 = vmatprep.subr.mxu0 0.0
  %2962 = vmatpush1.msra.mxu0 0.0
  %2963 = vmatprep.subr.mxu0 0.0
  %2964 = vmatpush1.msra.mxu0 0.0
  %2965 = vmatprep.subr.mxu0 0.0
  %2966 = vmatpush1.msra.mxu0 0.0
  %2967 = vmatprep.subr.mxu0 0.0
  %2968 = vmatpush1.msra.mxu0 0.0
  %2969 = vmatprep.subr.mxu0 0.0
  %2970 = vmatpush1.msra.mxu0 0.0
  %2971 = vmatprep.subr.mxu0 0.0
  %2972 = vmatpush1.msra.mxu0 0.0
  %2973 = vmatprep.subr.mxu0 0.0
  %2974 = vmatpush1.msra.mxu0 0.0
  %2975 = vmatprep.subr.mxu0 0.0
  %2976 = vmatpush1.msra.mxu0 0.0
  %2977 = vmatprep.subr.mxu0 0.0
  %2978 = vmatpush1.msra.mxu0 %v2944
  %2979 = vmatprep.subr.mxu0 0.0
  %2980 = vmatpush1.msra.mxu0 %v2943
  %2981 = vmatprep.subr.mxu0 0.0
  %2982 = vmatpush1.msra.mxu0 %v2942
  %2983 = vmatprep.subr.mxu0 0.0
  %2984 = vmatpush1.msra.mxu0 %v2941
  %2985 = vmatprep.subr.mxu0 0.0
  %2986 = vmatpush1.msra.mxu0 %v2940
  %2987 = vmatprep.subr.mxu0 0.0
  %2988 = vmatpush1.msra.mxu0 %v2939
  %2989 = vmatprep.subr.mxu0 0.0
  %2990 = vmatpush1.msra.mxu0 %v2938
  %2991 = vmatprep.subr.mxu0 0.0
  %2992 = vmatpush1.msra.mxu0 %v2937
  %2993 = vmatprep.subr.mxu0 0.0
  %2994 = vmatpush2.msra.mxu0 0.0
  %2995 = vmatprep.subr.mxu0 0.0
  %2996 = vmatpush2.msra.mxu0 0.0
  %2997 = vmatprep.subr.mxu0 0.0
  %2998 = vmatpush2.msra.mxu0 0.0
  %2999 = vmatprep.subr.mxu0 0.0
  %3000 = vmatpush2.msra.mxu0 0.0
  %3001 = vmatprep.subr.mxu0 0.0
  %3002 = vmatpush2.msra.mxu0 0.0
  %3003 = vmatprep.subr.mxu0 0.0
  %3004 = vmatpush2.msra.mxu0 0.0
  %3005 = vmatprep.subr.mxu0 0.0
  %3006 = vmatpush2.msra.mxu0 0.0
  %3007 = vmatprep.subr.mxu0 0.0
  %3008 = vmatpush2.msra.mxu0 0.0
  %3009 = vmatprep.subr.mxu0 0.0
  %3010 = vmatpush2.msra.mxu0 0.0
  %3011 = vmatprep.subr.mxu0 0.0
  %3012 = vmatpush2.msra.mxu0 0.0
  %3013 = vmatprep.subr.mxu0 0.0
  %3014 = vmatpush2.msra.mxu0 0.0
  %3015 = vmatprep.subr.mxu0 0.0
  %3016 = vmatpush2.msra.mxu0 0.0
  %3017 = vmatprep.subr.mxu0 0.0
  %3018 = vmatpush2.msra.mxu0 0.0
  %3019 = vmatprep.subr.mxu0 0.0
  %3020 = vmatpush2.msra.mxu0 0.0
  %3021 = vmatprep.subr.mxu0 0.0
  %3022 = vmatpush2.msra.mxu0 0.0
  %3023 = vmatprep.subr.mxu0 0.0
  %3024 = vmatpush2.msra.mxu0 0.0
  %3025 = vmatprep.mubr.f32.mxu0 0.0
  %3026 = vmatmul.mubr.f32.gmra.mxu0 %v2959
  %v3027 = vpop.f32.mrf.mxu0
  %v3028 = vadd.f32 0.0, %v3027
  %v3029 = vpop.f32.mrf.mxu0
  %3030 = vdwg.mxu0
  %v3031 = vadd.f32 %v2935, %v3028
  %s3032 = scalar_lea.vmem %s6, 448
  %v3033 = vld [vmem:[%s3032] sm:$0xff]
  %v3034 = vld [vmem:[%s3032 + $0x8] sm:$0xff]
  %v3035 = vld [vmem:[%s3032 + $0x10] sm:$0xff]
  %v3036 = vld [vmem:[%s3032 + $0x18] sm:$0xff]
  %v3037 = vld [vmem:[%s3032 + $0x20] sm:$0xff]
  %v3038 = vld [vmem:[%s3032 + $0x28] sm:$0xff]
  %v3039 = vld [vmem:[%s3032 + $0x30] sm:$0xff]
  %v3040 = vld [vmem:[%s3032 + $0x38] sm:$0xff]
  %v3041 = vrot.slane %v1773, 7
  %v3042 = vrot.slane %v1854, 6
  %v3043 = vsel %vm2374, %v3042, %v3041
  %v3044 = vrot.slane %v1935, 5
  %v3045 = vsel %vm2377, %v3044, %v3043
  %v3046 = vrot.slane %v2016, 4
  %v3047 = vsel %vm2380, %v3046, %v3045
  %v3048 = vrot.slane %v2097, 3
  %v3049 = vsel %vm2383, %v3048, %v3047
  %v3050 = vrot.slane %v2178, 2
  %v3051 = vsel %vm2386, %v3050, %v3049
  %v3052 = vrot.slane %v2259, 1
  %v3053 = vsel %vm2389, %v3052, %v3051
  %v3054 = vsel %vm2392, %v2340, %v3053
  %v3055 = vsel %vm213, %v3054, 0
  %3057 = vmatprep.subr.mxu0 0.0
  %3058 = vmatpush1.msra.mxu0 0.0
  %3059 = vmatprep.subr.mxu0 0.0
  %3060 = vmatpush1.msra.mxu0 0.0
  %3061 = vmatprep.subr.mxu0 0.0
  %3062 = vmatpush1.msra.mxu0 0.0
  %3063 = vmatprep.subr.mxu0 0.0
  %3064 = vmatpush1.msra.mxu0 0.0
  %3065 = vmatprep.subr.mxu0 0.0
  %3066 = vmatpush1.msra.mxu0 0.0
  %3067 = vmatprep.subr.mxu0 0.0
  %3068 = vmatpush1.msra.mxu0 0.0
  %3069 = vmatprep.subr.mxu0 0.0
  %3070 = vmatpush1.msra.mxu0 0.0
  %3071 = vmatprep.subr.mxu0 0.0
  %3072 = vmatpush1.msra.mxu0 0.0
  %3073 = vmatprep.subr.mxu0 0.0
  %3074 = vmatpush1.msra.mxu0 %v3040
  %3075 = vmatprep.subr.mxu0 0.0
  %3076 = vmatpush1.msra.mxu0 %v3039
  %3077 = vmatprep.subr.mxu0 0.0
  %3078 = vmatpush1.msra.mxu0 %v3038
  %3079 = vmatprep.subr.mxu0 0.0
  %3080 = vmatpush1.msra.mxu0 %v3037
  %3081 = vmatprep.subr.mxu0 0.0
  %3082 = vmatpush1.msra.mxu0 %v3036
  %3083 = vmatprep.subr.mxu0 0.0
  %3084 = vmatpush1.msra.mxu0 %v3035
  %3085 = vmatprep.subr.mxu0 0.0
  %3086 = vmatpush1.msra.mxu0 %v3034
  %3087 = vmatprep.subr.mxu0 0.0
  %3088 = vmatpush1.msra.mxu0 %v3033
  %3089 = vmatprep.subr.mxu0 0.0
  %3090 = vmatpush2.msra.mxu0 0.0
  %3091 = vmatprep.subr.mxu0 0.0
  %3092 = vmatpush2.msra.mxu0 0.0
  %3093 = vmatprep.subr.mxu0 0.0
  %3094 = vmatpush2.msra.mxu0 0.0
  %3095 = vmatprep.subr.mxu0 0.0
  %3096 = vmatpush2.msra.mxu0 0.0
  %3097 = vmatprep.subr.mxu0 0.0
  %3098 = vmatpush2.msra.mxu0 0.0
  %3099 = vmatprep.subr.mxu0 0.0
  %3100 = vmatpush2.msra.mxu0 0.0
  %3101 = vmatprep.subr.mxu0 0.0
  %3102 = vmatpush2.msra.mxu0 0.0
  %3103 = vmatprep.subr.mxu0 0.0
  %3104 = vmatpush2.msra.mxu0 0.0
  %3105 = vmatprep.subr.mxu0 0.0
  %3106 = vmatpush2.msra.mxu0 0.0
  %3107 = vmatprep.subr.mxu0 0.0
  %3108 = vmatpush2.msra.mxu0 0.0
  %3109 = vmatprep.subr.mxu0 0.0
  %3110 = vmatpush2.msra.mxu0 0.0
  %3111 = vmatprep.subr.mxu0 0.0
  %3112 = vmatpush2.msra.mxu0 0.0
  %3113 = vmatprep.subr.mxu0 0.0
  %3114 = vmatpush2.msra.mxu0 0.0
  %3115 = vmatprep.subr.mxu0 0.0
  %3116 = vmatpush2.msra.mxu0 0.0
  %3117 = vmatprep.subr.mxu0 0.0
  %3118 = vmatpush2.msra.mxu0 0.0
  %3119 = vmatprep.subr.mxu0 0.0
  %3120 = vmatpush2.msra.mxu0 0.0
  %3121 = vmatprep.mubr.f32.mxu0 0.0
  %3122 = vmatmul.mubr.f32.gmra.mxu0 %v3055
  %v3123 = vpop.f32.mrf.mxu0
  %v3124 = vadd.f32 0.0, %v3123
  %v3125 = vpop.f32.mrf.mxu0
  %3126 = vdwg.mxu0
  %v3127 = vadd.f32 %v3031, %v3124
  %s3128 = scalar_lea.vmem %s6, 512
  %v3129 = vld [vmem:[%s3128] sm:$0xff]
  %v3130 = vld [vmem:[%s3128 + $0x8] sm:$0xff]
  %v3131 = vld [vmem:[%s3128 + $0x10] sm:$0xff]
  %v3132 = vld [vmem:[%s3128 + $0x18] sm:$0xff]
  %v3133 = vld [vmem:[%s3128 + $0x20] sm:$0xff]
  %v3134 = vld [vmem:[%s3128 + $0x28] sm:$0xff]
  %v3135 = vld [vmem:[%s3128 + $0x30] sm:$0xff]
  %v3136 = vld [vmem:[%s3128 + $0x38] sm:$0xff]
  %v3145 = vrot.slane %v1859, 7
  %v3146 = vsel %vm2374, %v3145, %v1778
  %v3147 = vrot.slane %v1940, 6
  %v3148 = vsel %vm2377, %v3147, %v3146
  %v3149 = vrot.slane %v2021, 5
  %v3150 = vsel %vm2380, %v3149, %v3148
  %v3151 = vrot.slane %v2102, 4
  %v3152 = vsel %vm2383, %v3151, %v3150
  %v3153 = vrot.slane %v2183, 3
  %v3154 = vsel %vm2386, %v3153, %v3152
  %v3155 = vrot.slane %v2264, 2
  %v3156 = vsel %vm2389, %v3155, %v3154
  %v3157 = vrot.slane %v2345, 1
  %v3158 = vsel %vm2392, %v3157, %v3156
  %v3159 = vsel %vm213, %v3158, 0
  %3161 = vmatprep.subr.mxu0 0.0
  %3162 = vmatpush1.msra.mxu0 0.0
  %3163 = vmatprep.subr.mxu0 0.0
  %3164 = vmatpush1.msra.mxu0 0.0
  %3165 = vmatprep.subr.mxu0 0.0
  %3166 = vmatpush1.msra.mxu0 0.0
  %3167 = vmatprep.subr.mxu0 0.0
  %3168 = vmatpush1.msra.mxu0 0.0
  %3169 = vmatprep.subr.mxu0 0.0
  %3170 = vmatpush1.msra.mxu0 0.0
  %3171 = vmatprep.subr.mxu0 0.0
  %3172 = vmatpush1.msra.mxu0 0.0
  %3173 = vmatprep.subr.mxu0 0.0
  %3174 = vmatpush1.msra.mxu0 0.0
  %3175 = vmatprep.subr.mxu0 0.0
  %3176 = vmatpush1.msra.mxu0 0.0
  %3177 = vmatprep.subr.mxu0 0.0
  %3178 = vmatpush1.msra.mxu0 %v3136
  %3179 = vmatprep.subr.mxu0 0.0
  %3180 = vmatpush1.msra.mxu0 %v3135
  %3181 = vmatprep.subr.mxu0 0.0
  %3182 = vmatpush1.msra.mxu0 %v3134
  %3183 = vmatprep.subr.mxu0 0.0
  %3184 = vmatpush1.msra.mxu0 %v3133
  %3185 = vmatprep.subr.mxu0 0.0
  %3186 = vmatpush1.msra.mxu0 %v3132
  %3187 = vmatprep.subr.mxu0 0.0
  %3188 = vmatpush1.msra.mxu0 %v3131
  %3189 = vmatprep.subr.mxu0 0.0
  %3190 = vmatpush1.msra.mxu0 %v3130
  %3191 = vmatprep.subr.mxu0 0.0
  %3192 = vmatpush1.msra.mxu0 %v3129
  %3193 = vmatprep.subr.mxu0 0.0
  %3194 = vmatpush2.msra.mxu0 0.0
  %3195 = vmatprep.subr.mxu0 0.0
  %3196 = vmatpush2.msra.mxu0 0.0
  %3197 = vmatprep.subr.mxu0 0.0
  %3198 = vmatpush2.msra.mxu0 0.0
  %3199 = vmatprep.subr.mxu0 0.0
  %3200 = vmatpush2.msra.mxu0 0.0
  %3201 = vmatprep.subr.mxu0 0.0
  %3202 = vmatpush2.msra.mxu0 0.0
  %3203 = vmatprep.subr.mxu0 0.0
  %3204 = vmatpush2.msra.mxu0 0.0
  %3205 = vmatprep.subr.mxu0 0.0
  %3206 = vmatpush2.msra.mxu0 0.0
  %3207 = vmatprep.subr.mxu0 0.0
  %3208 = vmatpush2.msra.mxu0 0.0
  %3209 = vmatprep.subr.mxu0 0.0
  %3210 = vmatpush2.msra.mxu0 0.0
  %3211 = vmatprep.subr.mxu0 0.0
  %3212 = vmatpush2.msra.mxu0 0.0
  %3213 = vmatprep.subr.mxu0 0.0
  %3214 = vmatpush2.msra.mxu0 0.0
  %3215 = vmatprep.subr.mxu0 0.0
  %3216 = vmatpush2.msra.mxu0 0.0
  %3217 = vmatprep.subr.mxu0 0.0
  %3218 = vmatpush2.msra.mxu0 0.0
  %3219 = vmatprep.subr.mxu0 0.0
  %3220 = vmatpush2.msra.mxu0 0.0
  %3221 = vmatprep.subr.mxu0 0.0
  %3222 = vmatpush2.msra.mxu0 0.0
  %3223 = vmatprep.subr.mxu0 0.0
  %3224 = vmatpush2.msra.mxu0 0.0
  %3225 = vmatprep.mubr.f32.mxu0 0.0
  %3226 = vmatmul.mubr.f32.gmra.mxu0 %v3159
  %v3227 = vpop.f32.mrf.mxu0
  %v3228 = vadd.f32 0.0, %v3227
  %v3229 = vpop.f32.mrf.mxu0
  %3230 = vdwg.mxu0
  %v3231 = vadd.f32 %v3127, %v3228
  %s3232 = scalar_lea.vmem %s6, 576
  %v3233 = vld [vmem:[%s3232] sm:$0xff]
  %v3234 = vld [vmem:[%s3232 + $0x8] sm:$0xff]
  %v3235 = vld [vmem:[%s3232 + $0x10] sm:$0xff]
  %v3236 = vld [vmem:[%s3232 + $0x18] sm:$0xff]
  %v3237 = vld [vmem:[%s3232 + $0x20] sm:$0xff]
  %v3238 = vld [vmem:[%s3232 + $0x28] sm:$0xff]
  %v3239 = vld [vmem:[%s3232 + $0x30] sm:$0xff]
  %v3240 = vld [vmem:[%s3232 + $0x38] sm:$0xff]
  %v3241 = vrot.slane %v1778, 1
  %v3242 = vsel %vm2374, %v1859, %v3241
  %v3243 = vrot.slane %v1940, 7
  %v3244 = vsel %vm2377, %v3243, %v3242
  %v3245 = vrot.slane %v2021, 6
  %v3246 = vsel %vm2380, %v3245, %v3244
  %v3247 = vrot.slane %v2102, 5
  %v3248 = vsel %vm2383, %v3247, %v3246
  %v3249 = vrot.slane %v2183, 4
  %v3250 = vsel %vm2386, %v3249, %v3248
  %v3251 = vrot.slane %v2264, 3
  %v3252 = vsel %vm2389, %v3251, %v3250
  %v3253 = vrot.slane %v2345, 2
  %v3254 = vsel %vm2392, %v3253, %v3252
  %v3255 = vsel %vm213, %v3254, 0
  %3257 = vmatprep.subr.mxu0 0.0
  %3258 = vmatpush1.msra.mxu0 0.0
  %3259 = vmatprep.subr.mxu0 0.0
  %3260 = vmatpush1.msra.mxu0 0.0
  %3261 = vmatprep.subr.mxu0 0.0
  %3262 = vmatpush1.msra.mxu0 0.0
  %3263 = vmatprep.subr.mxu0 0.0
  %3264 = vmatpush1.msra.mxu0 0.0
  %3265 = vmatprep.subr.mxu0 0.0
  %3266 = vmatpush1.msra.mxu0 0.0
  %3267 = vmatprep.subr.mxu0 0.0
  %3268 = vmatpush1.msra.mxu0 0.0
  %3269 = vmatprep.subr.mxu0 0.0
  %3270 = vmatpush1.msra.mxu0 0.0
  %3271 = vmatprep.subr.mxu0 0.0
  %3272 = vmatpush1.msra.mxu0 0.0
  %3273 = vmatprep.subr.mxu0 0.0
  %3274 = vmatpush1.msra.mxu0 %v3240
  %3275 = vmatprep.subr.mxu0 0.0
  %3276 = vmatpush1.msra.mxu0 %v3239
  %3277 = vmatprep.subr.mxu0 0.0
  %3278 = vmatpush1.msra.mxu0 %v3238
  %3279 = vmatprep.subr.mxu0 0.0
  %3280 = vmatpush1.msra.mxu0 %v3237
  %3281 = vmatprep.subr.mxu0 0.0
  %3282 = vmatpush1.msra.mxu0 %v3236
  %3283 = vmatprep.subr.mxu0 0.0
  %3284 = vmatpush1.msra.mxu0 %v3235
  %3285 = vmatprep.subr.mxu0 0.0
  %3286 = vmatpush1.msra.mxu0 %v3234
  %3287 = vmatprep.subr.mxu0 0.0
  %3288 = vmatpush1.msra.mxu0 %v3233
  %3289 = vmatprep.subr.mxu0 0.0
  %3290 = vmatpush2.msra.mxu0 0.0
  %3291 = vmatprep.subr.mxu0 0.0
  %3292 = vmatpush2.msra.mxu0 0.0
  %3293 = vmatprep.subr.mxu0 0.0
  %3294 = vmatpush2.msra.mxu0 0.0
  %3295 = vmatprep.subr.mxu0 0.0
  %3296 = vmatpush2.msra.mxu0 0.0
  %3297 = vmatprep.subr.mxu0 0.0
  %3298 = vmatpush2.msra.mxu0 0.0
  %3299 = vmatprep.subr.mxu0 0.0
  %3300 = vmatpush2.msra.mxu0 0.0
  %3301 = vmatprep.subr.mxu0 0.0
  %3302 = vmatpush2.msra.mxu0 0.0
  %3303 = vmatprep.subr.mxu0 0.0
  %3304 = vmatpush2.msra.mxu0 0.0
  %3305 = vmatprep.subr.mxu0 0.0
  %3306 = vmatpush2.msra.mxu0 0.0
  %3307 = vmatprep.subr.mxu0 0.0
  %3308 = vmatpush2.msra.mxu0 0.0
  %3309 = vmatprep.subr.mxu0 0.0
  %3310 = vmatpush2.msra.mxu0 0.0
  %3311 = vmatprep.subr.mxu0 0.0
  %3312 = vmatpush2.msra.mxu0 0.0
  %3313 = vmatprep.subr.mxu0 0.0
  %3314 = vmatpush2.msra.mxu0 0.0
  %3315 = vmatprep.subr.mxu0 0.0
  %3316 = vmatpush2.msra.mxu0 0.0
  %3317 = vmatprep.subr.mxu0 0.0
  %3318 = vmatpush2.msra.mxu0 0.0
  %3319 = vmatprep.subr.mxu0 0.0
  %3320 = vmatpush2.msra.mxu0 0.0
  %3321 = vmatprep.mubr.f32.mxu0 0.0
  %3322 = vmatmul.mubr.f32.gmra.mxu0 %v3255
  %v3323 = vpop.f32.mrf.mxu0
  %v3324 = vadd.f32 0.0, %v3323
  %v3325 = vpop.f32.mrf.mxu0
  %3326 = vdwg.mxu0
  %v3327 = vadd.f32 %v3231, %v3324
  %s3328 = scalar_lea.vmem %s6, 640
  %v3329 = vld [vmem:[%s3328] sm:$0xff]
  %v3330 = vld [vmem:[%s3328 + $0x8] sm:$0xff]
  %v3331 = vld [vmem:[%s3328 + $0x10] sm:$0xff]
  %v3332 = vld [vmem:[%s3328 + $0x18] sm:$0xff]
  %v3333 = vld [vmem:[%s3328 + $0x20] sm:$0xff]
  %v3334 = vld [vmem:[%s3328 + $0x28] sm:$0xff]
  %v3335 = vld [vmem:[%s3328 + $0x30] sm:$0xff]
  %v3336 = vld [vmem:[%s3328 + $0x38] sm:$0xff]
  %v3337 = vrot.slane %v1778, 2
  %v3338 = vrot.slane %v1859, 1
  %v3339 = vsel %vm2374, %v3338, %v3337
  %v3340 = vsel %vm2377, %v1940, %v3339
  %v3341 = vrot.slane %v2021, 7
  %v3342 = vsel %vm2380, %v3341, %v3340
  %v3343 = vrot.slane %v2102, 6
  %v3344 = vsel %vm2383, %v3343, %v3342
  %v3345 = vrot.slane %v2183, 5
  %v3346 = vsel %vm2386, %v3345, %v3344
  %v3347 = vrot.slane %v2264, 4
  %v3348 = vsel %vm2389, %v3347, %v3346
  %v3349 = vrot.slane %v2345, 3
  %v3350 = vsel %vm2392, %v3349, %v3348
  %v3351 = vsel %vm213, %v3350, 0
  %3353 = vmatprep.subr.mxu0 0.0
  %3354 = vmatpush1.msra.mxu0 0.0
  %3355 = vmatprep.subr.mxu0 0.0
  %3356 = vmatpush1.msra.mxu0 0.0
  %3357 = vmatprep.subr.mxu0 0.0
  %3358 = vmatpush1.msra.mxu0 0.0
  %3359 = vmatprep.subr.mxu0 0.0
  %3360 = vmatpush1.msra.mxu0 0.0
  %3361 = vmatprep.subr.mxu0 0.0
  %3362 = vmatpush1.msra.mxu0 0.0
  %3363 = vmatprep.subr.mxu0 0.0
  %3364 = vmatpush1.msra.mxu0 0.0
  %3365 = vmatprep.subr.mxu0 0.0
  %3366 = vmatpush1.msra.mxu0 0.0
  %3367 = vmatprep.subr.mxu0 0.0
  %3368 = vmatpush1.msra.mxu0 0.0
  %3369 = vmatprep.subr.mxu0 0.0
  %3370 = vmatpush1.msra.mxu0 %v3336
  %3371 = vmatprep.subr.mxu0 0.0
  %3372 = vmatpush1.msra.mxu0 %v3335
  %3373 = vmatprep.subr.mxu0 0.0
  %3374 = vmatpush1.msra.mxu0 %v3334
  %3375 = vmatprep.subr.mxu0 0.0
  %3376 = vmatpush1.msra.mxu0 %v3333
  %3377 = vmatprep.subr.mxu0 0.0
  %3378 = vmatpush1.msra.mxu0 %v3332
  %3379 = vmatprep.subr.mxu0 0.0
  %3380 = vmatpush1.msra.mxu0 %v3331
  %3381 = vmatprep.subr.mxu0 0.0
  %3382 = vmatpush1.msra.mxu0 %v3330
  %3383 = vmatprep.subr.mxu0 0.0
  %3384 = vmatpush1.msra.mxu0 %v3329
  %3385 = vmatprep.subr.mxu0 0.0
  %3386 = vmatpush2.msra.mxu0 0.0
  %3387 = vmatprep.subr.mxu0 0.0
  %3388 = vmatpush2.msra.mxu0 0.0
  %3389 = vmatprep.subr.mxu0 0.0
  %3390 = vmatpush2.msra.mxu0 0.0
  %3391 = vmatprep.subr.mxu0 0.0
  %3392 = vmatpush2.msra.mxu0 0.0
  %3393 = vmatprep.subr.mxu0 0.0
  %3394 = vmatpush2.msra.mxu0 0.0
  %3395 = vmatprep.subr.mxu0 0.0
  %3396 = vmatpush2.msra.mxu0 0.0
  %3397 = vmatprep.subr.mxu0 0.0
  %3398 = vmatpush2.msra.mxu0 0.0
  %3399 = vmatprep.subr.mxu0 0.0
  %3400 = vmatpush2.msra.mxu0 0.0
  %3401 = vmatprep.subr.mxu0 0.0
  %3402 = vmatpush2.msra.mxu0 0.0
  %3403 = vmatprep.subr.mxu0 0.0
  %3404 = vmatpush2.msra.mxu0 0.0
  %3405 = vmatprep.subr.mxu0 0.0
  %3406 = vmatpush2.msra.mxu0 0.0
  %3407 = vmatprep.subr.mxu0 0.0
  %3408 = vmatpush2.msra.mxu0 0.0
  %3409 = vmatprep.subr.mxu0 0.0
  %3410 = vmatpush2.msra.mxu0 0.0
  %3411 = vmatprep.subr.mxu0 0.0
  %3412 = vmatpush2.msra.mxu0 0.0
  %3413 = vmatprep.subr.mxu0 0.0
  %3414 = vmatpush2.msra.mxu0 0.0
  %3415 = vmatprep.subr.mxu0 0.0
  %3416 = vmatpush2.msra.mxu0 0.0
  %3417 = vmatprep.mubr.f32.mxu0 0.0
  %3418 = vmatmul.mubr.f32.gmra.mxu0 %v3351
  %v3419 = vpop.f32.mrf.mxu0
  %v3420 = vadd.f32 0.0, %v3419
  %v3421 = vpop.f32.mrf.mxu0
  %3422 = vdwg.mxu0
  %v3423 = vadd.f32 %v3327, %v3420
  %s3424 = scalar_lea.vmem %s6, 704
  %v3425 = vld [vmem:[%s3424] sm:$0xff]
  %v3426 = vld [vmem:[%s3424 + $0x8] sm:$0xff]
  %v3427 = vld [vmem:[%s3424 + $0x10] sm:$0xff]
  %v3428 = vld [vmem:[%s3424 + $0x18] sm:$0xff]
  %v3429 = vld [vmem:[%s3424 + $0x20] sm:$0xff]
  %v3430 = vld [vmem:[%s3424 + $0x28] sm:$0xff]
  %v3431 = vld [vmem:[%s3424 + $0x30] sm:$0xff]
  %v3432 = vld [vmem:[%s3424 + $0x38] sm:$0xff]
  %v3433 = vrot.slane %v1778, 3
  %v3434 = vrot.slane %v1859, 2
  %v3435 = vsel %vm2374, %v3434, %v3433
  %v3436 = vrot.slane %v1940, 1
  %v3437 = vsel %vm2377, %v3436, %v3435
  %v3438 = vsel %vm2380, %v2021, %v3437
  %v3439 = vrot.slane %v2102, 7
  %v3440 = vsel %vm2383, %v3439, %v3438
  %v3441 = vrot.slane %v2183, 6
  %v3442 = vsel %vm2386, %v3441, %v3440
  %v3443 = vrot.slane %v2264, 5
  %v3444 = vsel %vm2389, %v3443, %v3442
  %v3445 = vrot.slane %v2345, 4
  %v3446 = vsel %vm2392, %v3445, %v3444
  %v3447 = vsel %vm213, %v3446, 0
  %3449 = vmatprep.subr.mxu0 0.0
  %3450 = vmatpush1.msra.mxu0 0.0
  %3451 = vmatprep.subr.mxu0 0.0
  %3452 = vmatpush1.msra.mxu0 0.0
  %3453 = vmatprep.subr.mxu0 0.0
  %3454 = vmatpush1.msra.mxu0 0.0
  %3455 = vmatprep.subr.mxu0 0.0
  %3456 = vmatpush1.msra.mxu0 0.0
  %3457 = vmatprep.subr.mxu0 0.0
  %3458 = vmatpush1.msra.mxu0 0.0
  %3459 = vmatprep.subr.mxu0 0.0
  %3460 = vmatpush1.msra.mxu0 0.0
  %3461 = vmatprep.subr.mxu0 0.0
  %3462 = vmatpush1.msra.mxu0 0.0
  %3463 = vmatprep.subr.mxu0 0.0
  %3464 = vmatpush1.msra.mxu0 0.0
  %3465 = vmatprep.subr.mxu0 0.0
  %3466 = vmatpush1.msra.mxu0 %v3432
  %3467 = vmatprep.subr.mxu0 0.0
  %3468 = vmatpush1.msra.mxu0 %v3431
  %3469 = vmatprep.subr.mxu0 0.0
  %3470 = vmatpush1.msra.mxu0 %v3430
  %3471 = vmatprep.subr.mxu0 0.0
  %3472 = vmatpush1.msra.mxu0 %v3429
  %3473 = vmatprep.subr.mxu0 0.0
  %3474 = vmatpush1.msra.mxu0 %v3428
  %3475 = vmatprep.subr.mxu0 0.0
  %3476 = vmatpush1.msra.mxu0 %v3427
  %3477 = vmatprep.subr.mxu0 0.0
  %3478 = vmatpush1.msra.mxu0 %v3426
  %3479 = vmatprep.subr.mxu0 0.0
  %3480 = vmatpush1.msra.mxu0 %v3425
  %3481 = vmatprep.subr.mxu0 0.0
  %3482 = vmatpush2.msra.mxu0 0.0
  %3483 = vmatprep.subr.mxu0 0.0
  %3484 = vmatpush2.msra.mxu0 0.0
  %3485 = vmatprep.subr.mxu0 0.0
  %3486 = vmatpush2.msra.mxu0 0.0
  %3487 = vmatprep.subr.mxu0 0.0
  %3488 = vmatpush2.msra.mxu0 0.0
  %3489 = vmatprep.subr.mxu0 0.0
  %3490 = vmatpush2.msra.mxu0 0.0
  %3491 = vmatprep.subr.mxu0 0.0
  %3492 = vmatpush2.msra.mxu0 0.0
  %3493 = vmatprep.subr.mxu0 0.0
  %3494 = vmatpush2.msra.mxu0 0.0
  %3495 = vmatprep.subr.mxu0 0.0
  %3496 = vmatpush2.msra.mxu0 0.0
  %3497 = vmatprep.subr.mxu0 0.0
  %3498 = vmatpush2.msra.mxu0 0.0
  %3499 = vmatprep.subr.mxu0 0.0
  %3500 = vmatpush2.msra.mxu0 0.0
  %3501 = vmatprep.subr.mxu0 0.0
  %3502 = vmatpush2.msra.mxu0 0.0
  %3503 = vmatprep.subr.mxu0 0.0
  %3504 = vmatpush2.msra.mxu0 0.0
  %3505 = vmatprep.subr.mxu0 0.0
  %3506 = vmatpush2.msra.mxu0 0.0
  %3507 = vmatprep.subr.mxu0 0.0
  %3508 = vmatpush2.msra.mxu0 0.0
  %3509 = vmatprep.subr.mxu0 0.0
  %3510 = vmatpush2.msra.mxu0 0.0
  %3511 = vmatprep.subr.mxu0 0.0
  %3512 = vmatpush2.msra.mxu0 0.0
  %3513 = vmatprep.mubr.f32.mxu0 0.0
  %3514 = vmatmul.mubr.f32.gmra.mxu0 %v3447
  %v3515 = vpop.f32.mrf.mxu0
  %v3516 = vadd.f32 0.0, %v3515
  %v3517 = vpop.f32.mrf.mxu0
  %3518 = vdwg.mxu0
  %v3519 = vadd.f32 %v3423, %v3516
  %v3520 = vld [vmem:[%s7] sm:$0x1]
  %v3522 = vlaneseq
  %v3523 = vshrl.u32 %v3522, 7
  %v3524 = vsub.s32 0, %v3523
  %v3525 = vrot.slane %v3520, %v3524
  %v3527 = vadd.f32 %v3519, %v3525
  %s3528 = smul.u32 0, 8
  %s3529 = scalar_lea.vmem [#allocation2], %s3528
  %vm3530 = vcmask 130048
  %3531 = vst.msk [vmem:[%s3529] sm:$0xff] %vm3530, %v3527
  %p3532 = scmp.eq.s32.totalorder 0, 0
  // Predicated region
  $region66: #{full_gcn_forward.1} parent=0 // pred_check
    %p3533 = pneg %p3532
  $region67: #{full_gcn_forward.1} parent=0 // pred_check_branch
    %3535 = sbr.rel (%p3533) target = $region69
  $region68: #{full_gcn_forward.1} parent=0 // pred_region
    %v3536 = vlaneseq
    %v3537 = vshrl.u32 %v3536, 7
    %vm3538 = vcmp.lt.s32.totalorder %v3537, 2
    %v3539 = vsel %vm3538, 1, 0
    %v3540 = vcvt.s32.f32 %v3539
    %v3541 = vld [vmem:[#allocation2] sm:$0xff]
    %v3542 = vmax.f32 %v3541, 0.0
    %v3543 = vld [vmem:[%s8] sm:$0x1]
    %v3544 = vld [vmem:[%s9] sm:$0x1]
    %v3545 = vmul.f32 %v3542, %v3540
    %v3546 = vsel %vm3530, %v3545, 0.0
    %v3547 = vrot.slane %v3546, 4
    %v3548 = vadd.f32 %v3546, %v3547
    %v3549 = vrot.slane %v3548, 2
    %v3550 = vadd.f32 %v3548, %v3549
    %v3551 = vrot.slane %v3550, 1
    %v3552 = vadd.f32 %v3550, %v3551
    %v3553 = vmul.f32 %v3552, 0.5
    %v3554 = vsub.f32 %v3542, %v3553
    %v3555 = vmul.f32 %v3554, %v3554
    %v3556 = vmul.f32 %v3555, %v3540
    %v3557 = vsel %vm3530, %v3556, 0.0
    %v3558 = vrot.slane %v3557, 4
    %v3559 = vadd.f32 %v3557, %v3558
    %v3560 = vrot.slane %v3559, 2
    %v3561 = vadd.f32 %v3559, %v3560
    %v3562 = vrot.slane %v3561, 1
    %v3563 = vadd.f32 %v3561, %v3562
    %v3564 = vmul.f32 %v3563, 0.5
    %v3566 = vlaneseq
    %v3567 = vshrl.u32 %v3566, 7
    %v3568 = vsub.s32 0, %v3567
    %v3569 = vrot.slane %v3543, %v3568
    %v3571 = vmul.f32 %v3569, %v3554
    %v3572 = vadd.f32 %v3564, 1e-05
    %v3573 = vrsqrt.pop %v3572
    %v3574 = vmul.f32 %v3571, %v3573
    %v3576 = vlaneseq
    %v3577 = vshrl.u32 %v3576, 7
    %v3578 = vsub.s32 0, %v3577
    %v3579 = vrot.slane %v3544, %v3578
    %v3581 = vadd.f32 %v3574, %v3579
    %v3582 = vld [vmem:[%s10] sm:$0xff]
    %v3583 = vld [vmem:[%s10 + $0x8] sm:$0xff]
    %v3584 = vld [vmem:[%s11] sm:$0x1]
    %v3586 = vlaneseq
    %v3587 = vshrl.u32 %v3586, 7
    %v3588 = vsub.s32 0, %v3587
    %v3589 = vrot.slane %v3584, %v3588
    %v3592 = vsel %vm3530, %v3581, 0
    %3594 = vmatprep.subr.mxu0 0.0
    %3595 = vmatpush1.msra.mxu0 0.0
    %3596 = vmatprep.subr.mxu0 0.0
    %3597 = vmatpush1.msra.mxu0 0.0
    %3598 = vmatprep.subr.mxu0 0.0
    %3599 = vmatpush1.msra.mxu0 0.0
    %3600 = vmatprep.subr.mxu0 0.0
    %3601 = vmatpush1.msra.mxu0 0.0
    %3602 = vmatprep.subr.mxu0 0.0
    %3603 = vmatpush1.msra.mxu0 0.0
    %3604 = vmatprep.subr.mxu0 0.0
    %3605 = vmatpush1.msra.mxu0 0.0
    %3606 = vmatprep.subr.mxu0 0.0
    %3607 = vmatpush1.msra.mxu0 0.0
    %3608 = vmatprep.subr.mxu0 0.0
    %3609 = vmatpush1.msra.mxu0 0.0
    %3610 = vmatprep.subr.mxu0 0.0
    %3611 = vmatpush1.msra.mxu0 0.0
    %3612 = vmatprep.subr.mxu0 0.0
    %3613 = vmatpush1.msra.mxu0 0.0
    %3614 = vmatprep.subr.mxu0 0.0
    %3615 = vmatpush1.msra.mxu0 0.0
    %3616 = vmatprep.subr.mxu0 0.0
    %3617 = vmatpush1.msra.mxu0 0.0
    %3618 = vmatprep.subr.mxu0 0.0
    %3619 = vmatpush1.msra.mxu0 0.0
    %3620 = vmatprep.subr.mxu0 0.0
    %3621 = vmatpush1.msra.mxu0 0.0
    %3622 = vmatprep.subr.mxu0 0.0
    %3623 = vmatpush1.msra.mxu0 %v3583
    %3624 = vmatprep.subr.mxu0 0.0
    %3625 = vmatpush1.msra.mxu0 %v3582
    %3626 = vmatprep.subr.mxu0 0.0
    %3627 = vmatpush2.msra.mxu0 0.0
    %3628 = vmatprep.subr.mxu0 0.0
    %3629 = vmatpush2.msra.mxu0 0.0
    %3630 = vmatprep.subr.mxu0 0.0
    %3631 = vmatpush2.msra.mxu0 0.0
    %3632 = vmatprep.subr.mxu0 0.0
    %3633 = vmatpush2.msra.mxu0 0.0
    %3634 = vmatprep.subr.mxu0 0.0
    %3635 = vmatpush2.msra.mxu0 0.0
    %3636 = vmatprep.subr.mxu0 0.0
    %3637 = vmatpush2.msra.mxu0 0.0
    %3638 = vmatprep.subr.mxu0 0.0
    %3639 = vmatpush2.msra.mxu0 0.0
    %3640 = vmatprep.subr.mxu0 0.0
    %3641 = vmatpush2.msra.mxu0 0.0
    %3642 = vmatprep.subr.mxu0 0.0
    %3643 = vmatpush2.msra.mxu0 0.0
    %3644 = vmatprep.subr.mxu0 0.0
    %3645 = vmatpush2.msra.mxu0 0.0
    %3646 = vmatprep.subr.mxu0 0.0
    %3647 = vmatpush2.msra.mxu0 0.0
    %3648 = vmatprep.subr.mxu0 0.0
    %3649 = vmatpush2.msra.mxu0 0.0
    %3650 = vmatprep.subr.mxu0 0.0
    %3651 = vmatpush2.msra.mxu0 0.0
    %3652 = vmatprep.subr.mxu0 0.0
    %3653 = vmatpush2.msra.mxu0 0.0
    %3654 = vmatprep.subr.mxu0 0.0
    %3655 = vmatpush2.msra.mxu0 0.0
    %3656 = vmatprep.subr.mxu0 0.0
    %3657 = vmatpush2.msra.mxu0 0.0
    %3658 = vmatprep.mubr.f32.mxu0 0.0
    %3659 = vmatmul.mubr.f32.gmra.mxu0 %v3592
    %v3660 = vpop.f32.mrf.mxu0
    %v3661 = vadd.f32 %v3589, %v3660
    %v3662 = vpop.f32.mrf.mxu0
    %3663 = vdwg.mxu0
    %v3664 = vmax.f32 %v3661, 0.0
    %v3665 = vld [vmem:[%s12] sm:$0x1]
    %v3666 = vld [vmem:[%s13] sm:$0x1]
    %v3667 = vmul.f32 %v3664, %v3540
    %vm3668 = vcmask 261120
    %v3669 = vsel %vm3668, %v3667, 0.0
    %v3670 = vrot.slane %v3669, 4
    %v3671 = vadd.f32 %v3669, %v3670
    %v3672 = vrot.slane %v3671, 2
    %v3673 = vadd.f32 %v3671, %v3672
    %v3674 = vrot.slane %v3673, 1
    %v3675 = vadd.f32 %v3673, %v3674
    %v3676 = vmul.f32 %v3675, 0.5
    %v3677 = vsub.f32 %v3664, %v3676
    %v3678 = vmul.f32 %v3677, %v3677
    %v3679 = vmul.f32 %v3678, %v3540
    %v3680 = vsel %vm3668, %v3679, 0.0
    %v3681 = vrot.slane %v3680, 4
    %v3682 = vadd.f32 %v3680, %v3681
    %v3683 = vrot.slane %v3682, 2
    %v3684 = vadd.f32 %v3682, %v3683
    %v3685 = vrot.slane %v3684, 1
    %v3686 = vadd.f32 %v3684, %v3685
    %v3687 = vmul.f32 %v3686, 0.5
    %v3689 = vlaneseq
    %v3690 = vshrl.u32 %v3689, 7
    %v3691 = vsub.s32 0, %v3690
    %v3692 = vrot.slane %v3665, %v3691
    %v3694 = vmul.f32 %v3692, %v3677
    %v3695 = vadd.f32 %v3687, 1e-05
    %v3696 = vrsqrt.pop %v3695
    %v3697 = vmul.f32 %v3694, %v3696
    %v3699 = vlaneseq
    %v3700 = vshrl.u32 %v3699, 7
    %v3701 = vsub.s32 0, %v3700
    %v3702 = vrot.slane %v3666, %v3701
    %v3704 = vadd.f32 %v3697, %v3702
    %v3705 = vld [vmem:[%s14] sm:$0xff]
    %v3706 = vld [vmem:[%s14 + $0x8] sm:$0xff]
    %v3707 = vld [vmem:[%s14 + $0x10] sm:$0xff]
    %v3708 = vld [vmem:[%s14 + $0x18] sm:$0xff]
    %v3709 = vld [vmem:[%s15] sm:$0x1]
    %v3711 = vlaneseq
    %v3712 = vshrl.u32 %v3711, 7
    %v3713 = vsub.s32 0, %v3712
    %v3714 = vrot.slane %v3709, %v3713
    %v3717 = vsel %vm3668, %v3704, 0
    %3719 = vmatprep.subr.mxu0 0.0
    %3720 = vmatpush1.msra.mxu0 0.0
    %3721 = vmatprep.subr.mxu0 0.0
    %3722 = vmatpush1.msra.mxu0 0.0
    %3723 = vmatprep.subr.mxu0 0.0
    %3724 = vmatpush1.msra.mxu0 0.0
    %3725 = vmatprep.subr.mxu0 0.0
    %3726 = vmatpush1.msra.mxu0 0.0
    %3727 = vmatprep.subr.mxu0 0.0
    %3728 = vmatpush1.msra.mxu0 0.0
    %3729 = vmatprep.subr.mxu0 0.0
    %3730 = vmatpush1.msra.mxu0 0.0
    %3731 = vmatprep.subr.mxu0 0.0
    %3732 = vmatpush1.msra.mxu0 0.0
    %3733 = vmatprep.subr.mxu0 0.0
    %3734 = vmatpush1.msra.mxu0 0.0
    %3735 = vmatprep.subr.mxu0 0.0
    %3736 = vmatpush1.msra.mxu0 0.0
    %3737 = vmatprep.subr.mxu0 0.0
    %3738 = vmatpush1.msra.mxu0 0.0
    %3739 = vmatprep.subr.mxu0 0.0
    %3740 = vmatpush1.msra.mxu0 0.0
    %3741 = vmatprep.subr.mxu0 0.0
    %3742 = vmatpush1.msra.mxu0 0.0
    %3743 = vmatprep.subr.mxu0 0.0
    %3744 = vmatpush1.msra.mxu0 %v3708
    %3745 = vmatprep.subr.mxu0 0.0
    %3746 = vmatpush1.msra.mxu0 %v3707
    %3747 = vmatprep.subr.mxu0 0.0
    %3748 = vmatpush1.msra.mxu0 %v3706
    %3749 = vmatprep.subr.mxu0 0.0
    %3750 = vmatpush1.msra.mxu0 %v3705
    %3751 = vmatprep.subr.mxu0 0.0
    %3752 = vmatpush2.msra.mxu0 0.0
    %3753 = vmatprep.subr.mxu0 0.0
    %3754 = vmatpush2.msra.mxu0 0.0
    %3755 = vmatprep.subr.mxu0 0.0
    %3756 = vmatpush2.msra.mxu0 0.0
    %3757 = vmatprep.subr.mxu0 0.0
    %3758 = vmatpush2.msra.mxu0 0.0
    %3759 = vmatprep.subr.mxu0 0.0
    %3760 = vmatpush2.msra.mxu0 0.0
    %3761 = vmatprep.subr.mxu0 0.0
    %3762 = vmatpush2.msra.mxu0 0.0
    %3763 = vmatprep.subr.mxu0 0.0
    %3764 = vmatpush2.msra.mxu0 0.0
    %3765 = vmatprep.subr.mxu0 0.0
    %3766 = vmatpush2.msra.mxu0 0.0
    %3767 = vmatprep.subr.mxu0 0.0
    %3768 = vmatpush2.msra.mxu0 0.0
    %3769 = vmatprep.subr.mxu0 0.0
    %3770 = vmatpush2.msra.mxu0 0.0
    %3771 = vmatprep.subr.mxu0 0.0
    %3772 = vmatpush2.msra.mxu0 0.0
    %3773 = vmatprep.subr.mxu0 0.0
    %3774 = vmatpush2.msra.mxu0 0.0
    %3775 = vmatprep.subr.mxu0 0.0
    %3776 = vmatpush2.msra.mxu0 0.0
    %3777 = vmatprep.subr.mxu0 0.0
    %3778 = vmatpush2.msra.mxu0 0.0
    %3779 = vmatprep.subr.mxu0 0.0
    %3780 = vmatpush2.msra.mxu0 0.0
    %3781 = vmatprep.subr.mxu0 0.0
    %3782 = vmatpush2.msra.mxu0 0.0
    %3783 = vmatprep.mubr.f32.mxu0 0.0
    %3784 = vmatmul.mubr.f32.gmra.mxu0 %v3717
    %v3785 = vpop.f32.mrf.mxu0
    %v3786 = vadd.f32 %v3714, %v3785
    %v3787 = vpop.f32.mrf.mxu0
    %3788 = vdwg.mxu0
    %3789 = vst [vmem:[%s16] sm:$0xff] %v3786
  $region69: #{full_gcn_forward.1} parent=0 // pred_fallthru
    _
  // Predicated region
  $region70: #{full_gcn_forward.1} parent=0 // pred_check
    _
  $region71: #{full_gcn_forward.1} parent=0 // pred_check_branch
    %3791 = sbr.rel (0) target = $region73
  $region72: #{full_gcn_forward.1} parent=0 // pred_region
    _
  $region73: #{full_gcn_forward.1} parent=0 // pred_fallthru
    _
  // Predicated region
  $region74: #{full_gcn_forward.1} parent=0 // pred_check
    _
  $region75: #{full_gcn_forward.1} parent=0 // pred_check_branch
    %3793 = sbr.rel (0) target = $region77
  $region76: #{full_gcn_forward.1} parent=0 // pred_region
    _
  $region77: #{full_gcn_forward.1} parent=0 // pred_fallthru
    _

</llo_original>
